<compile_context>
chip_gen: v7x
topology: tpu7x:2x2x1
jax: 0.10.0
libtpu: 0.0.40
codegen_flags: <defaults>
</compile_context>

<pallas_src>
import functools

import jax
import jax.numpy as jnp
from jax import lax
from jax.experimental import pallas as pl
from jax.experimental.pallas import tpu as pltpu

BN_EPS = 1e-5

_VMEM_LIMIT = 32 * 1024 * 1024    # explicit scoped-VMEM request (fits v7x's 64 MiB)
_VMEM_BUDGET = 20 * 1024 * 1024   # what one grid step's buffers may occupy
_MAX_BATCH_TILE = 16


def _fold_bn(gamma, beta, mean, var):
    scale = gamma / jnp.sqrt(var + BN_EPS)
    return scale, beta - mean * scale


def _pick_batch_tile(n, per_image_bytes):
    """Largest divisor of n whose tile fits the VMEM budget; keep grid >= 2 if possible."""
    divisors = [b for b in range(1, min(n, _MAX_BATCH_TILE) + 1) if n % b == 0]
    fitting = [b for b in divisors if b * per_image_bytes <= _VMEM_BUDGET] or [1]
    # v7x has 2 TensorCores; prefer a tile that leaves >= 2 grid steps to shard.
    pref = [b for b in fitting if n // b >= 2]
    return max(pref) if pref else max(fitting)


# ---------------------------------------------------------------------------
# Stride-1 fused kernel: BN -> ReLU -> 3x3 conv (merged K=9*Cin matmul),
# optional residual add (separate ref, or embedded in the input's channels).
# ---------------------------------------------------------------------------

def _make_bn_relu_conv_s1_kernel(B, H, W, c_bn, c_out, *, residual, compute_dtype):
    # residual in (None, "sep", "embedded")
    nbhw = B * H * W

    def kernel(*refs):
        it = iter(refs)
        x_ref = next(it)                         # (B, H, W, c_x)
        scale_ref = next(it)                     # (1, 1, 1, c_bn) f32
        bias_ref = next(it)                      # (1, 1, 1, c_bn) f32
        w_ref = next(it)                         # (9*c_bn, c_out)
        res_ref = next(it) if residual == "sep" else None
        o_ref = next(it)                         # (B, H, W, c_out)
        ap_ref = next(it)                        # (B, H+2, W+2, c_bn) padded activation
        patch_ref = next(it)                     # (B*H*W, 9*c_bn) im2col buffer

        # Zero only the 1-pixel border ring (the interior is fully rewritten
        # below).  Done every step so it is correct regardless of how the
        # "parallel" grid axis is sharded across TensorCores.
        ap_ref[:, 0:1, :, :] = jnp.zeros((B, 1, W + 2, c_bn), compute_dtype)
        ap_ref[:, H + 1:H + 2, :, :] = jnp.zeros((B, 1, W + 2, c_bn), compute_dtype)
        ap_ref[:, :, 0:1, :] = jnp.zeros((B, H + 2, 1, c_bn), compute_dtype)
        ap_ref[:, :, W + 1:W + 2, :] = jnp.zeros((B, H + 2, 1, c_bn), compute_dtype)

        # BN + ReLU; zero padding applied AFTER the activation (PyTorch pad-0
        # semantics: relu(bn(0)) != 0, so the pad ring must be literal zeros).
        if residual == "embedded":
            x = x_ref[:, :, :, 0:c_bn].astype(jnp.float32)
        else:
            x = x_ref[...].astype(jnp.float32)
        a = jnp.maximum(x * scale_ref[...] + bias_ref[...], 0.0).astype(compute_dtype)
        ap_ref[:, 1:H + 1, 1:W + 1, :] = a

        # im2col into VMEM scratch: one K=9*c_bn matmul instead of 9 K=c_bn ones.
        for ky in range(3):
            for kx in range(3):
                t = ky * 3 + kx
                patch = ap_ref[:, ky:ky + H, kx:kx + W, :]
                patch_ref[:, t * c_bn:(t + 1) * c_bn] = patch.reshape(nbhw, c_bn)

        acc = jnp.dot(patch_ref[...], w_ref[...],
                      preferred_element_type=jnp.float32)            # (nbhw, c_out)

        if residual == "sep":
            acc = acc + res_ref[...].astype(jnp.float32).reshape(nbhw, c_out)
        elif residual == "embedded":
            res = x_ref[:, :, :, c_bn:c_bn + c_out].astype(jnp.float32)
            acc = acc + res.reshape(nbhw, c_out)

        o_ref[...] = acc.reshape(B, H, W, c_out).astype(o_ref.dtype)

    return kernel


def _bn_relu_conv3x3_s1(x, scale, bias, w_big, *, c_bn, residual=None,
                        embedded_residual=False, out_dtype, compute_dtype):
    N, H, W, c_x = x.shape
    c_out = w_big.shape[-1]
    res_mode = ("embedded" if embedded_residual
                else ("sep" if residual is not None else None))

    csize = jnp.dtype(compute_dtype).itemsize
    per_img = (H * W * c_x * jnp.dtype(x.dtype).itemsize * 2          # input (2-buf)
               + H * W * c_out * jnp.dtype(out_dtype).itemsize * 2    # output (2-buf)
               + (H + 2) * (W + 2) * c_bn * csize                     # padded scratch
               + H * W * 9 * c_bn * csize)                            # im2col scratch
    if res_mode == "sep":
        per_img += H * W * c_out * jnp.dtype(residual.dtype).itemsize * 2
    B = _pick_batch_tile(N, per_img)

    kernel = _make_bn_relu_conv_s1_kernel(B, H, W, c_bn, c_out,
                                          residual=res_mode,
                                          compute_dtype=compute_dtype)

    in_specs = [
        pl.BlockSpec((B, H, W, c_x), lambda n: (n, 0, 0, 0)),
        pl.BlockSpec((1, 1, 1, c_bn), lambda n: (0, 0, 0, 0)),
        pl.BlockSpec((1, 1, 1, c_bn), lambda n: (0, 0, 0, 0)),
        pl.BlockSpec((9 * c_bn, c_out), lambda n: (0, 0)),
    ]
    args = [x,
            scale.reshape(1, 1, 1, c_bn).astype(jnp.float32),
            bias.reshape(1, 1, 1, c_bn).astype(jnp.float32),
            w_big.astype(compute_dtype)]
    if res_mode == "sep":
        in_specs.append(pl.BlockSpec((B, H, W, c_out), lambda n: (n, 0, 0, 0)))
        args.append(residual)

    return pl.pallas_call(
        kernel,
        grid=(N // B,),
        in_specs=in_specs,
        out_specs=pl.BlockSpec((B, H, W, c_out), lambda n: (n, 0, 0, 0)),
        out_shape=jax.ShapeDtypeStruct((N, H, W, c_out), out_dtype),
        scratch_shapes=[
            pltpu.VMEM((B, H + 2, W + 2, c_bn), compute_dtype),
            pltpu.VMEM((B * H * W, 9 * c_bn), compute_dtype),
        ],
        compiler_params=pltpu.CompilerParams(
            dimension_semantics=("parallel",),
            vmem_limit_bytes=_VMEM_LIMIT),
    )(*args)


# ---------------------------------------------------------------------------
# Stride-2 fused kernel: BN -> ReLU -> strided 3x3 conv (+ fused 1x1 shortcut
# via the merged weight), computed directly on the 4 spatial input phases.
# ---------------------------------------------------------------------------

def _make_bn_relu_conv_s2_kernel(B, Ho, Wo, c_in, c_out, *, compute_dtype):
    nbhw = B * Ho * Wo

    def kernel(x00_ref, x01_ref, x10_ref, x11_ref, scale_ref, bias_ref,
               w_ref, o_ref, aps_ref, patch_ref):
        # aps_ref: (4, B, Ho+1, Wo+1, c_in) — zero-bordered activated phases.
        # Only the leading pad row / column of each phase is ever read as zero;
        # re-zero just that ring every step (interior fully rewritten below).
        aps_ref[:, :, 0:1, :, :] = jnp.zeros((4, B, 1, Wo + 1, c_in), compute_dtype)
        aps_ref[:, :, :, 0:1, :] = jnp.zeros((4, B, Ho + 1, 1, c_in), compute_dtype)

        for p, pref in enumerate((x00_ref, x01_ref, x10_ref, x11_ref)):
            xv = pref[...].astype(jnp.float32)                       # (B, Ho, Wo, c_in)
            av = jnp.maximum(xv * scale_ref[...] + bias_ref[...], 0.0)
            aps_ref[p, :, 1:Ho + 1, 1:Wo + 1, :] = av.astype(compute_dtype)

        # stride-2, pad-1, 3x3 conv: along each axis, tap k reads
        #   k=0 -> odd phase with its leading zero row/col (start 0)
        #   k=1 -> even phase (start 1);   k=2 -> odd phase (start 1)
        def rule(k):
            return (1, 0) if k == 0 else ((0, 1) if k == 1 else (1, 1))

        for ky in range(3):
            pr, rs = rule(ky)
            for kx in range(3):
                pc, cs = rule(kx)
                t = ky * 3 + kx
                patch = aps_ref[pr * 2 + pc, :, rs:rs + Ho, cs:cs + Wo, :]
                patch_ref[:, t * c_in:(t + 1) * c_in] = patch.reshape(nbhw, c_in)

        acc = jnp.dot(patch_ref[...], w_ref[...],
                      preferred_element_type=jnp.float32)            # (nbhw, c_out)
        o_ref[...] = acc.reshape(B, Ho, Wo, c_out).astype(o_ref.dtype)

    return kernel


def _bn_relu_conv3x3_s2(x, scale, bias, w_big, *, out_dtype, compute_dtype):
    N, H, W, c_in = x.shape
    assert H % 2 == 0 and W % 2 == 0, "stride-2 path assumes even H, W"
    Ho, Wo = H // 2, W // 2
    c_out = w_big.shape[-1]

    # Wrapper-side phase split (one cheap XLA strided-slice pass), carried in
    # compute_dtype so the phase arrays' HBM round trip is half-width in bf16.
    # TODO(synk): deinterleave inside the kernel with strided ref reads instead.
    xc = x.astype(compute_dtype)
    phases = [xc[:, py::2, px::2, :] for py in (0, 1) for px in (0, 1)]

    csize = jnp.dtype(compute_dtype).itemsize
    per_img = (4 * Ho * Wo * c_in * csize * 2
               + Ho * Wo * c_out * jnp.dtype(out_dtype).itemsize * 2
               + 4 * (Ho + 1) * (Wo + 1) * c_in * csize
               + Ho * Wo * 9 * c_in * csize)
    B = _pick_batch_tile(N, per_img)

    kernel = _make_bn_relu_conv_s2_kernel(B, Ho, Wo, c_in, c_out,
                                          compute_dtype=compute_dtype)
    phase_spec = pl.BlockSpec((B, Ho, Wo, c_in), lambda n: (n, 0, 0, 0))

    return pl.pallas_call(
        kernel,
        grid=(N // B,),
        in_specs=[phase_spec, phase_spec, phase_spec, phase_spec,
                  pl.BlockSpec((1, 1, 1, c_in), lambda n: (0, 0, 0, 0)),
                  pl.BlockSpec((1, 1, 1, c_in), lambda n: (0, 0, 0, 0)),
                  pl.BlockSpec((9 * c_in, c_out), lambda n: (0, 0))],
        out_specs=pl.BlockSpec((B, Ho, Wo, c_out), lambda n: (n, 0, 0, 0)),
        out_shape=jax.ShapeDtypeStruct((N, Ho, Wo, c_out), out_dtype),
        scratch_shapes=[
            pltpu.VMEM((4, B, Ho + 1, Wo + 1, c_in), compute_dtype),
            pltpu.VMEM((B * Ho * Wo, 9 * c_in), compute_dtype),
        ],
        compiler_params=pltpu.CompilerParams(
            dimension_semantics=("parallel",),
            vmem_limit_bytes=_VMEM_LIMIT),
    )(phases[0], phases[1], phases[2], phases[3],
      scale.reshape(1, 1, 1, c_in).astype(jnp.float32),
      bias.reshape(1, 1, 1, c_in).astype(jnp.float32),
      w_big.astype(compute_dtype))


# ---------------------------------------------------------------------------
# PreActBlock forward (two fused pallas_calls)
# ---------------------------------------------------------------------------

def preact_block_forward(x_nchw, params, stride=1, compute_dtype=jnp.bfloat16):
    # NCHW -> NHWC, carried in compute_dtype (halves DMA bytes in the bf16 path).
    x = jnp.transpose(x_nchw, (0, 2, 3, 1)).astype(compute_dtype)
    N, H, W, cin = x.shape
    planes = params['w1'].shape[-1]
    downsample = (stride != 1) or (cin != planes)

    s1, b1 = _fold_bn(*params['bn1'])
    s2, b2 = _fold_bn(*params['bn2'])
    w1 = params['w1'].reshape(9 * cin, planes)        # tap-major, channel-minor
    w2 = params['w2'].reshape(9 * planes, planes)

    if downsample:
        # Fold the 1x1 shortcut conv into extra output columns of conv1's
        # merged matmul: only the centre-tap rows carry wsc (the centre tap is
        # exactly the activated input / even-even phase for stride 1 / 2).
        wsc_cols = (jnp.zeros((9 * cin, planes), w1.dtype)
                    .at[4 * cin:5 * cin, :].set(params['wsc']))
        w1_big = jnp.concatenate([w1, wsc_cols], axis=1)   # (9*cin, 2*planes)

    if stride == 1:
        if downsample:
            y = _bn_relu_conv3x3_s1(x, s1, b1, w1_big, c_bn=cin,
                                    out_dtype=compute_dtype,
                                    compute_dtype=compute_dtype)
            out = _bn_relu_conv3x3_s1(y, s2, b2, w2, c_bn=planes,
                                      embedded_residual=True,
                                      out_dtype=jnp.float32,
                                      compute_dtype=compute_dtype)
        else:
            y = _bn_relu_conv3x3_s1(x, s1, b1, w1, c_bn=cin,
                                    out_dtype=compute_dtype,
                                    compute_dtype=compute_dtype)
            out = _bn_relu_conv3x3_s1(y, s2, b2, w2, c_bn=planes, residual=x,
                                      out_dtype=jnp.float32,
                                      compute_dtype=compute_dtype)
    elif stride == 2:
        y = _bn_relu_conv3x3_s2(x, s1, b1, w1_big,
                                out_dtype=compute_dtype,
                                compute_dtype=compute_dtype)
        out = _bn_relu_conv3x3_s1(y, s2, b2, w2, c_bn=planes,
                                  embedded_residual=True,
                                  out_dtype=jnp.float32,
                                  compute_dtype=compute_dtype)
    else:
        # TODO(synk): general strides would need an s*s phase decomposition.
        raise NotImplementedError("stride must be 1 or 2")

    return jnp.transpose(out, (0, 3, 1, 2))                # NHWC -> NCHW


# ---------------------------------------------------------------------------
# Deterministic parameter init (shapes follow the PyTorch module __init__)
# ---------------------------------------------------------------------------

def init_params(key, in_planes, planes, stride):
    ks = jax.random.split(key, 5)

    def bn_params(k, c):
        k1, k2, k3, k4 = jax.random.split(k, 4)
        gamma = 1.0 + 0.1 * jax.random.normal(k1, (c,), jnp.float32)
        beta = 0.1 * jax.random.normal(k2, (c,), jnp.float32)
        mean = 0.1 * jax.random.normal(k3, (c,), jnp.float32)
        var = 0.5 + jnp.abs(jax.random.normal(k4, (c,), jnp.float32))
        return (gamma, beta, mean, var)

    params = {
        'bn1': bn_params(ks[0], in_planes),
        'w1': 0.1 * jax.random.normal(ks[1], (3, 3, in_planes, planes), jnp.float32),
        'bn2': bn_params(ks[2], planes),
        'w2': 0.1 * jax.random.normal(ks[3], (3, 3, planes, planes), jnp.float32),
    }
    if stride != 1 or in_planes != planes:
        params['wsc'] = 0.1 * jax.random.normal(ks[4], (in_planes, planes), jnp.float32)
    return params


# ---------------------------------------------------------------------------
# Pure-JAX reference (lax.conv) for correctness checking
# ---------------------------------------------------------------------------

def reference_forward(x_nchw, params, stride=1):
    def bn(x, p):
        g, b, m, v = p
        inv = 1.0 / jnp.sqrt(v + BN_EPS)
        return (x - m[None, :, None, None]) * (g * inv)[None, :, None, None] \
               + b[None, :, None, None]

    def conv(x, w_hwio, s, pad):
        w = jnp.transpose(w_hwio, (3, 2, 0, 1))   # HWIO -> OIHW
        return lax.conv_general_dilated(
            x, w, (s, s), [(pad, pad), (pad, pad)],
            dimension_numbers=('NCHW', 'OIHW', 'NCHW'))

    cin = x_nchw.shape[1]
    planes = params['w1'].shape[-1]
    a1 = jax.nn.relu(bn(x_nchw, params['bn1']))
    if stride != 1 or cin != planes:
        wsc_hwio = params['wsc'].reshape(1, 1, cin, planes)
        shortcut = conv(a1, wsc_hwio, stride, 0)
    else:
        shortcut = x_nchw
    o1 = conv(a1, params['w1'], stride, 1)
    a2 = jax.nn.relu(bn(o1, params['bn2']))
    o2 = conv(a2, params['w2'], 1, 1)
    return o2 + shortcut


if __name__ == "__main__":
    key = jax.random.PRNGKey(0)
    kx, kp = jax.random.split(key)

    def check(x, params, stride, f32_tol=2e-3, bf16_tol=8e-2):
        ref = reference_forward(x, params, stride=stride)

        # f32 compute path: tight check against the f32 reference.
        fwd32 = jax.jit(functools.partial(preact_block_forward, stride=stride,
                                          compute_dtype=jnp.float32))
        out32 = jax.block_until_ready(fwd32(x, params))
        assert out32.shape == ref.shape, (out32.shape, ref.shape)
        err32 = float(jnp.max(jnp.abs(out32 - ref)))
        assert jnp.allclose(out32, ref, atol=f32_tol, rtol=f32_tol), f"f32 err {err32}"

        # bf16 MXU path (f32 accumulation): looser tolerance vs the f32 reference.
        fwd16 = jax.jit(functools.partial(preact_block_forward, stride=stride,
                                          compute_dtype=jnp.bfloat16))
        out16 = jax.block_until_ready(fwd16(x, params))
        err16 = float(jnp.max(jnp.abs(out16 - ref)))
        assert jnp.allclose(out16, ref, atol=bf16_tol, rtol=bf16_tol), f"bf16 err {err16}"

    # Small demo shapes: downsample block (in_planes != planes), stride 1 and 2.
    in_planes, planes = 4, 8
    x = jax.random.normal(kx, (2, in_planes, 16, 16), jnp.float32)
    for stride in (1, 2):
        params = init_params(kp, in_planes, planes, stride)
        check(x, params, stride)

    # Identity-shortcut block (in_planes == planes, stride 1).
    x_id = jax.random.normal(kx, (2, planes, 16, 16), jnp.float32)
    params_id = init_params(kp, planes, planes, 1)
    check(x_id, params_id, 1)

    # One PreActResNet-20-scale config (real channel counts, stride-2 downsample).
    x_r = jax.random.normal(kx, (2, 16, 32, 32), jnp.float32)
    params_r = init_params(kp, 16, 32, 2)
    check(x_r, params_r, 2)

    print("KERNEL_OK")
</pallas_src>

<mosaic_0001>
module attributes {stable_mosaic.version = 11 : i64} {
  func.func @kernel(%arg0: i32, %arg1: memref<1x16x16x4xf32, #tpu.memory_space<vmem>>, %arg2: memref<1x1x1x4xf32, #tpu.memory_space<vmem>>, %arg3: memref<1x1x1x4xf32, #tpu.memory_space<vmem>>, %arg4: memref<36x16xf32, #tpu.memory_space<vmem>>, %arg5: memref<1x16x16x16xf32, #tpu.memory_space<vmem>>, %arg6: memref<1x18x18x4xf32, #tpu.memory_space<vmem>>, %arg7: memref<256x36xf32, #tpu.memory_space<vmem>>) attributes {dimension_semantics = [#tpu.dimension_semantics<parallel>], iteration_bounds = array<i64: 2>, scalar_prefetch = 0 : i64, scratch_operands = 2 : i64, tpu.core_type = #tpu.core_type<tc>, window_params = [{transform_indices = @transform_0, window_bounds = array<i64: 1, 16, 16, 4>}, {pipeline_mode = #tpu.pipeline_mode<synchronous>, transform_indices = @transform_1, window_bounds = array<i64: 1, 1, 1, 4>}, {pipeline_mode = #tpu.pipeline_mode<synchronous>, transform_indices = @transform_2, window_bounds = array<i64: 1, 1, 1, 4>}, {pipeline_mode = #tpu.pipeline_mode<synchronous>, transform_indices = @transform_3, window_bounds = array<i64: 36, 16>}, {transform_indices = @transform_4, window_bounds = array<i64: 1, 16, 16, 16>}]} {
    %cst = arith.constant 0.000000e+00 : f32
    %0 = vector.broadcast %cst : f32 to vector<1x1x18x4xf32>
    %c0 = arith.constant 0 : index
    %c0_0 = arith.constant 0 : index
    %c0_1 = arith.constant 0 : index
    %c0_2 = arith.constant 0 : index
    %1 = vector.load %arg6[%c0, %c0_0, %c0_1, %c0_2] : memref<1x18x18x4xf32, #tpu.memory_space<vmem>>, vector<1x1x18x4xf32>
    tpu.vector_store %arg6[%c0, %c0_0, %c0_1, %c0_2], %0 {strides = array<i32>} : memref<1x18x18x4xf32, #tpu.memory_space<vmem>>, vector<1x1x18x4xf32>,
    %cst_3 = arith.constant 0.000000e+00 : f32
    %2 = vector.broadcast %cst_3 : f32 to vector<1x1x18x4xf32>
    %c0_4 = arith.constant 0 : index
    %c17 = arith.constant 17 : index
    %c0_5 = arith.constant 0 : index
    %c0_6 = arith.constant 0 : index
    %3 = vector.load %arg6[%c0_4, %c17, %c0_5, %c0_6] : memref<1x18x18x4xf32, #tpu.memory_space<vmem>>, vector<1x1x18x4xf32>
    tpu.vector_store %arg6[%c0_4, %c17, %c0_5, %c0_6], %2 {strides = array<i32>} : memref<1x18x18x4xf32, #tpu.memory_space<vmem>>, vector<1x1x18x4xf32>,
    %cst_7 = arith.constant 0.000000e+00 : f32
    %4 = vector.broadcast %cst_7 : f32 to vector<1x18x1x4xf32>
    %c0_8 = arith.constant 0 : index
    %c0_9 = arith.constant 0 : index
    %c0_10 = arith.constant 0 : index
    %c0_11 = arith.constant 0 : index
    %5 = vector.load %arg6[%c0_8, %c0_9, %c0_10, %c0_11] : memref<1x18x18x4xf32, #tpu.memory_space<vmem>>, vector<1x18x1x4xf32>
    tpu.vector_store %arg6[%c0_8, %c0_9, %c0_10, %c0_11], %4 {strides = array<i32>} : memref<1x18x18x4xf32, #tpu.memory_space<vmem>>, vector<1x18x1x4xf32>,
    %cst_12 = arith.constant 0.000000e+00 : f32
    %6 = vector.broadcast %cst_12 : f32 to vector<1x18x1x4xf32>
    %c0_13 = arith.constant 0 : index
    %c0_14 = arith.constant 0 : index
    %c17_15 = arith.constant 17 : index
    %c0_16 = arith.constant 0 : index
    %7 = vector.load %arg6[%c0_13, %c0_14, %c17_15, %c0_16] : memref<1x18x18x4xf32, #tpu.memory_space<vmem>>, vector<1x18x1x4xf32>
    tpu.vector_store %arg6[%c0_13, %c0_14, %c17_15, %c0_16], %6 {strides = array<i32>} : memref<1x18x18x4xf32, #tpu.memory_space<vmem>>, vector<1x18x1x4xf32>,
    %c0_17 = arith.constant 0 : index
    %c0_18 = arith.constant 0 : index
    %c0_19 = arith.constant 0 : index
    %c0_20 = arith.constant 0 : index
    %8 = vector.load %arg1[%c0_17, %c0_18, %c0_19, %c0_20] : memref<1x16x16x4xf32, #tpu.memory_space<vmem>>, vector<1x16x16x4xf32>
    %c0_21 = arith.constant 0 : index
    %c0_22 = arith.constant 0 : index
    %c0_23 = arith.constant 0 : index
    %c0_24 = arith.constant 0 : index
    %9 = vector.load %arg2[%c0_21, %c0_22, %c0_23, %c0_24] : memref<1x1x1x4xf32, #tpu.memory_space<vmem>>, vector<1x1x1x4xf32>
    %10 = vector.broadcast %9 : vector<1x1x1x4xf32> to vector<1x16x16x4xf32>
    %11 = arith.mulf %8, %10 : vector<1x16x16x4xf32>
    %c0_25 = arith.constant 0 : index
    %c0_26 = arith.constant 0 : index
    %c0_27 = arith.constant 0 : index
    %c0_28 = arith.constant 0 : index
    %12 = vector.load %arg3[%c0_25, %c0_26, %c0_27, %c0_28] : memref<1x1x1x4xf32, #tpu.memory_space<vmem>>, vector<1x1x1x4xf32>
    %13 = vector.broadcast %12 : vector<1x1x1x4xf32> to vector<1x16x16x4xf32>
    %14 = arith.addf %11, %13 : vector<1x16x16x4xf32>
    %cst_29 = arith.constant 0.000000e+00 : f32
    %15 = vector.broadcast %cst_29 : f32 to vector<1x16x16x4xf32>
    %16 = arith.maximumf %14, %15 : vector<1x16x16x4xf32>
    %c0_30 = arith.constant 0 : index
    %c1 = arith.constant 1 : index
    %c1_31 = arith.constant 1 : index
    %c0_32 = arith.constant 0 : index
    %17 = vector.load %arg6[%c0_30, %c1, %c1_31, %c0_32] : memref<1x18x18x4xf32, #tpu.memory_space<vmem>>, vector<1x16x16x4xf32>
    tpu.vector_store %arg6[%c0_30, %c1, %c1_31, %c0_32], %16 {strides = array<i32>} : memref<1x18x18x4xf32, #tpu.memory_space<vmem>>, vector<1x16x16x4xf32>,
    %c0_33 = arith.constant 0 : index
    %c0_34 = arith.constant 0 : index
    %c0_35 = arith.constant 0 : index
    %c0_36 = arith.constant 0 : index
    %18 = vector.load %arg6[%c0_33, %c0_34, %c0_35, %c0_36] : memref<1x18x18x4xf32, #tpu.memory_space<vmem>>, vector<1x16x16x4xf32>
    %19 = vector.shape_cast %18 : vector<1x16x16x4xf32> to vector<256x4xf32>
    %c0_37 = arith.constant 0 : index
    %c0_38 = arith.constant 0 : index
    %20 = vector.load %arg7[%c0_37, %c0_38] : memref<256x36xf32, #tpu.memory_space<vmem>>, vector<256x4xf32>
    tpu.vector_store %arg7[%c0_37, %c0_38], %19 {strides = array<i32>} : memref<256x36xf32, #tpu.memory_space<vmem>>, vector<256x4xf32>,
    %c0_39 = arith.constant 0 : index
    %c0_40 = arith.constant 0 : index
    %c1_41 = arith.constant 1 : index
    %c0_42 = arith.constant 0 : index
    %21 = vector.load %arg6[%c0_39, %c0_40, %c1_41, %c0_42] : memref<1x18x18x4xf32, #tpu.memory_space<vmem>>, vector<1x16x16x4xf32>
    %22 = vector.shape_cast %21 : vector<1x16x16x4xf32> to vector<256x4xf32>
    %c0_43 = arith.constant 0 : index
    %c4 = arith.constant 4 : index
    %23 = vector.load %arg7[%c0_43, %c4] : memref<256x36xf32, #tpu.memory_space<vmem>>, vector<256x4xf32>
    tpu.vector_store %arg7[%c0_43, %c4], %22 {strides = array<i32>} : memref<256x36xf32, #tpu.memory_space<vmem>>, vector<256x4xf32>,
    %c0_44 = arith.constant 0 : index
    %c0_45 = arith.constant 0 : index
    %c2 = arith.constant 2 : index
    %c0_46 = arith.constant 0 : index
    %24 = vector.load %arg6[%c0_44, %c0_45, %c2, %c0_46] : memref<1x18x18x4xf32, #tpu.memory_space<vmem>>, vector<1x16x16x4xf32>
    %25 = vector.shape_cast %24 : vector<1x16x16x4xf32> to vector<256x4xf32>
    %c0_47 = arith.constant 0 : index
    %c8 = arith.constant 8 : index
    %26 = vector.load %arg7[%c0_47, %c8] : memref<256x36xf32, #tpu.memory_space<vmem>>, vector<256x4xf32>
    tpu.vector_store %arg7[%c0_47, %c8], %25 {strides = array<i32>} : memref<256x36xf32, #tpu.memory_space<vmem>>, vector<256x4xf32>,
    %c0_48 = arith.constant 0 : index
    %c1_49 = arith.constant 1 : index
    %c0_50 = arith.constant 0 : index
    %c0_51 = arith.constant 0 : index
    %27 = vector.load %arg6[%c0_48, %c1_49, %c0_50, %c0_51] : memref<1x18x18x4xf32, #tpu.memory_space<vmem>>, vector<1x16x16x4xf32>
    %28 = vector.shape_cast %27 : vector<1x16x16x4xf32> to vector<256x4xf32>
    %c0_52 = arith.constant 0 : index
    %c12 = arith.constant 12 : index
    %29 = vector.load %arg7[%c0_52, %c12] : memref<256x36xf32, #tpu.memory_space<vmem>>, vector<256x4xf32>
    tpu.vector_store %arg7[%c0_52, %c12], %28 {strides = array<i32>} : memref<256x36xf32, #tpu.memory_space<vmem>>, vector<256x4xf32>,
    %c0_53 = arith.constant 0 : index
    %c1_54 = arith.constant 1 : index
    %c1_55 = arith.constant 1 : index
    %c0_56 = arith.constant 0 : index
    %30 = vector.load %arg6[%c0_53, %c1_54, %c1_55, %c0_56] : memref<1x18x18x4xf32, #tpu.memory_space<vmem>>, vector<1x16x16x4xf32>
    %31 = vector.shape_cast %30 : vector<1x16x16x4xf32> to vector<256x4xf32>
    %c0_57 = arith.constant 0 : index
    %c16 = arith.constant 16 : index
    %32 = vector.load %arg7[%c0_57, %c16] : memref<256x36xf32, #tpu.memory_space<vmem>>, vector<256x4xf32>
    tpu.vector_store %arg7[%c0_57, %c16], %31 {strides = array<i32>} : memref<256x36xf32, #tpu.memory_space<vmem>>, vector<256x4xf32>,
    %c0_58 = arith.constant 0 : index
    %c1_59 = arith.constant 1 : index
    %c2_60 = arith.constant 2 : index
    %c0_61 = arith.constant 0 : index
    %33 = vector.load %arg6[%c0_58, %c1_59, %c2_60, %c0_61] : memref<1x18x18x4xf32, #tpu.memory_space<vmem>>, vector<1x16x16x4xf32>
    %34 = vector.shape_cast %33 : vector<1x16x16x4xf32> to vector<256x4xf32>
    %c0_62 = arith.constant 0 : index
    %c20 = arith.constant 20 : index
    %35 = vector.load %arg7[%c0_62, %c20] : memref<256x36xf32, #tpu.memory_space<vmem>>, vector<256x4xf32>
    tpu.vector_store %arg7[%c0_62, %c20], %34 {strides = array<i32>} : memref<256x36xf32, #tpu.memory_space<vmem>>, vector<256x4xf32>,
    %c0_63 = arith.constant 0 : index
    %c2_64 = arith.constant 2 : index
    %c0_65 = arith.constant 0 : index
    %c0_66 = arith.constant 0 : index
    %36 = vector.load %arg6[%c0_63, %c2_64, %c0_65, %c0_66] : memref<1x18x18x4xf32, #tpu.memory_space<vmem>>, vector<1x16x16x4xf32>
    %37 = vector.shape_cast %36 : vector<1x16x16x4xf32> to vector<256x4xf32>
    %c0_67 = arith.constant 0 : index
    %c24 = arith.constant 24 : index
    %38 = vector.load %arg7[%c0_67, %c24] : memref<256x36xf32, #tpu.memory_space<vmem>>, vector<256x4xf32>
    tpu.vector_store %arg7[%c0_67, %c24], %37 {strides = array<i32>} : memref<256x36xf32, #tpu.memory_space<vmem>>, vector<256x4xf32>,
    %c0_68 = arith.constant 0 : index
    %c2_69 = arith.constant 2 : index
    %c1_70 = arith.constant 1 : index
    %c0_71 = arith.constant 0 : index
    %39 = vector.load %arg6[%c0_68, %c2_69, %c1_70, %c0_71] : memref<1x18x18x4xf32, #tpu.memory_space<vmem>>, vector<1x16x16x4xf32>
    %40 = vector.shape_cast %39 : vector<1x16x16x4xf32> to vector<256x4xf32>
    %c0_72 = arith.constant 0 : index
    %c28 = arith.constant 28 : index
    %41 = vector.load %arg7[%c0_72, %c28] : memref<256x36xf32, #tpu.memory_space<vmem>>, vector<256x4xf32>
    tpu.vector_store %arg7[%c0_72, %c28], %40 {strides = array<i32>} : memref<256x36xf32, #tpu.memory_space<vmem>>, vector<256x4xf32>,
    %c0_73 = arith.constant 0 : index
    %c2_74 = arith.constant 2 : index
    %c2_75 = arith.constant 2 : index
    %c0_76 = arith.constant 0 : index
    %42 = vector.load %arg6[%c0_73, %c2_74, %c2_75, %c0_76] : memref<1x18x18x4xf32, #tpu.memory_space<vmem>>, vector<1x16x16x4xf32>
    %43 = vector.shape_cast %42 : vector<1x16x16x4xf32> to vector<256x4xf32>
    %c0_77 = arith.constant 0 : index
    %c32 = arith.constant 32 : index
    %44 = vector.load %arg7[%c0_77, %c32] : memref<256x36xf32, #tpu.memory_space<vmem>>, vector<256x4xf32>
    tpu.vector_store %arg7[%c0_77, %c32], %43 {strides = array<i32>} : memref<256x36xf32, #tpu.memory_space<vmem>>, vector<256x4xf32>,
    %c0_78 = arith.constant 0 : index
    %c0_79 = arith.constant 0 : index
    %45 = vector.load %arg7[%c0_78, %c0_79] : memref<256x36xf32, #tpu.memory_space<vmem>>, vector<256x36xf32>
    %c0_80 = arith.constant 0 : index
    %c0_81 = arith.constant 0 : index
    %46 = vector.load %arg4[%c0_80, %c0_81] : memref<36x16xf32, #tpu.memory_space<vmem>>, vector<36x16xf32>
    %cst_82 = arith.constant dense<0.000000e+00> : vector<256x16xf32>
    %47 = tpu.matmul %45, %46, %cst_82 {dimension_numbers = #tpu.dot_dimension_numbers<[1], [0], [0], [1], [0, 0, 1, 1], [], []>} : vector<256x36xf32>, vector<36x16xf32>, vector<256x16xf32> -> vector<256x16xf32>
    %48 = vector.shape_cast %47 : vector<256x16xf32> to vector<1x16x16x16xf32>
    %c0_83 = arith.constant 0 : index
    %c0_84 = arith.constant 0 : index
    %c0_85 = arith.constant 0 : index
    %c0_86 = arith.constant 0 : index
    %49 = vector.load %arg5[%c0_83, %c0_84, %c0_85, %c0_86] : memref<1x16x16x16xf32, #tpu.memory_space<vmem>>, vector<1x16x16x16xf32>
    tpu.vector_store %arg5[%c0_83, %c0_84, %c0_85, %c0_86], %48 {strides = array<i32>} : memref<1x16x16x16xf32, #tpu.memory_space<vmem>>, vector<1x16x16x16xf32>,
    return
  }
  func.func @transform_0(%arg0: i32) -> (i32, i32, i32, i32) {
    %c0_i32 = arith.constant 0 : i32
    %c0_i32_0 = arith.constant 0 : i32
    %c0_i32_1 = arith.constant 0 : i32
    %c0_i32_2 = arith.constant 0 : i32
    return %arg0, %c0_i32, %c0_i32_0, %c0_i32_1 : i32, i32, i32, i32
  }
  func.func @transform_1(%arg0: i32) -> (i32, i32, i32, i32) {
    %c0_i32 = arith.constant 0 : i32
    %c0_i32_0 = arith.constant 0 : i32
    %c0_i32_1 = arith.constant 0 : i32
    %c0_i32_2 = arith.constant 0 : i32
    %c0_i32_3 = arith.constant 0 : i32
    return %c0_i32, %c0_i32_0, %c0_i32_1, %c0_i32_2 : i32, i32, i32, i32
  }
  func.func @transform_2(%arg0: i32) -> (i32, i32, i32, i32) {
    %c0_i32 = arith.constant 0 : i32
    %c0_i32_0 = arith.constant 0 : i32
    %c0_i32_1 = arith.constant 0 : i32
    %c0_i32_2 = arith.constant 0 : i32
    %c0_i32_3 = arith.constant 0 : i32
    return %c0_i32, %c0_i32_0, %c0_i32_1, %c0_i32_2 : i32, i32, i32, i32
  }
  func.func @transform_3(%arg0: i32) -> (i32, i32) {
    %c0_i32 = arith.constant 0 : i32
    %c0_i32_0 = arith.constant 0 : i32
    %c0_i32_1 = arith.constant 0 : i32
    return %c0_i32, %c0_i32_0 : i32, i32
  }
  func.func @transform_4(%arg0: i32) -> (i32, i32, i32, i32) {
    %c0_i32 = arith.constant 0 : i32
    %c0_i32_0 = arith.constant 0 : i32
    %c0_i32_1 = arith.constant 0 : i32
    %c0_i32_2 = arith.constant 0 : i32
    return %arg0, %c0_i32, %c0_i32_0, %c0_i32_1 : i32, i32, i32, i32
  }
}

module attributes {stable_mosaic.version = 11 : i64} {
  func.func @kernel(%arg0: i32, %arg1: memref<1x16x16x16xf32, #tpu.memory_space<vmem>>, %arg2: memref<1x1x1x8xf32, #tpu.memory_space<vmem>>, %arg3: memref<1x1x1x8xf32, #tpu.memory_space<vmem>>, %arg4: memref<72x8xf32, #tpu.memory_space<vmem>>, %arg5: memref<1x16x16x8xf32, #tpu.memory_space<vmem>>, %arg6: memref<1x18x18x8xf32, #tpu.memory_space<vmem>>, %arg7: memref<256x72xf32, #tpu.memory_space<vmem>>) attributes {dimension_semantics = [#tpu.dimension_semantics<parallel>], iteration_bounds = array<i64: 2>, scalar_prefetch = 0 : i64, scratch_operands = 2 : i64, tpu.core_type = #tpu.core_type<tc>, window_params = [{transform_indices = @transform_0, window_bounds = array<i64: 1, 16, 16, 16>}, {pipeline_mode = #tpu.pipeline_mode<synchronous>, transform_indices = @transform_1, window_bounds = array<i64: 1, 1, 1, 8>}, {pipeline_mode = #tpu.pipeline_mode<synchronous>, transform_indices = @transform_2, window_bounds = array<i64: 1, 1, 1, 8>}, {pipeline_mode = #tpu.pipeline_mode<synchronous>, transform_indices = @transform_3, window_bounds = array<i64: 72, 8>}, {transform_indices = @transform_4, window_bounds = array<i64: 1, 16, 16, 8>}]} {
    %cst = arith.constant 0.000000e+00 : f32
    %0 = vector.broadcast %cst : f32 to vector<1x1x18x8xf32>
    %c0 = arith.constant 0 : index
    %c0_0 = arith.constant 0 : index
    %c0_1 = arith.constant 0 : index
    %c0_2 = arith.constant 0 : index
    %1 = vector.load %arg6[%c0, %c0_0, %c0_1, %c0_2] : memref<1x18x18x8xf32, #tpu.memory_space<vmem>>, vector<1x1x18x8xf32>
    tpu.vector_store %arg6[%c0, %c0_0, %c0_1, %c0_2], %0 {strides = array<i32>} : memref<1x18x18x8xf32, #tpu.memory_space<vmem>>, vector<1x1x18x8xf32>,
    %cst_3 = arith.constant 0.000000e+00 : f32
    %2 = vector.broadcast %cst_3 : f32 to vector<1x1x18x8xf32>
    %c0_4 = arith.constant 0 : index
    %c17 = arith.constant 17 : index
    %c0_5 = arith.constant 0 : index
    %c0_6 = arith.constant 0 : index
    %3 = vector.load %arg6[%c0_4, %c17, %c0_5, %c0_6] : memref<1x18x18x8xf32, #tpu.memory_space<vmem>>, vector<1x1x18x8xf32>
    tpu.vector_store %arg6[%c0_4, %c17, %c0_5, %c0_6], %2 {strides = array<i32>} : memref<1x18x18x8xf32, #tpu.memory_space<vmem>>, vector<1x1x18x8xf32>,
    %cst_7 = arith.constant 0.000000e+00 : f32
    %4 = vector.broadcast %cst_7 : f32 to vector<1x18x1x8xf32>
    %c0_8 = arith.constant 0 : index
    %c0_9 = arith.constant 0 : index
    %c0_10 = arith.constant 0 : index
    %c0_11 = arith.constant 0 : index
    %5 = vector.load %arg6[%c0_8, %c0_9, %c0_10, %c0_11] : memref<1x18x18x8xf32, #tpu.memory_space<vmem>>, vector<1x18x1x8xf32>
    tpu.vector_store %arg6[%c0_8, %c0_9, %c0_10, %c0_11], %4 {strides = array<i32>} : memref<1x18x18x8xf32, #tpu.memory_space<vmem>>, vector<1x18x1x8xf32>,
    %cst_12 = arith.constant 0.000000e+00 : f32
    %6 = vector.broadcast %cst_12 : f32 to vector<1x18x1x8xf32>
    %c0_13 = arith.constant 0 : index
    %c0_14 = arith.constant 0 : index
    %c17_15 = arith.constant 17 : index
    %c0_16 = arith.constant 0 : index
    %7 = vector.load %arg6[%c0_13, %c0_14, %c17_15, %c0_16] : memref<1x18x18x8xf32, #tpu.memory_space<vmem>>, vector<1x18x1x8xf32>
    tpu.vector_store %arg6[%c0_13, %c0_14, %c17_15, %c0_16], %6 {strides = array<i32>} : memref<1x18x18x8xf32, #tpu.memory_space<vmem>>, vector<1x18x1x8xf32>,
    %c0_17 = arith.constant 0 : index
    %c0_18 = arith.constant 0 : index
    %c0_19 = arith.constant 0 : index
    %c0_20 = arith.constant 0 : index
    %8 = vector.load %arg1[%c0_17, %c0_18, %c0_19, %c0_20] : memref<1x16x16x16xf32, #tpu.memory_space<vmem>>, vector<1x16x16x8xf32>
    %c0_21 = arith.constant 0 : index
    %c0_22 = arith.constant 0 : index
    %c0_23 = arith.constant 0 : index
    %c0_24 = arith.constant 0 : index
    %9 = vector.load %arg2[%c0_21, %c0_22, %c0_23, %c0_24] : memref<1x1x1x8xf32, #tpu.memory_space<vmem>>, vector<1x1x1x8xf32>
    %10 = vector.broadcast %9 : vector<1x1x1x8xf32> to vector<1x16x16x8xf32>
    %11 = arith.mulf %8, %10 : vector<1x16x16x8xf32>
    %c0_25 = arith.constant 0 : index
    %c0_26 = arith.constant 0 : index
    %c0_27 = arith.constant 0 : index
    %c0_28 = arith.constant 0 : index
    %12 = vector.load %arg3[%c0_25, %c0_26, %c0_27, %c0_28] : memref<1x1x1x8xf32, #tpu.memory_space<vmem>>, vector<1x1x1x8xf32>
    %13 = vector.broadcast %12 : vector<1x1x1x8xf32> to vector<1x16x16x8xf32>
    %14 = arith.addf %11, %13 : vector<1x16x16x8xf32>
    %cst_29 = arith.constant 0.000000e+00 : f32
    %15 = vector.broadcast %cst_29 : f32 to vector<1x16x16x8xf32>
    %16 = arith.maximumf %14, %15 : vector<1x16x16x8xf32>
    %c0_30 = arith.constant 0 : index
    %c1 = arith.constant 1 : index
    %c1_31 = arith.constant 1 : index
    %c0_32 = arith.constant 0 : index
    %17 = vector.load %arg6[%c0_30, %c1, %c1_31, %c0_32] : memref<1x18x18x8xf32, #tpu.memory_space<vmem>>, vector<1x16x16x8xf32>
    tpu.vector_store %arg6[%c0_30, %c1, %c1_31, %c0_32], %16 {strides = array<i32>} : memref<1x18x18x8xf32, #tpu.memory_space<vmem>>, vector<1x16x16x8xf32>,
    %c0_33 = arith.constant 0 : index
    %c0_34 = arith.constant 0 : index
    %c0_35 = arith.constant 0 : index
    %c0_36 = arith.constant 0 : index
    %18 = vector.load %arg6[%c0_33, %c0_34, %c0_35, %c0_36] : memref<1x18x18x8xf32, #tpu.memory_space<vmem>>, vector<1x16x16x8xf32>
    %19 = vector.shape_cast %18 : vector<1x16x16x8xf32> to vector<256x8xf32>
    %c0_37 = arith.constant 0 : index
    %c0_38 = arith.constant 0 : index
    %20 = vector.load %arg7[%c0_37, %c0_38] : memref<256x72xf32, #tpu.memory_space<vmem>>, vector<256x8xf32>
    tpu.vector_store %arg7[%c0_37, %c0_38], %19 {strides = array<i32>} : memref<256x72xf32, #tpu.memory_space<vmem>>, vector<256x8xf32>,
    %c0_39 = arith.constant 0 : index
    %c0_40 = arith.constant 0 : index
    %c1_41 = arith.constant 1 : index
    %c0_42 = arith.constant 0 : index
    %21 = vector.load %arg6[%c0_39, %c0_40, %c1_41, %c0_42] : memref<1x18x18x8xf32, #tpu.memory_space<vmem>>, vector<1x16x16x8xf32>
    %22 = vector.shape_cast %21 : vector<1x16x16x8xf32> to vector<256x8xf32>
    %c0_43 = arith.constant 0 : index
    %c8 = arith.constant 8 : index
    %23 = vector.load %arg7[%c0_43, %c8] : memref<256x72xf32, #tpu.memory_space<vmem>>, vector<256x8xf32>
    tpu.vector_store %arg7[%c0_43, %c8], %22 {strides = array<i32>} : memref<256x72xf32, #tpu.memory_space<vmem>>, vector<256x8xf32>,
    %c0_44 = arith.constant 0 : index
    %c0_45 = arith.constant 0 : index
    %c2 = arith.constant 2 : index
    %c0_46 = arith.constant 0 : index
    %24 = vector.load %arg6[%c0_44, %c0_45, %c2, %c0_46] : memref<1x18x18x8xf32, #tpu.memory_space<vmem>>, vector<1x16x16x8xf32>
    %25 = vector.shape_cast %24 : vector<1x16x16x8xf32> to vector<256x8xf32>
    %c0_47 = arith.constant 0 : index
    %c16 = arith.constant 16 : index
    %26 = vector.load %arg7[%c0_47, %c16] : memref<256x72xf32, #tpu.memory_space<vmem>>, vector<256x8xf32>
    tpu.vector_store %arg7[%c0_47, %c16], %25 {strides = array<i32>} : memref<256x72xf32, #tpu.memory_space<vmem>>, vector<256x8xf32>,
    %c0_48 = arith.constant 0 : index
    %c1_49 = arith.constant 1 : index
    %c0_50 = arith.constant 0 : index
    %c0_51 = arith.constant 0 : index
    %27 = vector.load %arg6[%c0_48, %c1_49, %c0_50, %c0_51] : memref<1x18x18x8xf32, #tpu.memory_space<vmem>>, vector<1x16x16x8xf32>
    %28 = vector.shape_cast %27 : vector<1x16x16x8xf32> to vector<256x8xf32>
    %c0_52 = arith.constant 0 : index
    %c24 = arith.constant 24 : index
    %29 = vector.load %arg7[%c0_52, %c24] : memref<256x72xf32, #tpu.memory_space<vmem>>, vector<256x8xf32>
    tpu.vector_store %arg7[%c0_52, %c24], %28 {strides = array<i32>} : memref<256x72xf32, #tpu.memory_space<vmem>>, vector<256x8xf32>,
    %c0_53 = arith.constant 0 : index
    %c1_54 = arith.constant 1 : index
    %c1_55 = arith.constant 1 : index
    %c0_56 = arith.constant 0 : index
    %30 = vector.load %arg6[%c0_53, %c1_54, %c1_55, %c0_56] : memref<1x18x18x8xf32, #tpu.memory_space<vmem>>, vector<1x16x16x8xf32>
    %31 = vector.shape_cast %30 : vector<1x16x16x8xf32> to vector<256x8xf32>
    %c0_57 = arith.constant 0 : index
    %c32 = arith.constant 32 : index
    %32 = vector.load %arg7[%c0_57, %c32] : memref<256x72xf32, #tpu.memory_space<vmem>>, vector<256x8xf32>
    tpu.vector_store %arg7[%c0_57, %c32], %31 {strides = array<i32>} : memref<256x72xf32, #tpu.memory_space<vmem>>, vector<256x8xf32>,
    %c0_58 = arith.constant 0 : index
    %c1_59 = arith.constant 1 : index
    %c2_60 = arith.constant 2 : index
    %c0_61 = arith.constant 0 : index
    %33 = vector.load %arg6[%c0_58, %c1_59, %c2_60, %c0_61] : memref<1x18x18x8xf32, #tpu.memory_space<vmem>>, vector<1x16x16x8xf32>
    %34 = vector.shape_cast %33 : vector<1x16x16x8xf32> to vector<256x8xf32>
    %c0_62 = arith.constant 0 : index
    %c40 = arith.constant 40 : index
    %35 = vector.load %arg7[%c0_62, %c40] : memref<256x72xf32, #tpu.memory_space<vmem>>, vector<256x8xf32>
    tpu.vector_store %arg7[%c0_62, %c40], %34 {strides = array<i32>} : memref<256x72xf32, #tpu.memory_space<vmem>>, vector<256x8xf32>,
    %c0_63 = arith.constant 0 : index
    %c2_64 = arith.constant 2 : index
    %c0_65 = arith.constant 0 : index
    %c0_66 = arith.constant 0 : index
    %36 = vector.load %arg6[%c0_63, %c2_64, %c0_65, %c0_66] : memref<1x18x18x8xf32, #tpu.memory_space<vmem>>, vector<1x16x16x8xf32>
    %37 = vector.shape_cast %36 : vector<1x16x16x8xf32> to vector<256x8xf32>
    %c0_67 = arith.constant 0 : index
    %c48 = arith.constant 48 : index
    %38 = vector.load %arg7[%c0_67, %c48] : memref<256x72xf32, #tpu.memory_space<vmem>>, vector<256x8xf32>
    tpu.vector_store %arg7[%c0_67, %c48], %37 {strides = array<i32>} : memref<256x72xf32, #tpu.memory_space<vmem>>, vector<256x8xf32>,
    %c0_68 = arith.constant 0 : index
    %c2_69 = arith.constant 2 : index
    %c1_70 = arith.constant 1 : index
    %c0_71 = arith.constant 0 : index
    %39 = vector.load %arg6[%c0_68, %c2_69, %c1_70, %c0_71] : memref<1x18x18x8xf32, #tpu.memory_space<vmem>>, vector<1x16x16x8xf32>
    %40 = vector.shape_cast %39 : vector<1x16x16x8xf32> to vector<256x8xf32>
    %c0_72 = arith.constant 0 : index
    %c56 = arith.constant 56 : index
    %41 = vector.load %arg7[%c0_72, %c56] : memref<256x72xf32, #tpu.memory_space<vmem>>, vector<256x8xf32>
    tpu.vector_store %arg7[%c0_72, %c56], %40 {strides = array<i32>} : memref<256x72xf32, #tpu.memory_space<vmem>>, vector<256x8xf32>,
    %c0_73 = arith.constant 0 : index
    %c2_74 = arith.constant 2 : index
    %c2_75 = arith.constant 2 : index
    %c0_76 = arith.constant 0 : index
    %42 = vector.load %arg6[%c0_73, %c2_74, %c2_75, %c0_76] : memref<1x18x18x8xf32, #tpu.memory_space<vmem>>, vector<1x16x16x8xf32>
    %43 = vector.shape_cast %42 : vector<1x16x16x8xf32> to vector<256x8xf32>
    %c0_77 = arith.constant 0 : index
    %c64 = arith.constant 64 : index
    %44 = vector.load %arg7[%c0_77, %c64] : memref<256x72xf32, #tpu.memory_space<vmem>>, vector<256x8xf32>
    tpu.vector_store %arg7[%c0_77, %c64], %43 {strides = array<i32>} : memref<256x72xf32, #tpu.memory_space<vmem>>, vector<256x8xf32>,
    %c0_78 = arith.constant 0 : index
    %c0_79 = arith.constant 0 : index
    %45 = vector.load %arg7[%c0_78, %c0_79] : memref<256x72xf32, #tpu.memory_space<vmem>>, vector<256x72xf32>
    %c0_80 = arith.constant 0 : index
    %c0_81 = arith.constant 0 : index
    %46 = vector.load %arg4[%c0_80, %c0_81] : memref<72x8xf32, #tpu.memory_space<vmem>>, vector<72x8xf32>
    %cst_82 = arith.constant dense<0.000000e+00> : vector<256x8xf32>
    %47 = tpu.matmul %45, %46, %cst_82 {dimension_numbers = #tpu.dot_dimension_numbers<[1], [0], [0], [1], [0, 0, 1, 1], [], []>} : vector<256x72xf32>, vector<72x8xf32>, vector<256x8xf32> -> vector<256x8xf32>
    %c0_83 = arith.constant 0 : index
    %c0_84 = arith.constant 0 : index
    %c0_85 = arith.constant 0 : index
    %c8_86 = arith.constant 8 : index
    %48 = vector.load %arg1[%c0_83, %c0_84, %c0_85, %c8_86] : memref<1x16x16x16xf32, #tpu.memory_space<vmem>>, vector<1x16x16x8xf32>
    %49 = vector.shape_cast %48 : vector<1x16x16x8xf32> to vector<256x8xf32>
    %50 = arith.addf %47, %49 : vector<256x8xf32>
    %51 = vector.shape_cast %50 : vector<256x8xf32> to vector<1x16x16x8xf32>
    %c0_87 = arith.constant 0 : index
    %c0_88 = arith.constant 0 : index
    %c0_89 = arith.constant 0 : index
    %c0_90 = arith.constant 0 : index
    %52 = vector.load %arg5[%c0_87, %c0_88, %c0_89, %c0_90] : memref<1x16x16x8xf32, #tpu.memory_space<vmem>>, vector<1x16x16x8xf32>
    tpu.vector_store %arg5[%c0_87, %c0_88, %c0_89, %c0_90], %51 {strides = array<i32>} : memref<1x16x16x8xf32, #tpu.memory_space<vmem>>, vector<1x16x16x8xf32>,
    return
  }
  func.func @transform_0(%arg0: i32) -> (i32, i32, i32, i32) {
    %c0_i32 = arith.constant 0 : i32
    %c0_i32_0 = arith.constant 0 : i32
    %c0_i32_1 = arith.constant 0 : i32
    %c0_i32_2 = arith.constant 0 : i32
    return %arg0, %c0_i32, %c0_i32_0, %c0_i32_1 : i32, i32, i32, i32
  }
  func.func @transform_1(%arg0: i32) -> (i32, i32, i32, i32) {
    %c0_i32 = arith.constant 0 : i32
    %c0_i32_0 = arith.constant 0 : i32
    %c0_i32_1 = arith.constant 0 : i32
    %c0_i32_2 = arith.constant 0 : i32
    %c0_i32_3 = arith.constant 0 : i32
    return %c0_i32, %c0_i32_0, %c0_i32_1, %c0_i32_2 : i32, i32, i32, i32
  }
  func.func @transform_2(%arg0: i32) -> (i32, i32, i32, i32) {
    %c0_i32 = arith.constant 0 : i32
    %c0_i32_0 = arith.constant 0 : i32
    %c0_i32_1 = arith.constant 0 : i32
    %c0_i32_2 = arith.constant 0 : i32
    %c0_i32_3 = arith.constant 0 : i32
    return %c0_i32, %c0_i32_0, %c0_i32_1, %c0_i32_2 : i32, i32, i32, i32
  }
  func.func @transform_3(%arg0: i32) -> (i32, i32) {
    %c0_i32 = arith.constant 0 : i32
    %c0_i32_0 = arith.constant 0 : i32
    %c0_i32_1 = arith.constant 0 : i32
    return %c0_i32, %c0_i32_0 : i32, i32
  }
  func.func @transform_4(%arg0: i32) -> (i32, i32, i32, i32) {
    %c0_i32 = arith.constant 0 : i32
    %c0_i32_0 = arith.constant 0 : i32
    %c0_i32_1 = arith.constant 0 : i32
    %c0_i32_2 = arith.constant 0 : i32
    return %arg0, %c0_i32, %c0_i32_0, %c0_i32_1 : i32, i32, i32, i32
  }
}

</mosaic_0001>

<llo_original>
// kernel: preact_block_forward.2
$region0: #{preact_block_forward.2}
  #allocation0 [shape = 'u32[]', space=smem, size = 0x4, offset = 0x4, fixed_abs, tag = 'smem constant byte address 0x4 - core index']
  #allocation1 [shape = 'u32[144,128]{1,0:T(1,128)}', space=vmem, size = 0x12000, scoped, tag = 'internal scratch']
  #allocation2 [shape = 'f32[1,18,18,4]{3,2,1,0:T(8,128)}', space=vmem, size = 0x36000, scoped, tag = 'scratch operand']
  #allocation3 [shape = 'f32[256,36]{1,0:T(8,128)}', space=vmem, size = 0x20000, scoped, tag = 'scratch operand']
  %s0 = inlined_call_operand.vmem [shape: f32[2,16,16,4], index: 0, kind: input, shape index: {}]
  %s1 = inlined_call_operand.vmem [shape: f32[1,1,1,4], index: 1, kind: input, shape index: {}]
  %s2 = inlined_call_operand.vmem [shape: f32[1,1,1,4], index: 2, kind: input, shape index: {}]
  %s3 = inlined_call_operand.vmem [shape: f32[36,16], index: 3, kind: input, shape index: {}]
  %s4 = inlined_call_operand.vmem [shape: f32[2,16,16,16], index: 4, kind: output, shape index: {}]
  %s5 = sld [smem:[#allocation0]]
  $region49: #{preact_block_forward.2} parent=0
    _
  %s7 = ssub.s32 1, %s5
  %s8 = scalar_select 0, %s7, %s5
  loop: start=0, step=1, limit=4
  $region2: #{preact_block_forward.2} parent=0 // loop_pre_header
    _
  $region3: #{preact_block_forward.2} parent=0 // loop_header
    %s10 = sphi 0, %s14
    %p11 = scmp.ge.s32.totalorder %s10, 4
    %s20 = sphi 0, %s22
    %s23 = sphi 0, %s20
    %s24 = sphi 0, %s23
    %s40 = sphi 0, %s24
    %s44 = sphi 0, %s44
    %s46 = sphi 0, %s44
    %s47 = sphi 0, %s46
    %s61 = sphi 0, %s47
    %s65 = sphi 0, %s65
    %s67 = sphi 0, %s65
    %s68 = sphi 0, %s67
    %s82 = sphi 0, %s68
    %s86 = sphi 0, %s86
    %s88 = sphi 0, %s86
    %s89 = sphi 0, %s88
    %s103 = sphi 0, %s89
    %s109 = sphi 0, %s111
    %s112 = sphi 0, %s109
    %s113 = sphi 0, %s112
    %s129 = sphi 0, %s113
  $region4: #{preact_block_forward.2} parent=0 // loop_header_branch
    %13 = sbr.rel (%p11) target = $region8
  $region5: #{preact_block_forward.2} parent=0 // loop_body
    %s15 = ssub.s32 %s10, 1
    %s16 = ssub.s32 %s10, 2
    %s17 = sadd.s32 %s10, 1
    %s18 = ssub.s32 %s10, %s17
    %p19 = scmp.eq.s32.totalorder %s18, 0
    %s21 = sadd.s32 %s20, 1
    %s22 = scalar_select %p19, %s20, %s21
    %p25 = pneg %p19
    %p26 = scmp.eq.s32.totalorder %s10, 1
    %p27 = por %p25, %p26
    %p28 = scmp.ne.s32.totalorder %s20, %s23
    %p29 = scmp.eq.s32.totalorder %s10, 0
    %p30 = por %p28, %p29
    %p31 = scmp.ne.s32.totalorder %s20, %s23
    %p32 = scmp.eq.s32.totalorder %s15, 1
    %p33 = por %p31, %p32
    %p34 = scmp.ne.s32.totalorder %s23, %s24
    %p35 = scmp.eq.s32.totalorder %s15, 0
    %p36 = por %p34, %p35
    %p37 = scmp.ne.s32.totalorder %s23, %s24
    %p38 = scmp.eq.s32.totalorder %s16, 1
    %p39 = por %p37, %p38
    %p41 = scmp.ne.s32.totalorder %s24, %s40
    %p42 = scmp.eq.s32.totalorder %s16, 0
    %p43 = por %p41, %p42
    %s45 = sadd.s32 %s44, 1
    %p48 = scmp.eq.s32.totalorder %s10, 1
    %p49 = scmp.ne.s32.totalorder %s44, %s46
    %p50 = scmp.eq.s32.totalorder %s10, 0
    %p51 = por %p49, %p50
    %p52 = scmp.ne.s32.totalorder %s44, %s46
    %p53 = scmp.eq.s32.totalorder %s15, 1
    %p54 = por %p52, %p53
    %p55 = scmp.ne.s32.totalorder %s46, %s47
    %p56 = scmp.eq.s32.totalorder %s15, 0
    %p57 = por %p55, %p56
    %p58 = scmp.ne.s32.totalorder %s46, %s47
    %p59 = scmp.eq.s32.totalorder %s16, 1
    %p60 = por %p58, %p59
    %p62 = scmp.ne.s32.totalorder %s47, %s61
    %p63 = scmp.eq.s32.totalorder %s16, 0
    %p64 = por %p62, %p63
    %s66 = sadd.s32 %s65, 1
    %p69 = scmp.eq.s32.totalorder %s10, 1
    %p70 = scmp.ne.s32.totalorder %s65, %s67
    %p71 = scmp.eq.s32.totalorder %s10, 0
    %p72 = por %p70, %p71
    %p73 = scmp.ne.s32.totalorder %s65, %s67
    %p74 = scmp.eq.s32.totalorder %s15, 1
    %p75 = por %p73, %p74
    %p76 = scmp.ne.s32.totalorder %s67, %s68
    %p77 = scmp.eq.s32.totalorder %s15, 0
    %p78 = por %p76, %p77
    %p79 = scmp.ne.s32.totalorder %s67, %s68
    %p80 = scmp.eq.s32.totalorder %s16, 1
    %p81 = por %p79, %p80
    %p83 = scmp.ne.s32.totalorder %s68, %s82
    %p84 = scmp.eq.s32.totalorder %s16, 0
    %p85 = por %p83, %p84
    %s87 = sadd.s32 %s86, 1
    %p90 = scmp.eq.s32.totalorder %s10, 1
    %p91 = scmp.ne.s32.totalorder %s86, %s88
    %p92 = scmp.eq.s32.totalorder %s10, 0
    %p93 = por %p91, %p92
    %p94 = scmp.ne.s32.totalorder %s86, %s88
    %p95 = scmp.eq.s32.totalorder %s15, 1
    %p96 = por %p94, %p95
    %p97 = scmp.ne.s32.totalorder %s88, %s89
    %p98 = scmp.eq.s32.totalorder %s15, 0
    %p99 = por %p97, %p98
    %p100 = scmp.ne.s32.totalorder %s88, %s89
    %p101 = scmp.eq.s32.totalorder %s16, 1
    %p102 = por %p100, %p101
    %p104 = scmp.ne.s32.totalorder %s89, %s103
    %p105 = scmp.eq.s32.totalorder %s16, 0
    %p106 = por %p104, %p105
    %s107 = ssub.s32 %s10, %s17
    %p108 = scmp.eq.s32.totalorder %s107, 0
    %s110 = sadd.s32 %s109, 1
    %s111 = scalar_select %p108, %s109, %s110
    %p114 = pneg %p108
    %p115 = scmp.eq.s32.totalorder %s10, 1
    %p116 = por %p114, %p115
    %p117 = scmp.ne.s32.totalorder %s109, %s112
    %p118 = scmp.eq.s32.totalorder %s10, 0
    %p119 = por %p117, %p118
    %p120 = scmp.ne.s32.totalorder %s109, %s112
    %p121 = scmp.eq.s32.totalorder %s15, 1
    %p122 = por %p120, %p121
    %p123 = scmp.ne.s32.totalorder %s112, %s113
    %p124 = scmp.eq.s32.totalorder %s15, 0
    %p125 = por %p123, %p124
    %p126 = scmp.ne.s32.totalorder %s112, %s113
    %p127 = scmp.eq.s32.totalorder %s16, 1
    %p128 = por %p126, %p127
    %p130 = scmp.ne.s32.totalorder %s113, %s129
    %p131 = scmp.eq.s32.totalorder %s16, 0
    %p132 = por %p130, %p131
    %p133 = scmp.le.s32.totalorder 1, %s10
    %p134 = scmp.lt.s32.totalorder %s10, 3
    %p135 = pnand %p133, %p134
    %p136 = pneg %p135
    // Predicated region
    $region9: #{preact_block_forward.2} parent=5 // pred_check
      _
    $region10: #{preact_block_forward.2} parent=5 // pred_check_branch
      %138 = sbr.rel (%p135) target = $region12
    $region11: #{preact_block_forward.2} parent=5 // pred_region
      %s139 = ssub.s32 %s10, 1
      // Predicated region
      $region13: #{preact_block_forward.2} parent=11 // pred_check
        %p140 = pneg %p57
      $region14: #{preact_block_forward.2} parent=11 // pred_check_branch
        %142 = sbr.rel (%p140) target = $region16
      $region15: #{preact_block_forward.2} parent=11 // pred_region
        _
      $region16: #{preact_block_forward.2} parent=11 // pred_fallthru
        _
      // Predicated region
      $region17: #{preact_block_forward.2} parent=11 // pred_check
        %p143 = pneg %p78
      $region18: #{preact_block_forward.2} parent=11 // pred_check_branch
        %145 = sbr.rel (%p143) target = $region20
      $region19: #{preact_block_forward.2} parent=11 // pred_region
        _
      $region20: #{preact_block_forward.2} parent=11 // pred_fallthru
        _
      // Predicated region
      $region21: #{preact_block_forward.2} parent=11 // pred_check
        %p146 = pneg %p99
      $region22: #{preact_block_forward.2} parent=11 // pred_check_branch
        %148 = sbr.rel (%p146) target = $region24
      $region23: #{preact_block_forward.2} parent=11 // pred_region
        _
      $region24: #{preact_block_forward.2} parent=11 // pred_fallthru
        _
    $region12: #{preact_block_forward.2} parent=5 // pred_fallthru
      _
    %p149 = scmp.lt.s32.totalorder %s10, 2
    // Predicated region
    $region25: #{preact_block_forward.2} parent=5 // pred_check
      %p150 = pneg %p149
    $region26: #{preact_block_forward.2} parent=5 // pred_check_branch
      %152 = sbr.rel (%p150) target = $region28
    $region27: #{preact_block_forward.2} parent=5 // pred_region
      // Predicated region
      $region29: #{preact_block_forward.2} parent=27 // pred_check
        %p153 = pneg %p30
      $region30: #{preact_block_forward.2} parent=27 // pred_check_branch
        %155 = sbr.rel (%p153) target = $region32
      $region31: #{preact_block_forward.2} parent=27 // pred_region
        %p156 = scmp.lt.s32.totalorder %s10, 1
        %s157 = scalar_select %p156, %s10, 1
        %s158 = smul.addr %s157, 32
        %s159 = smul.addr %s158, 8
        %s160 = scalar_lea.vmem %s0, %s159
      $region32: #{preact_block_forward.2} parent=27 // pred_fallthru
        _
    $region28: #{preact_block_forward.2} parent=5 // pred_fallthru
      _
    %p161 = scmp.le.s32.totalorder 1, %s10
    %p162 = scmp.lt.s32.totalorder %s10, 3
    %p163 = pnand %p161, %p162
    %p164 = pneg %p163
    // Predicated region
    $region33: #{preact_block_forward.2} parent=5 // pred_check
      _
    $region34: #{preact_block_forward.2} parent=5 // pred_check_branch
      %166 = sbr.rel (%p163) target = $region36
    $region35: #{preact_block_forward.2} parent=5 // pred_region
      %s167 = ssub.s32 %s10, 1
      %p168 = scmp.lt.s32.totalorder %s15, 1
      %s169 = scalar_select %p168, %s15, 1
      %s170 = smul.addr %s169, 32
      %s171 = smul.addr %s170, 8
      %s172 = scalar_lea.vmem %s0, %s171
      %p173 = pneg %p36
      %p174 = pneg %p33
      %p175 = pneg %p57
      %p176 = pneg %p54
      %p177 = pneg %p78
      %p178 = pneg %p75
      %p179 = pneg %p99
      %p180 = pneg %p96
      %p181 = pneg %p125
      %p182 = pneg %p122
      %p183 = scmp.lt.s32.totalorder %s15, 1
      %s184 = scalar_select %p183, %s15, 1
      %s185 = smul.addr %s184, 32
      %s186 = smul.addr %s185, 8
      %s187 = scalar_lea.vmem %s4, %s186
      %p188 = scmp.lt.s32.totalorder %s15, 1
      %s189 = scalar_select %p188, %s15, 1
      %s190 = smul.addr %s189, 32
      %s191 = smul.addr %s190, 8
      %s192 = scalar_lea.vmem %s0, %s191
      %p193 = scmp.lt.s32.totalorder %s15, 1
      %s194 = scalar_select %p193, %s15, 1
      %s195 = smul.addr %s194, 32
      %s196 = smul.addr %s195, 8
      %s197 = scalar_lea.vmem %s4, %s196
      %vm198 = vcmask 31744
      %199 = vst.msk [vmem:[#allocation2] sm:$0xff] %vm198, 0.0
      %200 = vst.msk [vmem:[#allocation2 + $0x8] sm:$0xff] %vm198, 0.0
      %vm201 = vcmask 25600
      %202 = vst.msk [vmem:[#allocation2 + $0x10] sm:$0x3] %vm201, 0.0
      %s203 = scalar_lea.vmem [#allocation2], 408
      %204 = vst.msk [vmem:[%s203] sm:$0xff] %vm198, 0.0
      %205 = vst.msk [vmem:[%s203 + $0x8] sm:$0xff] %vm198, 0.0
      %206 = vst.msk [vmem:[%s203 + $0x10] sm:$0x3] %vm201, 0.0
      %vm207 = vcmask 24576
      %208 = vst.msk [vmem:[#allocation2] sm:$0x1] %vm207, 0.0
      %209 = vst.msk [vmem:[#allocation2 + $0x18] sm:$0x1] %vm207, 0.0
      %210 = vst.msk [vmem:[#allocation2 + $0x30] sm:$0x1] %vm207, 0.0
      %211 = vst.msk [vmem:[#allocation2 + $0x48] sm:$0x1] %vm207, 0.0
      %212 = vst.msk [vmem:[#allocation2 + $0x60] sm:$0x1] %vm207, 0.0
      %213 = vst.msk [vmem:[#allocation2 + $0x78] sm:$0x1] %vm207, 0.0
      %214 = vst.msk [vmem:[#allocation2 + $0x90] sm:$0x1] %vm207, 0.0
      %215 = vst.msk [vmem:[#allocation2 + $0xa8] sm:$0x1] %vm207, 0.0
      %216 = vst.msk [vmem:[#allocation2 + $0xc0] sm:$0x1] %vm207, 0.0
      %217 = vst.msk [vmem:[#allocation2 + $0xd8] sm:$0x1] %vm207, 0.0
      %218 = vst.msk [vmem:[#allocation2 + $0xf0] sm:$0x1] %vm207, 0.0
      %219 = vst.msk [vmem:[#allocation2 + $0x108] sm:$0x1] %vm207, 0.0
      %220 = vst.msk [vmem:[#allocation2 + $0x120] sm:$0x1] %vm207, 0.0
      %221 = vst.msk [vmem:[#allocation2 + $0x138] sm:$0x1] %vm207, 0.0
      %222 = vst.msk [vmem:[#allocation2 + $0x150] sm:$0x1] %vm207, 0.0
      %223 = vst.msk [vmem:[#allocation2 + $0x168] sm:$0x1] %vm207, 0.0
      %224 = vst.msk [vmem:[#allocation2 + $0x180] sm:$0x1] %vm207, 0.0
      %225 = vst.msk [vmem:[#allocation2 + $0x198] sm:$0x1] %vm207, 0.0
      %226 = vst.msk [vmem:[#allocation2 + $0x11] sm:$0x1] %vm207, 0.0
      %227 = vst.msk [vmem:[#allocation2 + $0x29] sm:$0x1] %vm207, 0.0
      %228 = vst.msk [vmem:[#allocation2 + $0x41] sm:$0x1] %vm207, 0.0
      %229 = vst.msk [vmem:[#allocation2 + $0x59] sm:$0x1] %vm207, 0.0
      %230 = vst.msk [vmem:[#allocation2 + $0x71] sm:$0x1] %vm207, 0.0
      %231 = vst.msk [vmem:[#allocation2 + $0x89] sm:$0x1] %vm207, 0.0
      %232 = vst.msk [vmem:[#allocation2 + $0xa1] sm:$0x1] %vm207, 0.0
      %233 = vst.msk [vmem:[#allocation2 + $0xb9] sm:$0x1] %vm207, 0.0
      %234 = vst.msk [vmem:[#allocation2 + $0xd1] sm:$0x1] %vm207, 0.0
      %235 = vst.msk [vmem:[#allocation2 + $0xe9] sm:$0x1] %vm207, 0.0
      %236 = vst.msk [vmem:[#allocation2 + $0x101] sm:$0x1] %vm207, 0.0
      %237 = vst.msk [vmem:[#allocation2 + $0x119] sm:$0x1] %vm207, 0.0
      %238 = vst.msk [vmem:[#allocation2 + $0x131] sm:$0x1] %vm207, 0.0
      %239 = vst.msk [vmem:[#allocation2 + $0x149] sm:$0x1] %vm207, 0.0
      %240 = vst.msk [vmem:[#allocation2 + $0x161] sm:$0x1] %vm207, 0.0
      %241 = vst.msk [vmem:[#allocation2 + $0x179] sm:$0x1] %vm207, 0.0
      %242 = vst.msk [vmem:[#allocation2 + $0x191] sm:$0x1] %vm207, 0.0
      %243 = vst.msk [vmem:[#allocation2 + $0x1a9] sm:$0x1] %vm207, 0.0
      %v244 = vld [vmem:[%s192] sm:$0xff]
      %v245 = vld [vmem:[%s192 + $0x8] sm:$0xff]
      %v246 = vld [vmem:[%s192 + $0x10] sm:$0xff]
      %v247 = vld [vmem:[%s192 + $0x18] sm:$0xff]
      %v248 = vld [vmem:[%s192 + $0x20] sm:$0xff]
      %v249 = vld [vmem:[%s192 + $0x28] sm:$0xff]
      %v250 = vld [vmem:[%s192 + $0x30] sm:$0xff]
      %v251 = vld [vmem:[%s192 + $0x38] sm:$0xff]
      %v252 = vld [vmem:[%s192 + $0x40] sm:$0xff]
      %v253 = vld [vmem:[%s192 + $0x48] sm:$0xff]
      %v254 = vld [vmem:[%s192 + $0x50] sm:$0xff]
      %v255 = vld [vmem:[%s192 + $0x58] sm:$0xff]
      %v256 = vld [vmem:[%s192 + $0x60] sm:$0xff]
      %v257 = vld [vmem:[%s192 + $0x68] sm:$0xff]
      %v258 = vld [vmem:[%s192 + $0x70] sm:$0xff]
      %v259 = vld [vmem:[%s192 + $0x78] sm:$0xff]
      %v260 = vld [vmem:[%s192 + $0x80] sm:$0xff]
      %v261 = vld [vmem:[%s192 + $0x88] sm:$0xff]
      %v262 = vld [vmem:[%s192 + $0x90] sm:$0xff]
      %v263 = vld [vmem:[%s192 + $0x98] sm:$0xff]
      %v264 = vld [vmem:[%s192 + $0xa0] sm:$0xff]
      %v265 = vld [vmem:[%s192 + $0xa8] sm:$0xff]
      %v266 = vld [vmem:[%s192 + $0xb0] sm:$0xff]
      %v267 = vld [vmem:[%s192 + $0xb8] sm:$0xff]
      %v268 = vld [vmem:[%s192 + $0xc0] sm:$0xff]
      %v269 = vld [vmem:[%s192 + $0xc8] sm:$0xff]
      %v270 = vld [vmem:[%s192 + $0xd0] sm:$0xff]
      %v271 = vld [vmem:[%s192 + $0xd8] sm:$0xff]
      %v272 = vld [vmem:[%s192 + $0xe0] sm:$0xff]
      %v273 = vld [vmem:[%s192 + $0xe8] sm:$0xff]
      %v274 = vld [vmem:[%s192 + $0xf0] sm:$0xff]
      %v275 = vld [vmem:[%s192 + $0xf8] sm:$0xff]
      %v276 = vld [vmem:[%s1] sm:$0x1]
      %v278 = vlaneseq
      %v279 = vshrl.u32 %v278, 7
      %v280 = vsub.s32 0, %v279
      %v281 = vrot.slane %v276, %v280
      %v283 = vmul.f32 %v244, %v281
      %v284 = vmul.f32 %v245, %v281
      %v285 = vmul.f32 %v246, %v281
      %v286 = vmul.f32 %v247, %v281
      %v287 = vmul.f32 %v248, %v281
      %v288 = vmul.f32 %v249, %v281
      %v289 = vmul.f32 %v250, %v281
      %v290 = vmul.f32 %v251, %v281
      %v291 = vmul.f32 %v252, %v281
      %v292 = vmul.f32 %v253, %v281
      %v293 = vmul.f32 %v254, %v281
      %v294 = vmul.f32 %v255, %v281
      %v295 = vmul.f32 %v256, %v281
      %v296 = vmul.f32 %v257, %v281
      %v297 = vmul.f32 %v258, %v281
      %v298 = vmul.f32 %v259, %v281
      %v299 = vmul.f32 %v260, %v281
      %v300 = vmul.f32 %v261, %v281
      %v301 = vmul.f32 %v262, %v281
      %v302 = vmul.f32 %v263, %v281
      %v303 = vmul.f32 %v264, %v281
      %v304 = vmul.f32 %v265, %v281
      %v305 = vmul.f32 %v266, %v281
      %v306 = vmul.f32 %v267, %v281
      %v307 = vmul.f32 %v268, %v281
      %v308 = vmul.f32 %v269, %v281
      %v309 = vmul.f32 %v270, %v281
      %v310 = vmul.f32 %v271, %v281
      %v311 = vmul.f32 %v272, %v281
      %v312 = vmul.f32 %v273, %v281
      %v313 = vmul.f32 %v274, %v281
      %v314 = vmul.f32 %v275, %v281
      %v315 = vld [vmem:[%s2] sm:$0x1]
      %v317 = vlaneseq
      %v318 = vshrl.u32 %v317, 7
      %v319 = vsub.s32 0, %v318
      %v320 = vrot.slane %v315, %v319
      %v322 = vadd.f32 %v283, %v320
      %v323 = vadd.f32 %v284, %v320
      %v324 = vadd.f32 %v285, %v320
      %v325 = vadd.f32 %v286, %v320
      %v326 = vadd.f32 %v287, %v320
      %v327 = vadd.f32 %v288, %v320
      %v328 = vadd.f32 %v289, %v320
      %v329 = vadd.f32 %v290, %v320
      %v330 = vadd.f32 %v291, %v320
      %v331 = vadd.f32 %v292, %v320
      %v332 = vadd.f32 %v293, %v320
      %v333 = vadd.f32 %v294, %v320
      %v334 = vadd.f32 %v295, %v320
      %v335 = vadd.f32 %v296, %v320
      %v336 = vadd.f32 %v297, %v320
      %v337 = vadd.f32 %v298, %v320
      %v338 = vadd.f32 %v299, %v320
      %v339 = vadd.f32 %v300, %v320
      %v340 = vadd.f32 %v301, %v320
      %v341 = vadd.f32 %v302, %v320
      %v342 = vadd.f32 %v303, %v320
      %v343 = vadd.f32 %v304, %v320
      %v344 = vadd.f32 %v305, %v320
      %v345 = vadd.f32 %v306, %v320
      %v346 = vadd.f32 %v307, %v320
      %v347 = vadd.f32 %v308, %v320
      %v348 = vadd.f32 %v309, %v320
      %v349 = vadd.f32 %v310, %v320
      %v350 = vadd.f32 %v311, %v320
      %v351 = vadd.f32 %v312, %v320
      %v352 = vadd.f32 %v313, %v320
      %v353 = vadd.f32 %v314, %v320
      %v354 = vmax.f32 %v322, 0.0
      %v355 = vmax.f32 %v323, 0.0
      %v356 = vmax.f32 %v324, 0.0
      %v357 = vmax.f32 %v325, 0.0
      %v358 = vmax.f32 %v326, 0.0
      %v359 = vmax.f32 %v327, 0.0
      %v360 = vmax.f32 %v328, 0.0
      %v361 = vmax.f32 %v329, 0.0
      %v362 = vmax.f32 %v330, 0.0
      %v363 = vmax.f32 %v331, 0.0
      %v364 = vmax.f32 %v332, 0.0
      %v365 = vmax.f32 %v333, 0.0
      %v366 = vmax.f32 %v334, 0.0
      %v367 = vmax.f32 %v335, 0.0
      %v368 = vmax.f32 %v336, 0.0
      %v369 = vmax.f32 %v337, 0.0
      %v370 = vmax.f32 %v338, 0.0
      %v371 = vmax.f32 %v339, 0.0
      %v372 = vmax.f32 %v340, 0.0
      %v373 = vmax.f32 %v341, 0.0
      %v374 = vmax.f32 %v342, 0.0
      %v375 = vmax.f32 %v343, 0.0
      %v376 = vmax.f32 %v344, 0.0
      %v377 = vmax.f32 %v345, 0.0
      %v378 = vmax.f32 %v346, 0.0
      %v379 = vmax.f32 %v347, 0.0
      %v380 = vmax.f32 %v348, 0.0
      %v381 = vmax.f32 %v349, 0.0
      %v382 = vmax.f32 %v350, 0.0
      %v383 = vmax.f32 %v351, 0.0
      %v384 = vmax.f32 %v352, 0.0
      %v385 = vmax.f32 %v353, 0.0
      %s386 = scalar_lea.vmem [#allocation2], 24
      %387 = vst.msk [vmem:[%s386 + $0x1] sm:$0xff] %vm198, %v354
      %388 = vst.msk [vmem:[%s386 + $0x9] sm:$0xff] %vm198, %v355
      %389 = vst.msk [vmem:[%s386 + $0x19] sm:$0xff] %vm198, %v356
      %390 = vst.msk [vmem:[%s386 + $0x21] sm:$0xff] %vm198, %v357
      %391 = vst.msk [vmem:[%s386 + $0x31] sm:$0xff] %vm198, %v358
      %392 = vst.msk [vmem:[%s386 + $0x39] sm:$0xff] %vm198, %v359
      %393 = vst.msk [vmem:[%s386 + $0x49] sm:$0xff] %vm198, %v360
      %394 = vst.msk [vmem:[%s386 + $0x51] sm:$0xff] %vm198, %v361
      %395 = vst.msk [vmem:[%s386 + $0x61] sm:$0xff] %vm198, %v362
      %396 = vst.msk [vmem:[%s386 + $0x69] sm:$0xff] %vm198, %v363
      %397 = vst.msk [vmem:[%s386 + $0x79] sm:$0xff] %vm198, %v364
      %398 = vst.msk [vmem:[%s386 + $0x81] sm:$0xff] %vm198, %v365
      %399 = vst.msk [vmem:[%s386 + $0x91] sm:$0xff] %vm198, %v366
      %400 = vst.msk [vmem:[%s386 + $0x99] sm:$0xff] %vm198, %v367
      %401 = vst.msk [vmem:[%s386 + $0xa9] sm:$0xff] %vm198, %v368
      %402 = vst.msk [vmem:[%s386 + $0xb1] sm:$0xff] %vm198, %v369
      %403 = vst.msk [vmem:[%s386 + $0xc1] sm:$0xff] %vm198, %v370
      %404 = vst.msk [vmem:[%s386 + $0xc9] sm:$0xff] %vm198, %v371
      %405 = vst.msk [vmem:[%s386 + $0xd9] sm:$0xff] %vm198, %v372
      %406 = vst.msk [vmem:[%s386 + $0xe1] sm:$0xff] %vm198, %v373
      %407 = vst.msk [vmem:[%s386 + $0xf1] sm:$0xff] %vm198, %v374
      %408 = vst.msk [vmem:[%s386 + $0xf9] sm:$0xff] %vm198, %v375
      %409 = vst.msk [vmem:[%s386 + $0x109] sm:$0xff] %vm198, %v376
      %410 = vst.msk [vmem:[%s386 + $0x111] sm:$0xff] %vm198, %v377
      %411 = vst.msk [vmem:[%s386 + $0x121] sm:$0xff] %vm198, %v378
      %412 = vst.msk [vmem:[%s386 + $0x129] sm:$0xff] %vm198, %v379
      %413 = vst.msk [vmem:[%s386 + $0x139] sm:$0xff] %vm198, %v380
      %414 = vst.msk [vmem:[%s386 + $0x141] sm:$0xff] %vm198, %v381
      %415 = vst.msk [vmem:[%s386 + $0x151] sm:$0xff] %vm198, %v382
      %416 = vst.msk [vmem:[%s386 + $0x159] sm:$0xff] %vm198, %v383
      %417 = vst.msk [vmem:[%s386 + $0x169] sm:$0xff] %vm198, %v384
      %418 = vst.msk [vmem:[%s386 + $0x171] sm:$0xff] %vm198, %v385
      %v419 = vld [vmem:[#allocation2] sm:$0xff]
      %v420 = vld [vmem:[#allocation2 + $0x8] sm:$0xff]
      %v421 = vld [vmem:[#allocation2 + $0x18] sm:$0xff]
      %v422 = vld [vmem:[#allocation2 + $0x20] sm:$0xff]
      %v423 = vld [vmem:[#allocation2 + $0x30] sm:$0xff]
      %v424 = vld [vmem:[#allocation2 + $0x38] sm:$0xff]
      %v425 = vld [vmem:[#allocation2 + $0x48] sm:$0xff]
      %v426 = vld [vmem:[#allocation2 + $0x50] sm:$0xff]
      %v427 = vld [vmem:[#allocation2 + $0x60] sm:$0xff]
      %v428 = vld [vmem:[#allocation2 + $0x68] sm:$0xff]
      %v429 = vld [vmem:[#allocation2 + $0x78] sm:$0xff]
      %v430 = vld [vmem:[#allocation2 + $0x80] sm:$0xff]
      %v431 = vld [vmem:[#allocation2 + $0x90] sm:$0xff]
      %v432 = vld [vmem:[#allocation2 + $0x98] sm:$0xff]
      %v433 = vld [vmem:[#allocation2 + $0xa8] sm:$0xff]
      %v434 = vld [vmem:[#allocation2 + $0xb0] sm:$0xff]
      %v435 = vld [vmem:[#allocation2 + $0xc0] sm:$0xff]
      %v436 = vld [vmem:[#allocation2 + $0xc8] sm:$0xff]
      %v437 = vld [vmem:[#allocation2 + $0xd8] sm:$0xff]
      %v438 = vld [vmem:[#allocation2 + $0xe0] sm:$0xff]
      %v439 = vld [vmem:[#allocation2 + $0xf0] sm:$0xff]
      %v440 = vld [vmem:[#allocation2 + $0xf8] sm:$0xff]
      %v441 = vld [vmem:[#allocation2 + $0x108] sm:$0xff]
      %v442 = vld [vmem:[#allocation2 + $0x110] sm:$0xff]
      %v443 = vld [vmem:[#allocation2 + $0x120] sm:$0xff]
      %v444 = vld [vmem:[#allocation2 + $0x128] sm:$0xff]
      %v445 = vld [vmem:[#allocation2 + $0x138] sm:$0xff]
      %v446 = vld [vmem:[#allocation2 + $0x140] sm:$0xff]
      %v447 = vld [vmem:[#allocation2 + $0x150] sm:$0xff]
      %v448 = vld [vmem:[#allocation2 + $0x158] sm:$0xff]
      %v449 = vld [vmem:[#allocation2 + $0x168] sm:$0xff]
      %v450 = vld [vmem:[#allocation2 + $0x170] sm:$0xff]
      %451 = vst.msk [vmem:[#allocation3] sm:$0xff] %vm198, %v419
      %452 = vst.msk [vmem:[#allocation3 + $0x8] sm:$0xff] %vm198, %v420
      %453 = vst.msk [vmem:[#allocation3 + $0x10] sm:$0xff] %vm198, %v421
      %454 = vst.msk [vmem:[#allocation3 + $0x18] sm:$0xff] %vm198, %v422
      %455 = vst.msk [vmem:[#allocation3 + $0x20] sm:$0xff] %vm198, %v423
      %456 = vst.msk [vmem:[#allocation3 + $0x28] sm:$0xff] %vm198, %v424
      %457 = vst.msk [vmem:[#allocation3 + $0x30] sm:$0xff] %vm198, %v425
      %458 = vst.msk [vmem:[#allocation3 + $0x38] sm:$0xff] %vm198, %v426
      %459 = vst.msk [vmem:[#allocation3 + $0x40] sm:$0xff] %vm198, %v427
      %460 = vst.msk [vmem:[#allocation3 + $0x48] sm:$0xff] %vm198, %v428
      %461 = vst.msk [vmem:[#allocation3 + $0x50] sm:$0xff] %vm198, %v429
      %462 = vst.msk [vmem:[#allocation3 + $0x58] sm:$0xff] %vm198, %v430
      %463 = vst.msk [vmem:[#allocation3 + $0x60] sm:$0xff] %vm198, %v431
      %464 = vst.msk [vmem:[#allocation3 + $0x68] sm:$0xff] %vm198, %v432
      %465 = vst.msk [vmem:[#allocation3 + $0x70] sm:$0xff] %vm198, %v433
      %466 = vst.msk [vmem:[#allocation3 + $0x78] sm:$0xff] %vm198, %v434
      %467 = vst.msk [vmem:[#allocation3 + $0x80] sm:$0xff] %vm198, %v435
      %468 = vst.msk [vmem:[#allocation3 + $0x88] sm:$0xff] %vm198, %v436
      %469 = vst.msk [vmem:[#allocation3 + $0x90] sm:$0xff] %vm198, %v437
      %470 = vst.msk [vmem:[#allocation3 + $0x98] sm:$0xff] %vm198, %v438
      %471 = vst.msk [vmem:[#allocation3 + $0xa0] sm:$0xff] %vm198, %v439
      %472 = vst.msk [vmem:[#allocation3 + $0xa8] sm:$0xff] %vm198, %v440
      %473 = vst.msk [vmem:[#allocation3 + $0xb0] sm:$0xff] %vm198, %v441
      %474 = vst.msk [vmem:[#allocation3 + $0xb8] sm:$0xff] %vm198, %v442
      %475 = vst.msk [vmem:[#allocation3 + $0xc0] sm:$0xff] %vm198, %v443
      %476 = vst.msk [vmem:[#allocation3 + $0xc8] sm:$0xff] %vm198, %v444
      %477 = vst.msk [vmem:[#allocation3 + $0xd0] sm:$0xff] %vm198, %v445
      %478 = vst.msk [vmem:[#allocation3 + $0xd8] sm:$0xff] %vm198, %v446
      %479 = vst.msk [vmem:[#allocation3 + $0xe0] sm:$0xff] %vm198, %v447
      %480 = vst.msk [vmem:[#allocation3 + $0xe8] sm:$0xff] %vm198, %v448
      %481 = vst.msk [vmem:[#allocation3 + $0xf0] sm:$0xff] %vm198, %v449
      %482 = vst.msk [vmem:[#allocation3 + $0xf8] sm:$0xff] %vm198, %v450
      %v483 = vld [vmem:[#allocation2 + $0x1] sm:$0xff]
      %v484 = vld [vmem:[#allocation2 + $0x9] sm:$0xff]
      %v485 = vld [vmem:[#allocation2 + $0x19] sm:$0xff]
      %v486 = vld [vmem:[#allocation2 + $0x21] sm:$0xff]
      %v487 = vld [vmem:[#allocation2 + $0x31] sm:$0xff]
      %v488 = vld [vmem:[#allocation2 + $0x39] sm:$0xff]
      %v489 = vld [vmem:[#allocation2 + $0x49] sm:$0xff]
      %v490 = vld [vmem:[#allocation2 + $0x51] sm:$0xff]
      %v491 = vld [vmem:[#allocation2 + $0x61] sm:$0xff]
      %v492 = vld [vmem:[#allocation2 + $0x69] sm:$0xff]
      %v493 = vld [vmem:[#allocation2 + $0x79] sm:$0xff]
      %v494 = vld [vmem:[#allocation2 + $0x81] sm:$0xff]
      %v495 = vld [vmem:[#allocation2 + $0x91] sm:$0xff]
      %v496 = vld [vmem:[#allocation2 + $0x99] sm:$0xff]
      %v497 = vld [vmem:[#allocation2 + $0xa9] sm:$0xff]
      %v498 = vld [vmem:[#allocation2 + $0xb1] sm:$0xff]
      %v499 = vld [vmem:[#allocation2 + $0xc1] sm:$0xff]
      %v500 = vld [vmem:[#allocation2 + $0xc9] sm:$0xff]
      %v501 = vld [vmem:[#allocation2 + $0xd9] sm:$0xff]
      %v502 = vld [vmem:[#allocation2 + $0xe1] sm:$0xff]
      %v503 = vld [vmem:[#allocation2 + $0xf1] sm:$0xff]
      %v504 = vld [vmem:[#allocation2 + $0xf9] sm:$0xff]
      %v505 = vld [vmem:[#allocation2 + $0x109] sm:$0xff]
      %v506 = vld [vmem:[#allocation2 + $0x111] sm:$0xff]
      %v507 = vld [vmem:[#allocation2 + $0x121] sm:$0xff]
      %v508 = vld [vmem:[#allocation2 + $0x129] sm:$0xff]
      %v509 = vld [vmem:[#allocation2 + $0x139] sm:$0xff]
      %v510 = vld [vmem:[#allocation2 + $0x141] sm:$0xff]
      %v511 = vld [vmem:[#allocation2 + $0x151] sm:$0xff]
      %v512 = vld [vmem:[#allocation2 + $0x159] sm:$0xff]
      %v513 = vld [vmem:[#allocation2 + $0x169] sm:$0xff]
      %v514 = vld [vmem:[#allocation2 + $0x171] sm:$0xff]
      %547 = vrot.lane.b32.xlu0 %v483, 4
      %v548 = vpop.permute.xlu0 %547
      %549 = vrot.lane.b32.xlu0 %v484, 4
      %v550 = vpop.permute.xlu0 %549
      %551 = vrot.lane.b32.xlu0 %v485, 4
      %v552 = vpop.permute.xlu0 %551
      %553 = vrot.lane.b32.xlu0 %v486, 4
      %v554 = vpop.permute.xlu0 %553
      %555 = vrot.lane.b32.xlu0 %v487, 4
      %v556 = vpop.permute.xlu0 %555
      %557 = vrot.lane.b32.xlu0 %v488, 4
      %v558 = vpop.permute.xlu0 %557
      %559 = vrot.lane.b32.xlu0 %v489, 4
      %v560 = vpop.permute.xlu0 %559
      %561 = vrot.lane.b32.xlu0 %v490, 4
      %v562 = vpop.permute.xlu0 %561
      %563 = vrot.lane.b32.xlu0 %v491, 4
      %v564 = vpop.permute.xlu0 %563
      %565 = vrot.lane.b32.xlu0 %v492, 4
      %v566 = vpop.permute.xlu0 %565
      %567 = vrot.lane.b32.xlu0 %v493, 4
      %v568 = vpop.permute.xlu0 %567
      %569 = vrot.lane.b32.xlu0 %v494, 4
      %v570 = vpop.permute.xlu0 %569
      %571 = vrot.lane.b32.xlu0 %v495, 4
      %v572 = vpop.permute.xlu0 %571
      %573 = vrot.lane.b32.xlu0 %v496, 4
      %v574 = vpop.permute.xlu0 %573
      %575 = vrot.lane.b32.xlu0 %v497, 4
      %v576 = vpop.permute.xlu0 %575
      %577 = vrot.lane.b32.xlu0 %v498, 4
      %v578 = vpop.permute.xlu0 %577
      %579 = vrot.lane.b32.xlu0 %v499, 4
      %v580 = vpop.permute.xlu0 %579
      %581 = vrot.lane.b32.xlu0 %v500, 4
      %v582 = vpop.permute.xlu0 %581
      %583 = vrot.lane.b32.xlu0 %v501, 4
      %v584 = vpop.permute.xlu0 %583
      %585 = vrot.lane.b32.xlu0 %v502, 4
      %v586 = vpop.permute.xlu0 %585
      %587 = vrot.lane.b32.xlu0 %v503, 4
      %v588 = vpop.permute.xlu0 %587
      %589 = vrot.lane.b32.xlu0 %v504, 4
      %v590 = vpop.permute.xlu0 %589
      %591 = vrot.lane.b32.xlu0 %v505, 4
      %v592 = vpop.permute.xlu0 %591
      %593 = vrot.lane.b32.xlu0 %v506, 4
      %v594 = vpop.permute.xlu0 %593
      %595 = vrot.lane.b32.xlu0 %v507, 4
      %v596 = vpop.permute.xlu0 %595
      %597 = vrot.lane.b32.xlu0 %v508, 4
      %v598 = vpop.permute.xlu0 %597
      %599 = vrot.lane.b32.xlu0 %v509, 4
      %v600 = vpop.permute.xlu0 %599
      %601 = vrot.lane.b32.xlu0 %v510, 4
      %v602 = vpop.permute.xlu0 %601
      %603 = vrot.lane.b32.xlu0 %v511, 4
      %v604 = vpop.permute.xlu0 %603
      %605 = vrot.lane.b32.xlu0 %v512, 4
      %v606 = vpop.permute.xlu0 %605
      %607 = vrot.lane.b32.xlu0 %v513, 4
      %v608 = vpop.permute.xlu0 %607
      %609 = vrot.lane.b32.xlu0 %v514, 4
      %v610 = vpop.permute.xlu0 %609
      %vm643 = vcmask 64544
      %644 = vst.msk [vmem:[#allocation3] sm:$0xff] %vm643, %v548
      %645 = vst.msk [vmem:[#allocation3 + $0x8] sm:$0xff] %vm643, %v550
      %646 = vst.msk [vmem:[#allocation3 + $0x10] sm:$0xff] %vm643, %v552
      %647 = vst.msk [vmem:[#allocation3 + $0x18] sm:$0xff] %vm643, %v554
      %648 = vst.msk [vmem:[#allocation3 + $0x20] sm:$0xff] %vm643, %v556
      %649 = vst.msk [vmem:[#allocation3 + $0x28] sm:$0xff] %vm643, %v558
      %650 = vst.msk [vmem:[#allocation3 + $0x30] sm:$0xff] %vm643, %v560
      %651 = vst.msk [vmem:[#allocation3 + $0x38] sm:$0xff] %vm643, %v562
      %652 = vst.msk [vmem:[#allocation3 + $0x40] sm:$0xff] %vm643, %v564
      %653 = vst.msk [vmem:[#allocation3 + $0x48] sm:$0xff] %vm643, %v566
      %654 = vst.msk [vmem:[#allocation3 + $0x50] sm:$0xff] %vm643, %v568
      %655 = vst.msk [vmem:[#allocation3 + $0x58] sm:$0xff] %vm643, %v570
      %656 = vst.msk [vmem:[#allocation3 + $0x60] sm:$0xff] %vm643, %v572
      %657 = vst.msk [vmem:[#allocation3 + $0x68] sm:$0xff] %vm643, %v574
      %658 = vst.msk [vmem:[#allocation3 + $0x70] sm:$0xff] %vm643, %v576
      %659 = vst.msk [vmem:[#allocation3 + $0x78] sm:$0xff] %vm643, %v578
      %660 = vst.msk [vmem:[#allocation3 + $0x80] sm:$0xff] %vm643, %v580
      %661 = vst.msk [vmem:[#allocation3 + $0x88] sm:$0xff] %vm643, %v582
      %662 = vst.msk [vmem:[#allocation3 + $0x90] sm:$0xff] %vm643, %v584
      %663 = vst.msk [vmem:[#allocation3 + $0x98] sm:$0xff] %vm643, %v586
      %664 = vst.msk [vmem:[#allocation3 + $0xa0] sm:$0xff] %vm643, %v588
      %665 = vst.msk [vmem:[#allocation3 + $0xa8] sm:$0xff] %vm643, %v590
      %666 = vst.msk [vmem:[#allocation3 + $0xb0] sm:$0xff] %vm643, %v592
      %667 = vst.msk [vmem:[#allocation3 + $0xb8] sm:$0xff] %vm643, %v594
      %668 = vst.msk [vmem:[#allocation3 + $0xc0] sm:$0xff] %vm643, %v596
      %669 = vst.msk [vmem:[#allocation3 + $0xc8] sm:$0xff] %vm643, %v598
      %670 = vst.msk [vmem:[#allocation3 + $0xd0] sm:$0xff] %vm643, %v600
      %671 = vst.msk [vmem:[#allocation3 + $0xd8] sm:$0xff] %vm643, %v602
      %672 = vst.msk [vmem:[#allocation3 + $0xe0] sm:$0xff] %vm643, %v604
      %673 = vst.msk [vmem:[#allocation3 + $0xe8] sm:$0xff] %vm643, %v606
      %674 = vst.msk [vmem:[#allocation3 + $0xf0] sm:$0xff] %vm643, %v608
      %675 = vst.msk [vmem:[#allocation3 + $0xf8] sm:$0xff] %vm643, %v610
      %v676 = vld [vmem:[#allocation2 + $0x2] sm:$0xff]
      %v677 = vld [vmem:[#allocation2 + $0xa] sm:$0xff]
      %v678 = vld [vmem:[#allocation2 + $0x1a] sm:$0xff]
      %v679 = vld [vmem:[#allocation2 + $0x22] sm:$0xff]
      %v680 = vld [vmem:[#allocation2 + $0x32] sm:$0xff]
      %v681 = vld [vmem:[#allocation2 + $0x3a] sm:$0xff]
      %v682 = vld [vmem:[#allocation2 + $0x4a] sm:$0xff]
      %v683 = vld [vmem:[#allocation2 + $0x52] sm:$0xff]
      %v684 = vld [vmem:[#allocation2 + $0x62] sm:$0xff]
      %v685 = vld [vmem:[#allocation2 + $0x6a] sm:$0xff]
      %v686 = vld [vmem:[#allocation2 + $0x7a] sm:$0xff]
      %v687 = vld [vmem:[#allocation2 + $0x82] sm:$0xff]
      %v688 = vld [vmem:[#allocation2 + $0x92] sm:$0xff]
      %v689 = vld [vmem:[#allocation2 + $0x9a] sm:$0xff]
      %v690 = vld [vmem:[#allocation2 + $0xaa] sm:$0xff]
      %v691 = vld [vmem:[#allocation2 + $0xb2] sm:$0xff]
      %v692 = vld [vmem:[#allocation2 + $0xc2] sm:$0xff]
      %v693 = vld [vmem:[#allocation2 + $0xca] sm:$0xff]
      %v694 = vld [vmem:[#allocation2 + $0xda] sm:$0xff]
      %v695 = vld [vmem:[#allocation2 + $0xe2] sm:$0xff]
      %v696 = vld [vmem:[#allocation2 + $0xf2] sm:$0xff]
      %v697 = vld [vmem:[#allocation2 + $0xfa] sm:$0xff]
      %v698 = vld [vmem:[#allocation2 + $0x10a] sm:$0xff]
      %v699 = vld [vmem:[#allocation2 + $0x112] sm:$0xff]
      %v700 = vld [vmem:[#allocation2 + $0x122] sm:$0xff]
      %v701 = vld [vmem:[#allocation2 + $0x12a] sm:$0xff]
      %v702 = vld [vmem:[#allocation2 + $0x13a] sm:$0xff]
      %v703 = vld [vmem:[#allocation2 + $0x142] sm:$0xff]
      %v704 = vld [vmem:[#allocation2 + $0x152] sm:$0xff]
      %v705 = vld [vmem:[#allocation2 + $0x15a] sm:$0xff]
      %v706 = vld [vmem:[#allocation2 + $0x16a] sm:$0xff]
      %v707 = vld [vmem:[#allocation2 + $0x172] sm:$0xff]
      %740 = vrot.lane.b32.xlu0 %v676, 8
      %v741 = vpop.permute.xlu0 %740
      %742 = vrot.lane.b32.xlu0 %v677, 8
      %v743 = vpop.permute.xlu0 %742
      %744 = vrot.lane.b32.xlu0 %v678, 8
      %v745 = vpop.permute.xlu0 %744
      %746 = vrot.lane.b32.xlu0 %v679, 8
      %v747 = vpop.permute.xlu0 %746
      %748 = vrot.lane.b32.xlu0 %v680, 8
      %v749 = vpop.permute.xlu0 %748
      %750 = vrot.lane.b32.xlu0 %v681, 8
      %v751 = vpop.permute.xlu0 %750
      %752 = vrot.lane.b32.xlu0 %v682, 8
      %v753 = vpop.permute.xlu0 %752
      %754 = vrot.lane.b32.xlu0 %v683, 8
      %v755 = vpop.permute.xlu0 %754
      %756 = vrot.lane.b32.xlu0 %v684, 8
      %v757 = vpop.permute.xlu0 %756
      %758 = vrot.lane.b32.xlu0 %v685, 8
      %v759 = vpop.permute.xlu0 %758
      %760 = vrot.lane.b32.xlu0 %v686, 8
      %v761 = vpop.permute.xlu0 %760
      %762 = vrot.lane.b32.xlu0 %v687, 8
      %v763 = vpop.permute.xlu0 %762
      %764 = vrot.lane.b32.xlu0 %v688, 8
      %v765 = vpop.permute.xlu0 %764
      %766 = vrot.lane.b32.xlu0 %v689, 8
      %v767 = vpop.permute.xlu0 %766
      %768 = vrot.lane.b32.xlu0 %v690, 8
      %v769 = vpop.permute.xlu0 %768
      %770 = vrot.lane.b32.xlu0 %v691, 8
      %v771 = vpop.permute.xlu0 %770
      %772 = vrot.lane.b32.xlu0 %v692, 8
      %v773 = vpop.permute.xlu0 %772
      %774 = vrot.lane.b32.xlu0 %v693, 8
      %v775 = vpop.permute.xlu0 %774
      %776 = vrot.lane.b32.xlu0 %v694, 8
      %v777 = vpop.permute.xlu0 %776
      %778 = vrot.lane.b32.xlu0 %v695, 8
      %v779 = vpop.permute.xlu0 %778
      %780 = vrot.lane.b32.xlu0 %v696, 8
      %v781 = vpop.permute.xlu0 %780
      %782 = vrot.lane.b32.xlu0 %v697, 8
      %v783 = vpop.permute.xlu0 %782
      %784 = vrot.lane.b32.xlu0 %v698, 8
      %v785 = vpop.permute.xlu0 %784
      %786 = vrot.lane.b32.xlu0 %v699, 8
      %v787 = vpop.permute.xlu0 %786
      %788 = vrot.lane.b32.xlu0 %v700, 8
      %v789 = vpop.permute.xlu0 %788
      %790 = vrot.lane.b32.xlu0 %v701, 8
      %v791 = vpop.permute.xlu0 %790
      %792 = vrot.lane.b32.xlu0 %v702, 8
      %v793 = vpop.permute.xlu0 %792
      %794 = vrot.lane.b32.xlu0 %v703, 8
      %v795 = vpop.permute.xlu0 %794
      %796 = vrot.lane.b32.xlu0 %v704, 8
      %v797 = vpop.permute.xlu0 %796
      %798 = vrot.lane.b32.xlu0 %v705, 8
      %v799 = vpop.permute.xlu0 %798
      %800 = vrot.lane.b32.xlu0 %v706, 8
      %v801 = vpop.permute.xlu0 %800
      %802 = vrot.lane.b32.xlu0 %v707, 8
      %v803 = vpop.permute.xlu0 %802
      %vm836 = vcmask 97344
      %837 = vst.msk [vmem:[#allocation3] sm:$0xff] %vm836, %v741
      %838 = vst.msk [vmem:[#allocation3 + $0x8] sm:$0xff] %vm836, %v743
      %839 = vst.msk [vmem:[#allocation3 + $0x10] sm:$0xff] %vm836, %v745
      %840 = vst.msk [vmem:[#allocation3 + $0x18] sm:$0xff] %vm836, %v747
      %841 = vst.msk [vmem:[#allocation3 + $0x20] sm:$0xff] %vm836, %v749
      %842 = vst.msk [vmem:[#allocation3 + $0x28] sm:$0xff] %vm836, %v751
      %843 = vst.msk [vmem:[#allocation3 + $0x30] sm:$0xff] %vm836, %v753
      %844 = vst.msk [vmem:[#allocation3 + $0x38] sm:$0xff] %vm836, %v755
      %845 = vst.msk [vmem:[#allocation3 + $0x40] sm:$0xff] %vm836, %v757
      %846 = vst.msk [vmem:[#allocation3 + $0x48] sm:$0xff] %vm836, %v759
      %847 = vst.msk [vmem:[#allocation3 + $0x50] sm:$0xff] %vm836, %v761
      %848 = vst.msk [vmem:[#allocation3 + $0x58] sm:$0xff] %vm836, %v763
      %849 = vst.msk [vmem:[#allocation3 + $0x60] sm:$0xff] %vm836, %v765
      %850 = vst.msk [vmem:[#allocation3 + $0x68] sm:$0xff] %vm836, %v767
      %851 = vst.msk [vmem:[#allocation3 + $0x70] sm:$0xff] %vm836, %v769
      %852 = vst.msk [vmem:[#allocation3 + $0x78] sm:$0xff] %vm836, %v771
      %853 = vst.msk [vmem:[#allocation3 + $0x80] sm:$0xff] %vm836, %v773
      %854 = vst.msk [vmem:[#allocation3 + $0x88] sm:$0xff] %vm836, %v775
      %855 = vst.msk [vmem:[#allocation3 + $0x90] sm:$0xff] %vm836, %v777
      %856 = vst.msk [vmem:[#allocation3 + $0x98] sm:$0xff] %vm836, %v779
      %857 = vst.msk [vmem:[#allocation3 + $0xa0] sm:$0xff] %vm836, %v781
      %858 = vst.msk [vmem:[#allocation3 + $0xa8] sm:$0xff] %vm836, %v783
      %859 = vst.msk [vmem:[#allocation3 + $0xb0] sm:$0xff] %vm836, %v785
      %860 = vst.msk [vmem:[#allocation3 + $0xb8] sm:$0xff] %vm836, %v787
      %861 = vst.msk [vmem:[#allocation3 + $0xc0] sm:$0xff] %vm836, %v789
      %862 = vst.msk [vmem:[#allocation3 + $0xc8] sm:$0xff] %vm836, %v791
      %863 = vst.msk [vmem:[#allocation3 + $0xd0] sm:$0xff] %vm836, %v793
      %864 = vst.msk [vmem:[#allocation3 + $0xd8] sm:$0xff] %vm836, %v795
      %865 = vst.msk [vmem:[#allocation3 + $0xe0] sm:$0xff] %vm836, %v797
      %866 = vst.msk [vmem:[#allocation3 + $0xe8] sm:$0xff] %vm836, %v799
      %867 = vst.msk [vmem:[#allocation3 + $0xf0] sm:$0xff] %vm836, %v801
      %868 = vst.msk [vmem:[#allocation3 + $0xf8] sm:$0xff] %vm836, %v803
      %v869 = vld [vmem:[%s386] sm:$0xff]
      %v870 = vld [vmem:[%s386 + $0x8] sm:$0xff]
      %v871 = vld [vmem:[%s386 + $0x18] sm:$0xff]
      %v872 = vld [vmem:[%s386 + $0x20] sm:$0xff]
      %v873 = vld [vmem:[%s386 + $0x30] sm:$0xff]
      %v874 = vld [vmem:[%s386 + $0x38] sm:$0xff]
      %v875 = vld [vmem:[%s386 + $0x48] sm:$0xff]
      %v876 = vld [vmem:[%s386 + $0x50] sm:$0xff]
      %v877 = vld [vmem:[%s386 + $0x60] sm:$0xff]
      %v878 = vld [vmem:[%s386 + $0x68] sm:$0xff]
      %v879 = vld [vmem:[%s386 + $0x78] sm:$0xff]
      %v880 = vld [vmem:[%s386 + $0x80] sm:$0xff]
      %v881 = vld [vmem:[%s386 + $0x90] sm:$0xff]
      %v882 = vld [vmem:[%s386 + $0x98] sm:$0xff]
      %v883 = vld [vmem:[%s386 + $0xa8] sm:$0xff]
      %v884 = vld [vmem:[%s386 + $0xb0] sm:$0xff]
      %v885 = vld [vmem:[%s386 + $0xc0] sm:$0xff]
      %v886 = vld [vmem:[%s386 + $0xc8] sm:$0xff]
      %v887 = vld [vmem:[%s386 + $0xd8] sm:$0xff]
      %v888 = vld [vmem:[%s386 + $0xe0] sm:$0xff]
      %v889 = vld [vmem:[%s386 + $0xf0] sm:$0xff]
      %v890 = vld [vmem:[%s386 + $0xf8] sm:$0xff]
      %v891 = vld [vmem:[%s386 + $0x108] sm:$0xff]
      %v892 = vld [vmem:[%s386 + $0x110] sm:$0xff]
      %v893 = vld [vmem:[%s386 + $0x120] sm:$0xff]
      %v894 = vld [vmem:[%s386 + $0x128] sm:$0xff]
      %v895 = vld [vmem:[%s386 + $0x138] sm:$0xff]
      %v896 = vld [vmem:[%s386 + $0x140] sm:$0xff]
      %v897 = vld [vmem:[%s386 + $0x150] sm:$0xff]
      %v898 = vld [vmem:[%s386 + $0x158] sm:$0xff]
      %v899 = vld [vmem:[%s386 + $0x168] sm:$0xff]
      %v900 = vld [vmem:[%s386 + $0x170] sm:$0xff]
      %933 = vrot.lane.b32.xlu0 %v869, 12
      %v934 = vpop.permute.xlu0 %933
      %935 = vrot.lane.b32.xlu0 %v870, 12
      %v936 = vpop.permute.xlu0 %935
      %937 = vrot.lane.b32.xlu0 %v871, 12
      %v938 = vpop.permute.xlu0 %937
      %939 = vrot.lane.b32.xlu0 %v872, 12
      %v940 = vpop.permute.xlu0 %939
      %941 = vrot.lane.b32.xlu0 %v873, 12
      %v942 = vpop.permute.xlu0 %941
      %943 = vrot.lane.b32.xlu0 %v874, 12
      %v944 = vpop.permute.xlu0 %943
      %945 = vrot.lane.b32.xlu0 %v875, 12
      %v946 = vpop.permute.xlu0 %945
      %947 = vrot.lane.b32.xlu0 %v876, 12
      %v948 = vpop.permute.xlu0 %947
      %949 = vrot.lane.b32.xlu0 %v877, 12
      %v950 = vpop.permute.xlu0 %949
      %951 = vrot.lane.b32.xlu0 %v878, 12
      %v952 = vpop.permute.xlu0 %951
      %953 = vrot.lane.b32.xlu0 %v879, 12
      %v954 = vpop.permute.xlu0 %953
      %955 = vrot.lane.b32.xlu0 %v880, 12
      %v956 = vpop.permute.xlu0 %955
      %957 = vrot.lane.b32.xlu0 %v881, 12
      %v958 = vpop.permute.xlu0 %957
      %959 = vrot.lane.b32.xlu0 %v882, 12
      %v960 = vpop.permute.xlu0 %959
      %961 = vrot.lane.b32.xlu0 %v883, 12
      %v962 = vpop.permute.xlu0 %961
      %963 = vrot.lane.b32.xlu0 %v884, 12
      %v964 = vpop.permute.xlu0 %963
      %965 = vrot.lane.b32.xlu0 %v885, 12
      %v966 = vpop.permute.xlu0 %965
      %967 = vrot.lane.b32.xlu0 %v886, 12
      %v968 = vpop.permute.xlu0 %967
      %969 = vrot.lane.b32.xlu0 %v887, 12
      %v970 = vpop.permute.xlu0 %969
      %971 = vrot.lane.b32.xlu0 %v888, 12
      %v972 = vpop.permute.xlu0 %971
      %973 = vrot.lane.b32.xlu0 %v889, 12
      %v974 = vpop.permute.xlu0 %973
      %975 = vrot.lane.b32.xlu0 %v890, 12
      %v976 = vpop.permute.xlu0 %975
      %977 = vrot.lane.b32.xlu0 %v891, 12
      %v978 = vpop.permute.xlu0 %977
      %979 = vrot.lane.b32.xlu0 %v892, 12
      %v980 = vpop.permute.xlu0 %979
      %981 = vrot.lane.b32.xlu0 %v893, 12
      %v982 = vpop.permute.xlu0 %981
      %983 = vrot.lane.b32.xlu0 %v894, 12
      %v984 = vpop.permute.xlu0 %983
      %985 = vrot.lane.b32.xlu0 %v895, 12
      %v986 = vpop.permute.xlu0 %985
      %987 = vrot.lane.b32.xlu0 %v896, 12
      %v988 = vpop.permute.xlu0 %987
      %989 = vrot.lane.b32.xlu0 %v897, 12
      %v990 = vpop.permute.xlu0 %989
      %991 = vrot.lane.b32.xlu0 %v898, 12
      %v992 = vpop.permute.xlu0 %991
      %993 = vrot.lane.b32.xlu0 %v899, 12
      %v994 = vpop.permute.xlu0 %993
      %995 = vrot.lane.b32.xlu0 %v900, 12
      %v996 = vpop.permute.xlu0 %995
      %vm1029 = vcmask 130144
      %1030 = vst.msk [vmem:[#allocation3] sm:$0xff] %vm1029, %v934
      %1031 = vst.msk [vmem:[#allocation3 + $0x8] sm:$0xff] %vm1029, %v936
      %1032 = vst.msk [vmem:[#allocation3 + $0x10] sm:$0xff] %vm1029, %v938
      %1033 = vst.msk [vmem:[#allocation3 + $0x18] sm:$0xff] %vm1029, %v940
      %1034 = vst.msk [vmem:[#allocation3 + $0x20] sm:$0xff] %vm1029, %v942
      %1035 = vst.msk [vmem:[#allocation3 + $0x28] sm:$0xff] %vm1029, %v944
      %1036 = vst.msk [vmem:[#allocation3 + $0x30] sm:$0xff] %vm1029, %v946
      %1037 = vst.msk [vmem:[#allocation3 + $0x38] sm:$0xff] %vm1029, %v948
      %1038 = vst.msk [vmem:[#allocation3 + $0x40] sm:$0xff] %vm1029, %v950
      %1039 = vst.msk [vmem:[#allocation3 + $0x48] sm:$0xff] %vm1029, %v952
      %1040 = vst.msk [vmem:[#allocation3 + $0x50] sm:$0xff] %vm1029, %v954
      %1041 = vst.msk [vmem:[#allocation3 + $0x58] sm:$0xff] %vm1029, %v956
      %1042 = vst.msk [vmem:[#allocation3 + $0x60] sm:$0xff] %vm1029, %v958
      %1043 = vst.msk [vmem:[#allocation3 + $0x68] sm:$0xff] %vm1029, %v960
      %1044 = vst.msk [vmem:[#allocation3 + $0x70] sm:$0xff] %vm1029, %v962
      %1045 = vst.msk [vmem:[#allocation3 + $0x78] sm:$0xff] %vm1029, %v964
      %1046 = vst.msk [vmem:[#allocation3 + $0x80] sm:$0xff] %vm1029, %v966
      %1047 = vst.msk [vmem:[#allocation3 + $0x88] sm:$0xff] %vm1029, %v968
      %1048 = vst.msk [vmem:[#allocation3 + $0x90] sm:$0xff] %vm1029, %v970
      %1049 = vst.msk [vmem:[#allocation3 + $0x98] sm:$0xff] %vm1029, %v972
      %1050 = vst.msk [vmem:[#allocation3 + $0xa0] sm:$0xff] %vm1029, %v974
      %1051 = vst.msk [vmem:[#allocation3 + $0xa8] sm:$0xff] %vm1029, %v976
      %1052 = vst.msk [vmem:[#allocation3 + $0xb0] sm:$0xff] %vm1029, %v978
      %1053 = vst.msk [vmem:[#allocation3 + $0xb8] sm:$0xff] %vm1029, %v980
      %1054 = vst.msk [vmem:[#allocation3 + $0xc0] sm:$0xff] %vm1029, %v982
      %1055 = vst.msk [vmem:[#allocation3 + $0xc8] sm:$0xff] %vm1029, %v984
      %1056 = vst.msk [vmem:[#allocation3 + $0xd0] sm:$0xff] %vm1029, %v986
      %1057 = vst.msk [vmem:[#allocation3 + $0xd8] sm:$0xff] %vm1029, %v988
      %1058 = vst.msk [vmem:[#allocation3 + $0xe0] sm:$0xff] %vm1029, %v990
      %1059 = vst.msk [vmem:[#allocation3 + $0xe8] sm:$0xff] %vm1029, %v992
      %1060 = vst.msk [vmem:[#allocation3 + $0xf0] sm:$0xff] %vm1029, %v994
      %1061 = vst.msk [vmem:[#allocation3 + $0xf8] sm:$0xff] %vm1029, %v996
      %v1062 = vld [vmem:[%s386 + $0x1] sm:$0xff]
      %v1063 = vld [vmem:[%s386 + $0x9] sm:$0xff]
      %v1064 = vld [vmem:[%s386 + $0x19] sm:$0xff]
      %v1065 = vld [vmem:[%s386 + $0x21] sm:$0xff]
      %v1066 = vld [vmem:[%s386 + $0x31] sm:$0xff]
      %v1067 = vld [vmem:[%s386 + $0x39] sm:$0xff]
      %v1068 = vld [vmem:[%s386 + $0x49] sm:$0xff]
      %v1069 = vld [vmem:[%s386 + $0x51] sm:$0xff]
      %v1070 = vld [vmem:[%s386 + $0x61] sm:$0xff]
      %v1071 = vld [vmem:[%s386 + $0x69] sm:$0xff]
      %v1072 = vld [vmem:[%s386 + $0x79] sm:$0xff]
      %v1073 = vld [vmem:[%s386 + $0x81] sm:$0xff]
      %v1074 = vld [vmem:[%s386 + $0x91] sm:$0xff]
      %v1075 = vld [vmem:[%s386 + $0x99] sm:$0xff]
      %v1076 = vld [vmem:[%s386 + $0xa9] sm:$0xff]
      %v1077 = vld [vmem:[%s386 + $0xb1] sm:$0xff]
      %v1078 = vld [vmem:[%s386 + $0xc1] sm:$0xff]
      %v1079 = vld [vmem:[%s386 + $0xc9] sm:$0xff]
      %v1080 = vld [vmem:[%s386 + $0xd9] sm:$0xff]
      %v1081 = vld [vmem:[%s386 + $0xe1] sm:$0xff]
      %v1082 = vld [vmem:[%s386 + $0xf1] sm:$0xff]
      %v1083 = vld [vmem:[%s386 + $0xf9] sm:$0xff]
      %v1084 = vld [vmem:[%s386 + $0x109] sm:$0xff]
      %v1085 = vld [vmem:[%s386 + $0x111] sm:$0xff]
      %v1086 = vld [vmem:[%s386 + $0x121] sm:$0xff]
      %v1087 = vld [vmem:[%s386 + $0x129] sm:$0xff]
      %v1088 = vld [vmem:[%s386 + $0x139] sm:$0xff]
      %v1089 = vld [vmem:[%s386 + $0x141] sm:$0xff]
      %v1090 = vld [vmem:[%s386 + $0x151] sm:$0xff]
      %v1091 = vld [vmem:[%s386 + $0x159] sm:$0xff]
      %v1092 = vld [vmem:[%s386 + $0x169] sm:$0xff]
      %v1093 = vld [vmem:[%s386 + $0x171] sm:$0xff]
      %1126 = vrot.lane.b32.xlu0 %v1062, 16
      %v1127 = vpop.permute.xlu0 %1126
      %1128 = vrot.lane.b32.xlu0 %v1063, 16
      %v1129 = vpop.permute.xlu0 %1128
      %1130 = vrot.lane.b32.xlu0 %v1064, 16
      %v1131 = vpop.permute.xlu0 %1130
      %1132 = vrot.lane.b32.xlu0 %v1065, 16
      %v1133 = vpop.permute.xlu0 %1132
      %1134 = vrot.lane.b32.xlu0 %v1066, 16
      %v1135 = vpop.permute.xlu0 %1134
      %1136 = vrot.lane.b32.xlu0 %v1067, 16
      %v1137 = vpop.permute.xlu0 %1136
      %1138 = vrot.lane.b32.xlu0 %v1068, 16
      %v1139 = vpop.permute.xlu0 %1138
      %1140 = vrot.lane.b32.xlu0 %v1069, 16
      %v1141 = vpop.permute.xlu0 %1140
      %1142 = vrot.lane.b32.xlu0 %v1070, 16
      %v1143 = vpop.permute.xlu0 %1142
      %1144 = vrot.lane.b32.xlu0 %v1071, 16
      %v1145 = vpop.permute.xlu0 %1144
      %1146 = vrot.lane.b32.xlu0 %v1072, 16
      %v1147 = vpop.permute.xlu0 %1146
      %1148 = vrot.lane.b32.xlu0 %v1073, 16
      %v1149 = vpop.permute.xlu0 %1148
      %1150 = vrot.lane.b32.xlu0 %v1074, 16
      %v1151 = vpop.permute.xlu0 %1150
      %1152 = vrot.lane.b32.xlu0 %v1075, 16
      %v1153 = vpop.permute.xlu0 %1152
      %1154 = vrot.lane.b32.xlu0 %v1076, 16
      %v1155 = vpop.permute.xlu0 %1154
      %1156 = vrot.lane.b32.xlu0 %v1077, 16
      %v1157 = vpop.permute.xlu0 %1156
      %1158 = vrot.lane.b32.xlu0 %v1078, 16
      %v1159 = vpop.permute.xlu0 %1158
      %1160 = vrot.lane.b32.xlu0 %v1079, 16
      %v1161 = vpop.permute.xlu0 %1160
      %1162 = vrot.lane.b32.xlu0 %v1080, 16
      %v1163 = vpop.permute.xlu0 %1162
      %1164 = vrot.lane.b32.xlu0 %v1081, 16
      %v1165 = vpop.permute.xlu0 %1164
      %1166 = vrot.lane.b32.xlu0 %v1082, 16
      %v1167 = vpop.permute.xlu0 %1166
      %1168 = vrot.lane.b32.xlu0 %v1083, 16
      %v1169 = vpop.permute.xlu0 %1168
      %1170 = vrot.lane.b32.xlu0 %v1084, 16
      %v1171 = vpop.permute.xlu0 %1170
      %1172 = vrot.lane.b32.xlu0 %v1085, 16
      %v1173 = vpop.permute.xlu0 %1172
      %1174 = vrot.lane.b32.xlu0 %v1086, 16
      %v1175 = vpop.permute.xlu0 %1174
      %1176 = vrot.lane.b32.xlu0 %v1087, 16
      %v1177 = vpop.permute.xlu0 %1176
      %1178 = vrot.lane.b32.xlu0 %v1088, 16
      %v1179 = vpop.permute.xlu0 %1178
      %1180 = vrot.lane.b32.xlu0 %v1089, 16
      %v1181 = vpop.permute.xlu0 %1180
      %1182 = vrot.lane.b32.xlu0 %v1090, 16
      %v1183 = vpop.permute.xlu0 %1182
      %1184 = vrot.lane.b32.xlu0 %v1091, 16
      %v1185 = vpop.permute.xlu0 %1184
      %1186 = vrot.lane.b32.xlu0 %v1092, 16
      %v1187 = vpop.permute.xlu0 %1186
      %1188 = vrot.lane.b32.xlu0 %v1093, 16
      %v1189 = vpop.permute.xlu0 %1188
      %vm1222 = vcmask 162944
      %1223 = vst.msk [vmem:[#allocation3] sm:$0xff] %vm1222, %v1127
      %1224 = vst.msk [vmem:[#allocation3 + $0x8] sm:$0xff] %vm1222, %v1129
      %1225 = vst.msk [vmem:[#allocation3 + $0x10] sm:$0xff] %vm1222, %v1131
      %1226 = vst.msk [vmem:[#allocation3 + $0x18] sm:$0xff] %vm1222, %v1133
      %1227 = vst.msk [vmem:[#allocation3 + $0x20] sm:$0xff] %vm1222, %v1135
      %1228 = vst.msk [vmem:[#allocation3 + $0x28] sm:$0xff] %vm1222, %v1137
      %1229 = vst.msk [vmem:[#allocation3 + $0x30] sm:$0xff] %vm1222, %v1139
      %1230 = vst.msk [vmem:[#allocation3 + $0x38] sm:$0xff] %vm1222, %v1141
      %1231 = vst.msk [vmem:[#allocation3 + $0x40] sm:$0xff] %vm1222, %v1143
      %1232 = vst.msk [vmem:[#allocation3 + $0x48] sm:$0xff] %vm1222, %v1145
      %1233 = vst.msk [vmem:[#allocation3 + $0x50] sm:$0xff] %vm1222, %v1147
      %1234 = vst.msk [vmem:[#allocation3 + $0x58] sm:$0xff] %vm1222, %v1149
      %1235 = vst.msk [vmem:[#allocation3 + $0x60] sm:$0xff] %vm1222, %v1151
      %1236 = vst.msk [vmem:[#allocation3 + $0x68] sm:$0xff] %vm1222, %v1153
      %1237 = vst.msk [vmem:[#allocation3 + $0x70] sm:$0xff] %vm1222, %v1155
      %1238 = vst.msk [vmem:[#allocation3 + $0x78] sm:$0xff] %vm1222, %v1157
      %1239 = vst.msk [vmem:[#allocation3 + $0x80] sm:$0xff] %vm1222, %v1159
      %1240 = vst.msk [vmem:[#allocation3 + $0x88] sm:$0xff] %vm1222, %v1161
      %1241 = vst.msk [vmem:[#allocation3 + $0x90] sm:$0xff] %vm1222, %v1163
      %1242 = vst.msk [vmem:[#allocation3 + $0x98] sm:$0xff] %vm1222, %v1165
      %1243 = vst.msk [vmem:[#allocation3 + $0xa0] sm:$0xff] %vm1222, %v1167
      %1244 = vst.msk [vmem:[#allocation3 + $0xa8] sm:$0xff] %vm1222, %v1169
      %1245 = vst.msk [vmem:[#allocation3 + $0xb0] sm:$0xff] %vm1222, %v1171
      %1246 = vst.msk [vmem:[#allocation3 + $0xb8] sm:$0xff] %vm1222, %v1173
      %1247 = vst.msk [vmem:[#allocation3 + $0xc0] sm:$0xff] %vm1222, %v1175
      %1248 = vst.msk [vmem:[#allocation3 + $0xc8] sm:$0xff] %vm1222, %v1177
      %1249 = vst.msk [vmem:[#allocation3 + $0xd0] sm:$0xff] %vm1222, %v1179
      %1250 = vst.msk [vmem:[#allocation3 + $0xd8] sm:$0xff] %vm1222, %v1181
      %1251 = vst.msk [vmem:[#allocation3 + $0xe0] sm:$0xff] %vm1222, %v1183
      %1252 = vst.msk [vmem:[#allocation3 + $0xe8] sm:$0xff] %vm1222, %v1185
      %1253 = vst.msk [vmem:[#allocation3 + $0xf0] sm:$0xff] %vm1222, %v1187
      %1254 = vst.msk [vmem:[#allocation3 + $0xf8] sm:$0xff] %vm1222, %v1189
      %v1255 = vld [vmem:[%s386 + $0x2] sm:$0xff]
      %v1256 = vld [vmem:[%s386 + $0xa] sm:$0xff]
      %v1257 = vld [vmem:[%s386 + $0x1a] sm:$0xff]
      %v1258 = vld [vmem:[%s386 + $0x22] sm:$0xff]
      %v1259 = vld [vmem:[%s386 + $0x32] sm:$0xff]
      %v1260 = vld [vmem:[%s386 + $0x3a] sm:$0xff]
      %v1261 = vld [vmem:[%s386 + $0x4a] sm:$0xff]
      %v1262 = vld [vmem:[%s386 + $0x52] sm:$0xff]
      %v1263 = vld [vmem:[%s386 + $0x62] sm:$0xff]
      %v1264 = vld [vmem:[%s386 + $0x6a] sm:$0xff]
      %v1265 = vld [vmem:[%s386 + $0x7a] sm:$0xff]
      %v1266 = vld [vmem:[%s386 + $0x82] sm:$0xff]
      %v1267 = vld [vmem:[%s386 + $0x92] sm:$0xff]
      %v1268 = vld [vmem:[%s386 + $0x9a] sm:$0xff]
      %v1269 = vld [vmem:[%s386 + $0xaa] sm:$0xff]
      %v1270 = vld [vmem:[%s386 + $0xb2] sm:$0xff]
      %v1271 = vld [vmem:[%s386 + $0xc2] sm:$0xff]
      %v1272 = vld [vmem:[%s386 + $0xca] sm:$0xff]
      %v1273 = vld [vmem:[%s386 + $0xda] sm:$0xff]
      %v1274 = vld [vmem:[%s386 + $0xe2] sm:$0xff]
      %v1275 = vld [vmem:[%s386 + $0xf2] sm:$0xff]
      %v1276 = vld [vmem:[%s386 + $0xfa] sm:$0xff]
      %v1277 = vld [vmem:[%s386 + $0x10a] sm:$0xff]
      %v1278 = vld [vmem:[%s386 + $0x112] sm:$0xff]
      %v1279 = vld [vmem:[%s386 + $0x122] sm:$0xff]
      %v1280 = vld [vmem:[%s386 + $0x12a] sm:$0xff]
      %v1281 = vld [vmem:[%s386 + $0x13a] sm:$0xff]
      %v1282 = vld [vmem:[%s386 + $0x142] sm:$0xff]
      %v1283 = vld [vmem:[%s386 + $0x152] sm:$0xff]
      %v1284 = vld [vmem:[%s386 + $0x15a] sm:$0xff]
      %v1285 = vld [vmem:[%s386 + $0x16a] sm:$0xff]
      %v1286 = vld [vmem:[%s386 + $0x172] sm:$0xff]
      %1319 = vrot.lane.b32.xlu0 %v1255, 20
      %v1320 = vpop.permute.xlu0 %1319
      %1321 = vrot.lane.b32.xlu0 %v1256, 20
      %v1322 = vpop.permute.xlu0 %1321
      %1323 = vrot.lane.b32.xlu0 %v1257, 20
      %v1324 = vpop.permute.xlu0 %1323
      %1325 = vrot.lane.b32.xlu0 %v1258, 20
      %v1326 = vpop.permute.xlu0 %1325
      %1327 = vrot.lane.b32.xlu0 %v1259, 20
      %v1328 = vpop.permute.xlu0 %1327
      %1329 = vrot.lane.b32.xlu0 %v1260, 20
      %v1330 = vpop.permute.xlu0 %1329
      %1331 = vrot.lane.b32.xlu0 %v1261, 20
      %v1332 = vpop.permute.xlu0 %1331
      %1333 = vrot.lane.b32.xlu0 %v1262, 20
      %v1334 = vpop.permute.xlu0 %1333
      %1335 = vrot.lane.b32.xlu0 %v1263, 20
      %v1336 = vpop.permute.xlu0 %1335
      %1337 = vrot.lane.b32.xlu0 %v1264, 20
      %v1338 = vpop.permute.xlu0 %1337
      %1339 = vrot.lane.b32.xlu0 %v1265, 20
      %v1340 = vpop.permute.xlu0 %1339
      %1341 = vrot.lane.b32.xlu0 %v1266, 20
      %v1342 = vpop.permute.xlu0 %1341
      %1343 = vrot.lane.b32.xlu0 %v1267, 20
      %v1344 = vpop.permute.xlu0 %1343
      %1345 = vrot.lane.b32.xlu0 %v1268, 20
      %v1346 = vpop.permute.xlu0 %1345
      %1347 = vrot.lane.b32.xlu0 %v1269, 20
      %v1348 = vpop.permute.xlu0 %1347
      %1349 = vrot.lane.b32.xlu0 %v1270, 20
      %v1350 = vpop.permute.xlu0 %1349
      %1351 = vrot.lane.b32.xlu0 %v1271, 20
      %v1352 = vpop.permute.xlu0 %1351
      %1353 = vrot.lane.b32.xlu0 %v1272, 20
      %v1354 = vpop.permute.xlu0 %1353
      %1355 = vrot.lane.b32.xlu0 %v1273, 20
      %v1356 = vpop.permute.xlu0 %1355
      %1357 = vrot.lane.b32.xlu0 %v1274, 20
      %v1358 = vpop.permute.xlu0 %1357
      %1359 = vrot.lane.b32.xlu0 %v1275, 20
      %v1360 = vpop.permute.xlu0 %1359
      %1361 = vrot.lane.b32.xlu0 %v1276, 20
      %v1362 = vpop.permute.xlu0 %1361
      %1363 = vrot.lane.b32.xlu0 %v1277, 20
      %v1364 = vpop.permute.xlu0 %1363
      %1365 = vrot.lane.b32.xlu0 %v1278, 20
      %v1366 = vpop.permute.xlu0 %1365
      %1367 = vrot.lane.b32.xlu0 %v1279, 20
      %v1368 = vpop.permute.xlu0 %1367
      %1369 = vrot.lane.b32.xlu0 %v1280, 20
      %v1370 = vpop.permute.xlu0 %1369
      %1371 = vrot.lane.b32.xlu0 %v1281, 20
      %v1372 = vpop.permute.xlu0 %1371
      %1373 = vrot.lane.b32.xlu0 %v1282, 20
      %v1374 = vpop.permute.xlu0 %1373
      %1375 = vrot.lane.b32.xlu0 %v1283, 20
      %v1376 = vpop.permute.xlu0 %1375
      %1377 = vrot.lane.b32.xlu0 %v1284, 20
      %v1378 = vpop.permute.xlu0 %1377
      %1379 = vrot.lane.b32.xlu0 %v1285, 20
      %v1380 = vpop.permute.xlu0 %1379
      %1381 = vrot.lane.b32.xlu0 %v1286, 20
      %v1382 = vpop.permute.xlu0 %1381
      %vm1415 = vcmask 195744
      %1416 = vst.msk [vmem:[#allocation3] sm:$0xff] %vm1415, %v1320
      %1417 = vst.msk [vmem:[#allocation3 + $0x8] sm:$0xff] %vm1415, %v1322
      %1418 = vst.msk [vmem:[#allocation3 + $0x10] sm:$0xff] %vm1415, %v1324
      %1419 = vst.msk [vmem:[#allocation3 + $0x18] sm:$0xff] %vm1415, %v1326
      %1420 = vst.msk [vmem:[#allocation3 + $0x20] sm:$0xff] %vm1415, %v1328
      %1421 = vst.msk [vmem:[#allocation3 + $0x28] sm:$0xff] %vm1415, %v1330
      %1422 = vst.msk [vmem:[#allocation3 + $0x30] sm:$0xff] %vm1415, %v1332
      %1423 = vst.msk [vmem:[#allocation3 + $0x38] sm:$0xff] %vm1415, %v1334
      %1424 = vst.msk [vmem:[#allocation3 + $0x40] sm:$0xff] %vm1415, %v1336
      %1425 = vst.msk [vmem:[#allocation3 + $0x48] sm:$0xff] %vm1415, %v1338
      %1426 = vst.msk [vmem:[#allocation3 + $0x50] sm:$0xff] %vm1415, %v1340
      %1427 = vst.msk [vmem:[#allocation3 + $0x58] sm:$0xff] %vm1415, %v1342
      %1428 = vst.msk [vmem:[#allocation3 + $0x60] sm:$0xff] %vm1415, %v1344
      %1429 = vst.msk [vmem:[#allocation3 + $0x68] sm:$0xff] %vm1415, %v1346
      %1430 = vst.msk [vmem:[#allocation3 + $0x70] sm:$0xff] %vm1415, %v1348
      %1431 = vst.msk [vmem:[#allocation3 + $0x78] sm:$0xff] %vm1415, %v1350
      %1432 = vst.msk [vmem:[#allocation3 + $0x80] sm:$0xff] %vm1415, %v1352
      %1433 = vst.msk [vmem:[#allocation3 + $0x88] sm:$0xff] %vm1415, %v1354
      %1434 = vst.msk [vmem:[#allocation3 + $0x90] sm:$0xff] %vm1415, %v1356
      %1435 = vst.msk [vmem:[#allocation3 + $0x98] sm:$0xff] %vm1415, %v1358
      %1436 = vst.msk [vmem:[#allocation3 + $0xa0] sm:$0xff] %vm1415, %v1360
      %1437 = vst.msk [vmem:[#allocation3 + $0xa8] sm:$0xff] %vm1415, %v1362
      %1438 = vst.msk [vmem:[#allocation3 + $0xb0] sm:$0xff] %vm1415, %v1364
      %1439 = vst.msk [vmem:[#allocation3 + $0xb8] sm:$0xff] %vm1415, %v1366
      %1440 = vst.msk [vmem:[#allocation3 + $0xc0] sm:$0xff] %vm1415, %v1368
      %1441 = vst.msk [vmem:[#allocation3 + $0xc8] sm:$0xff] %vm1415, %v1370
      %1442 = vst.msk [vmem:[#allocation3 + $0xd0] sm:$0xff] %vm1415, %v1372
      %1443 = vst.msk [vmem:[#allocation3 + $0xd8] sm:$0xff] %vm1415, %v1374
      %1444 = vst.msk [vmem:[#allocation3 + $0xe0] sm:$0xff] %vm1415, %v1376
      %1445 = vst.msk [vmem:[#allocation3 + $0xe8] sm:$0xff] %vm1415, %v1378
      %1446 = vst.msk [vmem:[#allocation3 + $0xf0] sm:$0xff] %vm1415, %v1380
      %1447 = vst.msk [vmem:[#allocation3 + $0xf8] sm:$0xff] %vm1415, %v1382
      %s1448 = scalar_lea.vmem [#allocation2], 48
      %v1449 = vld [vmem:[%s1448] sm:$0xff]
      %v1450 = vld [vmem:[%s1448 + $0x8] sm:$0xff]
      %v1451 = vld [vmem:[%s1448 + $0x18] sm:$0xff]
      %v1452 = vld [vmem:[%s1448 + $0x20] sm:$0xff]
      %v1453 = vld [vmem:[%s1448 + $0x30] sm:$0xff]
      %v1454 = vld [vmem:[%s1448 + $0x38] sm:$0xff]
      %v1455 = vld [vmem:[%s1448 + $0x48] sm:$0xff]
      %v1456 = vld [vmem:[%s1448 + $0x50] sm:$0xff]
      %v1457 = vld [vmem:[%s1448 + $0x60] sm:$0xff]
      %v1458 = vld [vmem:[%s1448 + $0x68] sm:$0xff]
      %v1459 = vld [vmem:[%s1448 + $0x78] sm:$0xff]
      %v1460 = vld [vmem:[%s1448 + $0x80] sm:$0xff]
      %v1461 = vld [vmem:[%s1448 + $0x90] sm:$0xff]
      %v1462 = vld [vmem:[%s1448 + $0x98] sm:$0xff]
      %v1463 = vld [vmem:[%s1448 + $0xa8] sm:$0xff]
      %v1464 = vld [vmem:[%s1448 + $0xb0] sm:$0xff]
      %v1465 = vld [vmem:[%s1448 + $0xc0] sm:$0xff]
      %v1466 = vld [vmem:[%s1448 + $0xc8] sm:$0xff]
      %v1467 = vld [vmem:[%s1448 + $0xd8] sm:$0xff]
      %v1468 = vld [vmem:[%s1448 + $0xe0] sm:$0xff]
      %v1469 = vld [vmem:[%s1448 + $0xf0] sm:$0xff]
      %v1470 = vld [vmem:[%s1448 + $0xf8] sm:$0xff]
      %v1471 = vld [vmem:[%s1448 + $0x108] sm:$0xff]
      %v1472 = vld [vmem:[%s1448 + $0x110] sm:$0xff]
      %v1473 = vld [vmem:[%s1448 + $0x120] sm:$0xff]
      %v1474 = vld [vmem:[%s1448 + $0x128] sm:$0xff]
      %v1475 = vld [vmem:[%s1448 + $0x138] sm:$0xff]
      %v1476 = vld [vmem:[%s1448 + $0x140] sm:$0xff]
      %v1477 = vld [vmem:[%s1448 + $0x150] sm:$0xff]
      %v1478 = vld [vmem:[%s1448 + $0x158] sm:$0xff]
      %v1479 = vld [vmem:[%s1448 + $0x168] sm:$0xff]
      %v1480 = vld [vmem:[%s1448 + $0x170] sm:$0xff]
      %1513 = vrot.lane.b32.xlu0 %v1449, 24
      %v1514 = vpop.permute.xlu0 %1513
      %1515 = vrot.lane.b32.xlu0 %v1450, 24
      %v1516 = vpop.permute.xlu0 %1515
      %1517 = vrot.lane.b32.xlu0 %v1451, 24
      %v1518 = vpop.permute.xlu0 %1517
      %1519 = vrot.lane.b32.xlu0 %v1452, 24
      %v1520 = vpop.permute.xlu0 %1519
      %1521 = vrot.lane.b32.xlu0 %v1453, 24
      %v1522 = vpop.permute.xlu0 %1521
      %1523 = vrot.lane.b32.xlu0 %v1454, 24
      %v1524 = vpop.permute.xlu0 %1523
      %1525 = vrot.lane.b32.xlu0 %v1455, 24
      %v1526 = vpop.permute.xlu0 %1525
      %1527 = vrot.lane.b32.xlu0 %v1456, 24
      %v1528 = vpop.permute.xlu0 %1527
      %1529 = vrot.lane.b32.xlu0 %v1457, 24
      %v1530 = vpop.permute.xlu0 %1529
      %1531 = vrot.lane.b32.xlu0 %v1458, 24
      %v1532 = vpop.permute.xlu0 %1531
      %1533 = vrot.lane.b32.xlu0 %v1459, 24
      %v1534 = vpop.permute.xlu0 %1533
      %1535 = vrot.lane.b32.xlu0 %v1460, 24
      %v1536 = vpop.permute.xlu0 %1535
      %1537 = vrot.lane.b32.xlu0 %v1461, 24
      %v1538 = vpop.permute.xlu0 %1537
      %1539 = vrot.lane.b32.xlu0 %v1462, 24
      %v1540 = vpop.permute.xlu0 %1539
      %1541 = vrot.lane.b32.xlu0 %v1463, 24
      %v1542 = vpop.permute.xlu0 %1541
      %1543 = vrot.lane.b32.xlu0 %v1464, 24
      %v1544 = vpop.permute.xlu0 %1543
      %1545 = vrot.lane.b32.xlu0 %v1465, 24
      %v1546 = vpop.permute.xlu0 %1545
      %1547 = vrot.lane.b32.xlu0 %v1466, 24
      %v1548 = vpop.permute.xlu0 %1547
      %1549 = vrot.lane.b32.xlu0 %v1467, 24
      %v1550 = vpop.permute.xlu0 %1549
      %1551 = vrot.lane.b32.xlu0 %v1468, 24
      %v1552 = vpop.permute.xlu0 %1551
      %1553 = vrot.lane.b32.xlu0 %v1469, 24
      %v1554 = vpop.permute.xlu0 %1553
      %1555 = vrot.lane.b32.xlu0 %v1470, 24
      %v1556 = vpop.permute.xlu0 %1555
      %1557 = vrot.lane.b32.xlu0 %v1471, 24
      %v1558 = vpop.permute.xlu0 %1557
      %1559 = vrot.lane.b32.xlu0 %v1472, 24
      %v1560 = vpop.permute.xlu0 %1559
      %1561 = vrot.lane.b32.xlu0 %v1473, 24
      %v1562 = vpop.permute.xlu0 %1561
      %1563 = vrot.lane.b32.xlu0 %v1474, 24
      %v1564 = vpop.permute.xlu0 %1563
      %1565 = vrot.lane.b32.xlu0 %v1475, 24
      %v1566 = vpop.permute.xlu0 %1565
      %1567 = vrot.lane.b32.xlu0 %v1476, 24
      %v1568 = vpop.permute.xlu0 %1567
      %1569 = vrot.lane.b32.xlu0 %v1477, 24
      %v1570 = vpop.permute.xlu0 %1569
      %1571 = vrot.lane.b32.xlu0 %v1478, 24
      %v1572 = vpop.permute.xlu0 %1571
      %1573 = vrot.lane.b32.xlu0 %v1479, 24
      %v1574 = vpop.permute.xlu0 %1573
      %1575 = vrot.lane.b32.xlu0 %v1480, 24
      %v1576 = vpop.permute.xlu0 %1575
      %vm1609 = vcmask 228544
      %1610 = vst.msk [vmem:[#allocation3] sm:$0xff] %vm1609, %v1514
      %1611 = vst.msk [vmem:[#allocation3 + $0x8] sm:$0xff] %vm1609, %v1516
      %1612 = vst.msk [vmem:[#allocation3 + $0x10] sm:$0xff] %vm1609, %v1518
      %1613 = vst.msk [vmem:[#allocation3 + $0x18] sm:$0xff] %vm1609, %v1520
      %1614 = vst.msk [vmem:[#allocation3 + $0x20] sm:$0xff] %vm1609, %v1522
      %1615 = vst.msk [vmem:[#allocation3 + $0x28] sm:$0xff] %vm1609, %v1524
      %1616 = vst.msk [vmem:[#allocation3 + $0x30] sm:$0xff] %vm1609, %v1526
      %1617 = vst.msk [vmem:[#allocation3 + $0x38] sm:$0xff] %vm1609, %v1528
      %1618 = vst.msk [vmem:[#allocation3 + $0x40] sm:$0xff] %vm1609, %v1530
      %1619 = vst.msk [vmem:[#allocation3 + $0x48] sm:$0xff] %vm1609, %v1532
      %1620 = vst.msk [vmem:[#allocation3 + $0x50] sm:$0xff] %vm1609, %v1534
      %1621 = vst.msk [vmem:[#allocation3 + $0x58] sm:$0xff] %vm1609, %v1536
      %1622 = vst.msk [vmem:[#allocation3 + $0x60] sm:$0xff] %vm1609, %v1538
      %1623 = vst.msk [vmem:[#allocation3 + $0x68] sm:$0xff] %vm1609, %v1540
      %1624 = vst.msk [vmem:[#allocation3 + $0x70] sm:$0xff] %vm1609, %v1542
      %1625 = vst.msk [vmem:[#allocation3 + $0x78] sm:$0xff] %vm1609, %v1544
      %1626 = vst.msk [vmem:[#allocation3 + $0x80] sm:$0xff] %vm1609, %v1546
      %1627 = vst.msk [vmem:[#allocation3 + $0x88] sm:$0xff] %vm1609, %v1548
      %1628 = vst.msk [vmem:[#allocation3 + $0x90] sm:$0xff] %vm1609, %v1550
      %1629 = vst.msk [vmem:[#allocation3 + $0x98] sm:$0xff] %vm1609, %v1552
      %1630 = vst.msk [vmem:[#allocation3 + $0xa0] sm:$0xff] %vm1609, %v1554
      %1631 = vst.msk [vmem:[#allocation3 + $0xa8] sm:$0xff] %vm1609, %v1556
      %1632 = vst.msk [vmem:[#allocation3 + $0xb0] sm:$0xff] %vm1609, %v1558
      %1633 = vst.msk [vmem:[#allocation3 + $0xb8] sm:$0xff] %vm1609, %v1560
      %1634 = vst.msk [vmem:[#allocation3 + $0xc0] sm:$0xff] %vm1609, %v1562
      %1635 = vst.msk [vmem:[#allocation3 + $0xc8] sm:$0xff] %vm1609, %v1564
      %1636 = vst.msk [vmem:[#allocation3 + $0xd0] sm:$0xff] %vm1609, %v1566
      %1637 = vst.msk [vmem:[#allocation3 + $0xd8] sm:$0xff] %vm1609, %v1568
      %1638 = vst.msk [vmem:[#allocation3 + $0xe0] sm:$0xff] %vm1609, %v1570
      %1639 = vst.msk [vmem:[#allocation3 + $0xe8] sm:$0xff] %vm1609, %v1572
      %1640 = vst.msk [vmem:[#allocation3 + $0xf0] sm:$0xff] %vm1609, %v1574
      %1641 = vst.msk [vmem:[#allocation3 + $0xf8] sm:$0xff] %vm1609, %v1576
      %v1642 = vld [vmem:[%s1448 + $0x1] sm:$0xff]
      %v1643 = vld [vmem:[%s1448 + $0x9] sm:$0xff]
      %v1644 = vld [vmem:[%s1448 + $0x19] sm:$0xff]
      %v1645 = vld [vmem:[%s1448 + $0x21] sm:$0xff]
      %v1646 = vld [vmem:[%s1448 + $0x31] sm:$0xff]
      %v1647 = vld [vmem:[%s1448 + $0x39] sm:$0xff]
      %v1648 = vld [vmem:[%s1448 + $0x49] sm:$0xff]
      %v1649 = vld [vmem:[%s1448 + $0x51] sm:$0xff]
      %v1650 = vld [vmem:[%s1448 + $0x61] sm:$0xff]
      %v1651 = vld [vmem:[%s1448 + $0x69] sm:$0xff]
      %v1652 = vld [vmem:[%s1448 + $0x79] sm:$0xff]
      %v1653 = vld [vmem:[%s1448 + $0x81] sm:$0xff]
      %v1654 = vld [vmem:[%s1448 + $0x91] sm:$0xff]
      %v1655 = vld [vmem:[%s1448 + $0x99] sm:$0xff]
      %v1656 = vld [vmem:[%s1448 + $0xa9] sm:$0xff]
      %v1657 = vld [vmem:[%s1448 + $0xb1] sm:$0xff]
      %v1658 = vld [vmem:[%s1448 + $0xc1] sm:$0xff]
      %v1659 = vld [vmem:[%s1448 + $0xc9] sm:$0xff]
      %v1660 = vld [vmem:[%s1448 + $0xd9] sm:$0xff]
      %v1661 = vld [vmem:[%s1448 + $0xe1] sm:$0xff]
      %v1662 = vld [vmem:[%s1448 + $0xf1] sm:$0xff]
      %v1663 = vld [vmem:[%s1448 + $0xf9] sm:$0xff]
      %v1664 = vld [vmem:[%s1448 + $0x109] sm:$0xff]
      %v1665 = vld [vmem:[%s1448 + $0x111] sm:$0xff]
      %v1666 = vld [vmem:[%s1448 + $0x121] sm:$0xff]
      %v1667 = vld [vmem:[%s1448 + $0x129] sm:$0xff]
      %v1668 = vld [vmem:[%s1448 + $0x139] sm:$0xff]
      %v1669 = vld [vmem:[%s1448 + $0x141] sm:$0xff]
      %v1670 = vld [vmem:[%s1448 + $0x151] sm:$0xff]
      %v1671 = vld [vmem:[%s1448 + $0x159] sm:$0xff]
      %v1672 = vld [vmem:[%s1448 + $0x169] sm:$0xff]
      %v1673 = vld [vmem:[%s1448 + $0x171] sm:$0xff]
      %1706 = vrot.lane.b32.xlu0 %v1642, 28
      %v1707 = vpop.permute.xlu0 %1706
      %1708 = vrot.lane.b32.xlu0 %v1643, 28
      %v1709 = vpop.permute.xlu0 %1708
      %1710 = vrot.lane.b32.xlu0 %v1644, 28
      %v1711 = vpop.permute.xlu0 %1710
      %1712 = vrot.lane.b32.xlu0 %v1645, 28
      %v1713 = vpop.permute.xlu0 %1712
      %1714 = vrot.lane.b32.xlu0 %v1646, 28
      %v1715 = vpop.permute.xlu0 %1714
      %1716 = vrot.lane.b32.xlu0 %v1647, 28
      %v1717 = vpop.permute.xlu0 %1716
      %1718 = vrot.lane.b32.xlu0 %v1648, 28
      %v1719 = vpop.permute.xlu0 %1718
      %1720 = vrot.lane.b32.xlu0 %v1649, 28
      %v1721 = vpop.permute.xlu0 %1720
      %1722 = vrot.lane.b32.xlu0 %v1650, 28
      %v1723 = vpop.permute.xlu0 %1722
      %1724 = vrot.lane.b32.xlu0 %v1651, 28
      %v1725 = vpop.permute.xlu0 %1724
      %1726 = vrot.lane.b32.xlu0 %v1652, 28
      %v1727 = vpop.permute.xlu0 %1726
      %1728 = vrot.lane.b32.xlu0 %v1653, 28
      %v1729 = vpop.permute.xlu0 %1728
      %1730 = vrot.lane.b32.xlu0 %v1654, 28
      %v1731 = vpop.permute.xlu0 %1730
      %1732 = vrot.lane.b32.xlu0 %v1655, 28
      %v1733 = vpop.permute.xlu0 %1732
      %1734 = vrot.lane.b32.xlu0 %v1656, 28
      %v1735 = vpop.permute.xlu0 %1734
      %1736 = vrot.lane.b32.xlu0 %v1657, 28
      %v1737 = vpop.permute.xlu0 %1736
      %1738 = vrot.lane.b32.xlu0 %v1658, 28
      %v1739 = vpop.permute.xlu0 %1738
      %1740 = vrot.lane.b32.xlu0 %v1659, 28
      %v1741 = vpop.permute.xlu0 %1740
      %1742 = vrot.lane.b32.xlu0 %v1660, 28
      %v1743 = vpop.permute.xlu0 %1742
      %1744 = vrot.lane.b32.xlu0 %v1661, 28
      %v1745 = vpop.permute.xlu0 %1744
      %1746 = vrot.lane.b32.xlu0 %v1662, 28
      %v1747 = vpop.permute.xlu0 %1746
      %1748 = vrot.lane.b32.xlu0 %v1663, 28
      %v1749 = vpop.permute.xlu0 %1748
      %1750 = vrot.lane.b32.xlu0 %v1664, 28
      %v1751 = vpop.permute.xlu0 %1750
      %1752 = vrot.lane.b32.xlu0 %v1665, 28
      %v1753 = vpop.permute.xlu0 %1752
      %1754 = vrot.lane.b32.xlu0 %v1666, 28
      %v1755 = vpop.permute.xlu0 %1754
      %1756 = vrot.lane.b32.xlu0 %v1667, 28
      %v1757 = vpop.permute.xlu0 %1756
      %1758 = vrot.lane.b32.xlu0 %v1668, 28
      %v1759 = vpop.permute.xlu0 %1758
      %1760 = vrot.lane.b32.xlu0 %v1669, 28
      %v1761 = vpop.permute.xlu0 %1760
      %1762 = vrot.lane.b32.xlu0 %v1670, 28
      %v1763 = vpop.permute.xlu0 %1762
      %1764 = vrot.lane.b32.xlu0 %v1671, 28
      %v1765 = vpop.permute.xlu0 %1764
      %1766 = vrot.lane.b32.xlu0 %v1672, 28
      %v1767 = vpop.permute.xlu0 %1766
      %1768 = vrot.lane.b32.xlu0 %v1673, 28
      %v1769 = vpop.permute.xlu0 %1768
      %vm1802 = vcmask 261344
      %1803 = vst.msk [vmem:[#allocation3] sm:$0xff] %vm1802, %v1707
      %1804 = vst.msk [vmem:[#allocation3 + $0x8] sm:$0xff] %vm1802, %v1709
      %1805 = vst.msk [vmem:[#allocation3 + $0x10] sm:$0xff] %vm1802, %v1711
      %1806 = vst.msk [vmem:[#allocation3 + $0x18] sm:$0xff] %vm1802, %v1713
      %1807 = vst.msk [vmem:[#allocation3 + $0x20] sm:$0xff] %vm1802, %v1715
      %1808 = vst.msk [vmem:[#allocation3 + $0x28] sm:$0xff] %vm1802, %v1717
      %1809 = vst.msk [vmem:[#allocation3 + $0x30] sm:$0xff] %vm1802, %v1719
      %1810 = vst.msk [vmem:[#allocation3 + $0x38] sm:$0xff] %vm1802, %v1721
      %1811 = vst.msk [vmem:[#allocation3 + $0x40] sm:$0xff] %vm1802, %v1723
      %1812 = vst.msk [vmem:[#allocation3 + $0x48] sm:$0xff] %vm1802, %v1725
      %1813 = vst.msk [vmem:[#allocation3 + $0x50] sm:$0xff] %vm1802, %v1727
      %1814 = vst.msk [vmem:[#allocation3 + $0x58] sm:$0xff] %vm1802, %v1729
      %1815 = vst.msk [vmem:[#allocation3 + $0x60] sm:$0xff] %vm1802, %v1731
      %1816 = vst.msk [vmem:[#allocation3 + $0x68] sm:$0xff] %vm1802, %v1733
      %1817 = vst.msk [vmem:[#allocation3 + $0x70] sm:$0xff] %vm1802, %v1735
      %1818 = vst.msk [vmem:[#allocation3 + $0x78] sm:$0xff] %vm1802, %v1737
      %1819 = vst.msk [vmem:[#allocation3 + $0x80] sm:$0xff] %vm1802, %v1739
      %1820 = vst.msk [vmem:[#allocation3 + $0x88] sm:$0xff] %vm1802, %v1741
      %1821 = vst.msk [vmem:[#allocation3 + $0x90] sm:$0xff] %vm1802, %v1743
      %1822 = vst.msk [vmem:[#allocation3 + $0x98] sm:$0xff] %vm1802, %v1745
      %1823 = vst.msk [vmem:[#allocation3 + $0xa0] sm:$0xff] %vm1802, %v1747
      %1824 = vst.msk [vmem:[#allocation3 + $0xa8] sm:$0xff] %vm1802, %v1749
      %1825 = vst.msk [vmem:[#allocation3 + $0xb0] sm:$0xff] %vm1802, %v1751
      %1826 = vst.msk [vmem:[#allocation3 + $0xb8] sm:$0xff] %vm1802, %v1753
      %1827 = vst.msk [vmem:[#allocation3 + $0xc0] sm:$0xff] %vm1802, %v1755
      %1828 = vst.msk [vmem:[#allocation3 + $0xc8] sm:$0xff] %vm1802, %v1757
      %1829 = vst.msk [vmem:[#allocation3 + $0xd0] sm:$0xff] %vm1802, %v1759
      %1830 = vst.msk [vmem:[#allocation3 + $0xd8] sm:$0xff] %vm1802, %v1761
      %1831 = vst.msk [vmem:[#allocation3 + $0xe0] sm:$0xff] %vm1802, %v1763
      %1832 = vst.msk [vmem:[#allocation3 + $0xe8] sm:$0xff] %vm1802, %v1765
      %1833 = vst.msk [vmem:[#allocation3 + $0xf0] sm:$0xff] %vm1802, %v1767
      %1834 = vst.msk [vmem:[#allocation3 + $0xf8] sm:$0xff] %vm1802, %v1769
      %v1835 = vld [vmem:[%s1448 + $0x2] sm:$0xff]
      %v1836 = vld [vmem:[%s1448 + $0xa] sm:$0xff]
      %v1837 = vld [vmem:[%s1448 + $0x1a] sm:$0xff]
      %v1838 = vld [vmem:[%s1448 + $0x22] sm:$0xff]
      %v1839 = vld [vmem:[%s1448 + $0x32] sm:$0xff]
      %v1840 = vld [vmem:[%s1448 + $0x3a] sm:$0xff]
      %v1841 = vld [vmem:[%s1448 + $0x4a] sm:$0xff]
      %v1842 = vld [vmem:[%s1448 + $0x52] sm:$0xff]
      %v1843 = vld [vmem:[%s1448 + $0x62] sm:$0xff]
      %v1844 = vld [vmem:[%s1448 + $0x6a] sm:$0xff]
      %v1845 = vld [vmem:[%s1448 + $0x7a] sm:$0xff]
      %v1846 = vld [vmem:[%s1448 + $0x82] sm:$0xff]
      %v1847 = vld [vmem:[%s1448 + $0x92] sm:$0xff]
      %v1848 = vld [vmem:[%s1448 + $0x9a] sm:$0xff]
      %v1849 = vld [vmem:[%s1448 + $0xaa] sm:$0xff]
      %v1850 = vld [vmem:[%s1448 + $0xb2] sm:$0xff]
      %v1851 = vld [vmem:[%s1448 + $0xc2] sm:$0xff]
      %v1852 = vld [vmem:[%s1448 + $0xca] sm:$0xff]
      %v1853 = vld [vmem:[%s1448 + $0xda] sm:$0xff]
      %v1854 = vld [vmem:[%s1448 + $0xe2] sm:$0xff]
      %v1855 = vld [vmem:[%s1448 + $0xf2] sm:$0xff]
      %v1856 = vld [vmem:[%s1448 + $0xfa] sm:$0xff]
      %v1857 = vld [vmem:[%s1448 + $0x10a] sm:$0xff]
      %v1858 = vld [vmem:[%s1448 + $0x112] sm:$0xff]
      %v1859 = vld [vmem:[%s1448 + $0x122] sm:$0xff]
      %v1860 = vld [vmem:[%s1448 + $0x12a] sm:$0xff]
      %v1861 = vld [vmem:[%s1448 + $0x13a] sm:$0xff]
      %v1862 = vld [vmem:[%s1448 + $0x142] sm:$0xff]
      %v1863 = vld [vmem:[%s1448 + $0x152] sm:$0xff]
      %v1864 = vld [vmem:[%s1448 + $0x15a] sm:$0xff]
      %v1865 = vld [vmem:[%s1448 + $0x16a] sm:$0xff]
      %v1866 = vld [vmem:[%s1448 + $0x172] sm:$0xff]
      %1899 = vrot.lane.b32.xlu0 %v1835, 32
      %v1900 = vpop.permute.xlu0 %1899
      %1901 = vrot.lane.b32.xlu0 %v1836, 32
      %v1902 = vpop.permute.xlu0 %1901
      %1903 = vrot.lane.b32.xlu0 %v1837, 32
      %v1904 = vpop.permute.xlu0 %1903
      %1905 = vrot.lane.b32.xlu0 %v1838, 32
      %v1906 = vpop.permute.xlu0 %1905
      %1907 = vrot.lane.b32.xlu0 %v1839, 32
      %v1908 = vpop.permute.xlu0 %1907
      %1909 = vrot.lane.b32.xlu0 %v1840, 32
      %v1910 = vpop.permute.xlu0 %1909
      %1911 = vrot.lane.b32.xlu0 %v1841, 32
      %v1912 = vpop.permute.xlu0 %1911
      %1913 = vrot.lane.b32.xlu0 %v1842, 32
      %v1914 = vpop.permute.xlu0 %1913
      %1915 = vrot.lane.b32.xlu0 %v1843, 32
      %v1916 = vpop.permute.xlu0 %1915
      %1917 = vrot.lane.b32.xlu0 %v1844, 32
      %v1918 = vpop.permute.xlu0 %1917
      %1919 = vrot.lane.b32.xlu0 %v1845, 32
      %v1920 = vpop.permute.xlu0 %1919
      %1921 = vrot.lane.b32.xlu0 %v1846, 32
      %v1922 = vpop.permute.xlu0 %1921
      %1923 = vrot.lane.b32.xlu0 %v1847, 32
      %v1924 = vpop.permute.xlu0 %1923
      %1925 = vrot.lane.b32.xlu0 %v1848, 32
      %v1926 = vpop.permute.xlu0 %1925
      %1927 = vrot.lane.b32.xlu0 %v1849, 32
      %v1928 = vpop.permute.xlu0 %1927
      %1929 = vrot.lane.b32.xlu0 %v1850, 32
      %v1930 = vpop.permute.xlu0 %1929
      %1931 = vrot.lane.b32.xlu0 %v1851, 32
      %v1932 = vpop.permute.xlu0 %1931
      %1933 = vrot.lane.b32.xlu0 %v1852, 32
      %v1934 = vpop.permute.xlu0 %1933
      %1935 = vrot.lane.b32.xlu0 %v1853, 32
      %v1936 = vpop.permute.xlu0 %1935
      %1937 = vrot.lane.b32.xlu0 %v1854, 32
      %v1938 = vpop.permute.xlu0 %1937
      %1939 = vrot.lane.b32.xlu0 %v1855, 32
      %v1940 = vpop.permute.xlu0 %1939
      %1941 = vrot.lane.b32.xlu0 %v1856, 32
      %v1942 = vpop.permute.xlu0 %1941
      %1943 = vrot.lane.b32.xlu0 %v1857, 32
      %v1944 = vpop.permute.xlu0 %1943
      %1945 = vrot.lane.b32.xlu0 %v1858, 32
      %v1946 = vpop.permute.xlu0 %1945
      %1947 = vrot.lane.b32.xlu0 %v1859, 32
      %v1948 = vpop.permute.xlu0 %1947
      %1949 = vrot.lane.b32.xlu0 %v1860, 32
      %v1950 = vpop.permute.xlu0 %1949
      %1951 = vrot.lane.b32.xlu0 %v1861, 32
      %v1952 = vpop.permute.xlu0 %1951
      %1953 = vrot.lane.b32.xlu0 %v1862, 32
      %v1954 = vpop.permute.xlu0 %1953
      %1955 = vrot.lane.b32.xlu0 %v1863, 32
      %v1956 = vpop.permute.xlu0 %1955
      %1957 = vrot.lane.b32.xlu0 %v1864, 32
      %v1958 = vpop.permute.xlu0 %1957
      %1959 = vrot.lane.b32.xlu0 %v1865, 32
      %v1960 = vpop.permute.xlu0 %1959
      %1961 = vrot.lane.b32.xlu0 %v1866, 32
      %v1962 = vpop.permute.xlu0 %1961
      %vm1995 = vcmask 294144
      %1996 = vst.msk [vmem:[#allocation3] sm:$0xff] %vm1995, %v1900
      %1997 = vst.msk [vmem:[#allocation3 + $0x8] sm:$0xff] %vm1995, %v1902
      %1998 = vst.msk [vmem:[#allocation3 + $0x10] sm:$0xff] %vm1995, %v1904
      %1999 = vst.msk [vmem:[#allocation3 + $0x18] sm:$0xff] %vm1995, %v1906
      %2000 = vst.msk [vmem:[#allocation3 + $0x20] sm:$0xff] %vm1995, %v1908
      %2001 = vst.msk [vmem:[#allocation3 + $0x28] sm:$0xff] %vm1995, %v1910
      %2002 = vst.msk [vmem:[#allocation3 + $0x30] sm:$0xff] %vm1995, %v1912
      %2003 = vst.msk [vmem:[#allocation3 + $0x38] sm:$0xff] %vm1995, %v1914
      %2004 = vst.msk [vmem:[#allocation3 + $0x40] sm:$0xff] %vm1995, %v1916
      %2005 = vst.msk [vmem:[#allocation3 + $0x48] sm:$0xff] %vm1995, %v1918
      %2006 = vst.msk [vmem:[#allocation3 + $0x50] sm:$0xff] %vm1995, %v1920
      %2007 = vst.msk [vmem:[#allocation3 + $0x58] sm:$0xff] %vm1995, %v1922
      %2008 = vst.msk [vmem:[#allocation3 + $0x60] sm:$0xff] %vm1995, %v1924
      %2009 = vst.msk [vmem:[#allocation3 + $0x68] sm:$0xff] %vm1995, %v1926
      %2010 = vst.msk [vmem:[#allocation3 + $0x70] sm:$0xff] %vm1995, %v1928
      %2011 = vst.msk [vmem:[#allocation3 + $0x78] sm:$0xff] %vm1995, %v1930
      %2012 = vst.msk [vmem:[#allocation3 + $0x80] sm:$0xff] %vm1995, %v1932
      %2013 = vst.msk [vmem:[#allocation3 + $0x88] sm:$0xff] %vm1995, %v1934
      %2014 = vst.msk [vmem:[#allocation3 + $0x90] sm:$0xff] %vm1995, %v1936
      %2015 = vst.msk [vmem:[#allocation3 + $0x98] sm:$0xff] %vm1995, %v1938
      %2016 = vst.msk [vmem:[#allocation3 + $0xa0] sm:$0xff] %vm1995, %v1940
      %2017 = vst.msk [vmem:[#allocation3 + $0xa8] sm:$0xff] %vm1995, %v1942
      %2018 = vst.msk [vmem:[#allocation3 + $0xb0] sm:$0xff] %vm1995, %v1944
      %2019 = vst.msk [vmem:[#allocation3 + $0xb8] sm:$0xff] %vm1995, %v1946
      %2020 = vst.msk [vmem:[#allocation3 + $0xc0] sm:$0xff] %vm1995, %v1948
      %2021 = vst.msk [vmem:[#allocation3 + $0xc8] sm:$0xff] %vm1995, %v1950
      %2022 = vst.msk [vmem:[#allocation3 + $0xd0] sm:$0xff] %vm1995, %v1952
      %2023 = vst.msk [vmem:[#allocation3 + $0xd8] sm:$0xff] %vm1995, %v1954
      %2024 = vst.msk [vmem:[#allocation3 + $0xe0] sm:$0xff] %vm1995, %v1956
      %2025 = vst.msk [vmem:[#allocation3 + $0xe8] sm:$0xff] %vm1995, %v1958
      %2026 = vst.msk [vmem:[#allocation3 + $0xf0] sm:$0xff] %vm1995, %v1960
      %2027 = vst.msk [vmem:[#allocation3 + $0xf8] sm:$0xff] %vm1995, %v1962
      %v2028 = vld [vmem:[#allocation3] sm:$0xff]
      %v2029 = vld [vmem:[#allocation3 + $0x8] sm:$0xff]
      %v2030 = vld [vmem:[#allocation3 + $0x10] sm:$0xff]
      %v2031 = vld [vmem:[#allocation3 + $0x18] sm:$0xff]
      %v2032 = vld [vmem:[#allocation3 + $0x20] sm:$0xff]
      %v2033 = vld [vmem:[#allocation3 + $0x28] sm:$0xff]
      %v2034 = vld [vmem:[#allocation3 + $0x30] sm:$0xff]
      %v2035 = vld [vmem:[#allocation3 + $0x38] sm:$0xff]
      %v2036 = vld [vmem:[#allocation3 + $0x40] sm:$0xff]
      %v2037 = vld [vmem:[#allocation3 + $0x48] sm:$0xff]
      %v2038 = vld [vmem:[#allocation3 + $0x50] sm:$0xff]
      %v2039 = vld [vmem:[#allocation3 + $0x58] sm:$0xff]
      %v2040 = vld [vmem:[#allocation3 + $0x60] sm:$0xff]
      %v2041 = vld [vmem:[#allocation3 + $0x68] sm:$0xff]
      %v2042 = vld [vmem:[#allocation3 + $0x70] sm:$0xff]
      %v2043 = vld [vmem:[#allocation3 + $0x78] sm:$0xff]
      %v2044 = vld [vmem:[#allocation3 + $0x80] sm:$0xff]
      %v2045 = vld [vmem:[#allocation3 + $0x88] sm:$0xff]
      %v2046 = vld [vmem:[#allocation3 + $0x90] sm:$0xff]
      %v2047 = vld [vmem:[#allocation3 + $0x98] sm:$0xff]
      %v2048 = vld [vmem:[#allocation3 + $0xa0] sm:$0xff]
      %v2049 = vld [vmem:[#allocation3 + $0xa8] sm:$0xff]
      %v2050 = vld [vmem:[#allocation3 + $0xb0] sm:$0xff]
      %v2051 = vld [vmem:[#allocation3 + $0xb8] sm:$0xff]
      %v2052 = vld [vmem:[#allocation3 + $0xc0] sm:$0xff]
      %v2053 = vld [vmem:[#allocation3 + $0xc8] sm:$0xff]
      %v2054 = vld [vmem:[#allocation3 + $0xd0] sm:$0xff]
      %v2055 = vld [vmem:[#allocation3 + $0xd8] sm:$0xff]
      %v2056 = vld [vmem:[#allocation3 + $0xe0] sm:$0xff]
      %v2057 = vld [vmem:[#allocation3 + $0xe8] sm:$0xff]
      %v2058 = vld [vmem:[#allocation3 + $0xf0] sm:$0xff]
      %v2059 = vld [vmem:[#allocation3 + $0xf8] sm:$0xff]
      %v2060 = vld [vmem:[%s3] sm:$0xff]
      %v2061 = vld [vmem:[%s3 + $0x8] sm:$0xff]
      %v2062 = vld [vmem:[%s3 + $0x10] sm:$0xff]
      %v2063 = vld [vmem:[%s3 + $0x18] sm:$0xff]
      %v2064 = vld [vmem:[%s3 + $0x20] sm:$0xf]
      %vm2065 = vcmask 293888
      %v2067 = vsel %vm2065, %v2028, 0
      %v2070 = vsel %vm2065, %v2029, 0
      %v2073 = vsel %vm2065, %v2030, 0
      %v2076 = vsel %vm2065, %v2031, 0
      %v2079 = vsel %vm2065, %v2032, 0
      %v2082 = vsel %vm2065, %v2033, 0
      %v2085 = vsel %vm2065, %v2034, 0
      %v2088 = vsel %vm2065, %v2035, 0
      %v2091 = vsel %vm2065, %v2036, 0
      %v2094 = vsel %vm2065, %v2037, 0
      %v2097 = vsel %vm2065, %v2038, 0
      %v2100 = vsel %vm2065, %v2039, 0
      %v2103 = vsel %vm2065, %v2040, 0
      %v2106 = vsel %vm2065, %v2041, 0
      %v2109 = vsel %vm2065, %v2042, 0
      %v2112 = vsel %vm2065, %v2043, 0
      %v2115 = vsel %vm2065, %v2044, 0
      %v2118 = vsel %vm2065, %v2045, 0
      %v2121 = vsel %vm2065, %v2046, 0
      %v2124 = vsel %vm2065, %v2047, 0
      %v2127 = vsel %vm2065, %v2048, 0
      %v2130 = vsel %vm2065, %v2049, 0
      %v2133 = vsel %vm2065, %v2050, 0
      %v2136 = vsel %vm2065, %v2051, 0
      %v2139 = vsel %vm2065, %v2052, 0
      %v2142 = vsel %vm2065, %v2053, 0
      %v2145 = vsel %vm2065, %v2054, 0
      %v2148 = vsel %vm2065, %v2055, 0
      %v2151 = vsel %vm2065, %v2056, 0
      %v2154 = vsel %vm2065, %v2057, 0
      %v2157 = vsel %vm2065, %v2058, 0
      %v2160 = vsel %vm2065, %v2059, 0
      %vm2162 = vcmask 1043456
      %v2164 = vsel %vm2162, %v2064, 0
      %2166 = vmatprep.subr.mxu0 0.0
      %2167 = vmatpush1.msra.mxu0 %v2060
      %2168 = vmatprep.subr.mxu0 0.0
      %2169 = vmatpush1.msra.mxu0 %v2061
      %2170 = vmatprep.subr.mxu0 0.0
      %2171 = vmatpush1.msra.mxu0 %v2062
      %2172 = vmatprep.subr.mxu0 0.0
      %2173 = vmatpush1.msra.mxu0 %v2063
      %2174 = vmatprep.subr.mxu0 0.0
      %2175 = vmatpush1.msra.mxu0 %v2164
      %2176 = vmatprep.subr.mxu0 0.0
      %2177 = vmatpush1.msra.mxu0 0.0
      %2178 = vmatprep.subr.mxu0 0.0
      %2179 = vmatpush1.msra.mxu0 0.0
      %2180 = vmatprep.subr.mxu0 0.0
      %2181 = vmatpush1.msra.mxu0 0.0
      %2182 = vmatprep.subr.mxu0 0.0
      %2183 = vmatpush1.msra.mxu0 0.0
      %2184 = vmatprep.subr.mxu0 0.0
      %2185 = vmatpush1.msra.mxu0 0.0
      %2186 = vmatprep.subr.mxu0 0.0
      %2187 = vmatpush1.msra.mxu0 0.0
      %2188 = vmatprep.subr.mxu0 0.0
      %2189 = vmatpush1.msra.mxu0 0.0
      %2190 = vmatprep.subr.mxu0 0.0
      %2191 = vmatpush1.msra.mxu0 0.0
      %2192 = vmatprep.subr.mxu0 0.0
      %2193 = vmatpush1.msra.mxu0 0.0
      %2194 = vmatprep.subr.mxu0 0.0
      %2195 = vmatpush1.msra.mxu0 0.0
      %2196 = vmatprep.subr.mxu0 0.0
      %2197 = vmatpush1.msra.mxu0 0.0
      %2198 = vmatprep.subr.mxu0 0.0
      %2199 = vmatpush1.msra.mxu0 0.0
      %2200 = vmatprep.subr.mxu0 0.0
      %2201 = vmatpush1.msra.mxu0 0.0
      %2202 = vmatprep.subr.mxu0 0.0
      %2203 = vmatpush1.msra.mxu0 0.0
      %2204 = vmatprep.subr.mxu0 0.0
      %2205 = vmatpush1.msra.mxu0 0.0
      %2206 = vmatprep.subr.mxu0 0.0
      %2207 = vmatpush1.msra.mxu0 0.0
      %2208 = vmatprep.subr.mxu0 0.0
      %2209 = vmatpush1.msra.mxu0 0.0
      %2210 = vmatprep.subr.mxu0 0.0
      %2211 = vmatpush1.msra.mxu0 0.0
      %2212 = vmatprep.subr.mxu0 0.0
      %2213 = vmatpush1.msra.mxu0 0.0
      %2214 = vmatprep.subr.mxu0 0.0
      %2215 = vmatpush1.msra.mxu0 0.0
      %2216 = vmatprep.subr.mxu0 0.0
      %2217 = vmatpush1.msra.mxu0 0.0
      %2218 = vmatprep.subr.mxu0 0.0
      %2219 = vmatpush1.msra.mxu0 0.0
      %2220 = vmatprep.subr.mxu0 0.0
      %2221 = vmatpush1.msra.mxu0 0.0
      %2222 = vmatprep.subr.mxu0 0.0
      %2223 = vmatpush1.msra.mxu0 0.0
      %2224 = vmatprep.subr.mxu0 0.0
      %2225 = vmatpush1.msra.mxu0 0.0
      %2226 = vmatprep.subr.mxu0 0.0
      %2227 = vmatpush1.msra.mxu0 0.0
      %2228 = vmatprep.subr.mxu0 0.0
      %2229 = vmatpush1.msra.mxu0 0.0
      %2230 = vmatprep.mubr.f32.mxu0 0.0
      %2231 = vmatmul.mubr.f32.gmra.mrb[0].mxu0 %v2067
      %v2232 = vpop.f32.mrb[0].mxu0
      %v2233 = vadd.f32 0.0, %v2232
      %v2234 = vpop.f32.mrb[0].mxu0
      %2235 = vmatprep.mubr.f32.mxu0 0.0
      %2236 = vmatmul.mubr.f32.gmra.mrb[0].mxu0 %v2070
      %v2237 = vpop.f32.mrb[0].mxu0
      %v2238 = vadd.f32 0.0, %v2237
      %v2239 = vpop.f32.mrb[0].mxu0
      %2240 = vmatprep.mubr.f32.mxu0 0.0
      %2241 = vmatmul.mubr.f32.gmra.mrb[0].mxu0 %v2073
      %v2242 = vpop.f32.mrb[0].mxu0
      %v2243 = vadd.f32 0.0, %v2242
      %v2244 = vpop.f32.mrb[0].mxu0
      %2245 = vmatprep.mubr.f32.mxu0 0.0
      %2246 = vmatmul.mubr.f32.gmra.mrb[0].mxu0 %v2076
      %v2247 = vpop.f32.mrb[0].mxu0
      %v2248 = vadd.f32 0.0, %v2247
      %v2249 = vpop.f32.mrb[0].mxu0
      %2250 = vmatprep.mubr.f32.mxu0 0.0
      %2251 = vmatmul.mubr.f32.gmra.mrb[0].mxu0 %v2079
      %v2252 = vpop.f32.mrb[0].mxu0
      %v2253 = vadd.f32 0.0, %v2252
      %v2254 = vpop.f32.mrb[0].mxu0
      %2255 = vmatprep.mubr.f32.mxu0 0.0
      %2256 = vmatmul.mubr.f32.gmra.mrb[0].mxu0 %v2082
      %v2257 = vpop.f32.mrb[0].mxu0
      %v2258 = vadd.f32 0.0, %v2257
      %v2259 = vpop.f32.mrb[0].mxu0
      %2260 = vmatprep.mubr.f32.mxu0 0.0
      %2261 = vmatmul.mubr.f32.gmra.mrb[0].mxu0 %v2085
      %v2262 = vpop.f32.mrb[0].mxu0
      %v2263 = vadd.f32 0.0, %v2262
      %v2264 = vpop.f32.mrb[0].mxu0
      %2265 = vmatprep.mubr.f32.mxu0 0.0
      %2266 = vmatmul.mubr.f32.gmra.mrb[0].mxu0 %v2088
      %v2267 = vpop.f32.mrb[0].mxu0
      %v2268 = vadd.f32 0.0, %v2267
      %v2269 = vpop.f32.mrb[0].mxu0
      %2270 = vmatprep.mubr.f32.mxu0 0.0
      %2271 = vmatmul.mubr.f32.gmra.mrb[0].mxu0 %v2091
      %v2272 = vpop.f32.mrb[0].mxu0
      %v2273 = vadd.f32 0.0, %v2272
      %v2274 = vpop.f32.mrb[0].mxu0
      %2275 = vmatprep.mubr.f32.mxu0 0.0
      %2276 = vmatmul.mubr.f32.gmra.mrb[0].mxu0 %v2094
      %v2277 = vpop.f32.mrb[0].mxu0
      %v2278 = vadd.f32 0.0, %v2277
      %v2279 = vpop.f32.mrb[0].mxu0
      %2280 = vmatprep.mubr.f32.mxu0 0.0
      %2281 = vmatmul.mubr.f32.gmra.mrb[0].mxu0 %v2097
      %v2282 = vpop.f32.mrb[0].mxu0
      %v2283 = vadd.f32 0.0, %v2282
      %v2284 = vpop.f32.mrb[0].mxu0
      %2285 = vmatprep.mubr.f32.mxu0 0.0
      %2286 = vmatmul.mubr.f32.gmra.mrb[0].mxu0 %v2100
      %v2287 = vpop.f32.mrb[0].mxu0
      %v2288 = vadd.f32 0.0, %v2287
      %v2289 = vpop.f32.mrb[0].mxu0
      %2290 = vmatprep.mubr.f32.mxu0 0.0
      %2291 = vmatmul.mubr.f32.gmra.mrb[0].mxu0 %v2103
      %v2292 = vpop.f32.mrb[0].mxu0
      %v2293 = vadd.f32 0.0, %v2292
      %v2294 = vpop.f32.mrb[0].mxu0
      %2295 = vmatprep.mubr.f32.mxu0 0.0
      %2296 = vmatmul.mubr.f32.gmra.mrb[0].mxu0 %v2106
      %v2297 = vpop.f32.mrb[0].mxu0
      %v2298 = vadd.f32 0.0, %v2297
      %v2299 = vpop.f32.mrb[0].mxu0
      %2300 = vmatprep.mubr.f32.mxu0 0.0
      %2301 = vmatmul.mubr.f32.gmra.mrb[0].mxu0 %v2109
      %v2302 = vpop.f32.mrb[0].mxu0
      %v2303 = vadd.f32 0.0, %v2302
      %v2304 = vpop.f32.mrb[0].mxu0
      %2305 = vmatprep.mubr.f32.mxu0 0.0
      %2306 = vmatmul.mubr.f32.gmra.mrb[0].mxu0 %v2112
      %v2307 = vpop.f32.mrb[0].mxu0
      %v2308 = vadd.f32 0.0, %v2307
      %v2309 = vpop.f32.mrb[0].mxu0
      %2310 = vmatprep.mubr.f32.mxu0 0.0
      %2311 = vmatmul.mubr.f32.gmra.mrb[0].mxu0 %v2115
      %v2312 = vpop.f32.mrb[0].mxu0
      %v2313 = vadd.f32 0.0, %v2312
      %v2314 = vpop.f32.mrb[0].mxu0
      %2315 = vmatprep.mubr.f32.mxu0 0.0
      %2316 = vmatmul.mubr.f32.gmra.mrb[0].mxu0 %v2118
      %v2317 = vpop.f32.mrb[0].mxu0
      %v2318 = vadd.f32 0.0, %v2317
      %v2319 = vpop.f32.mrb[0].mxu0
      %2320 = vmatprep.mubr.f32.mxu0 0.0
      %2321 = vmatmul.mubr.f32.gmra.mrb[0].mxu0 %v2121
      %v2322 = vpop.f32.mrb[0].mxu0
      %v2323 = vadd.f32 0.0, %v2322
      %v2324 = vpop.f32.mrb[0].mxu0
      %2325 = vmatprep.mubr.f32.mxu0 0.0
      %2326 = vmatmul.mubr.f32.gmra.mrb[0].mxu0 %v2124
      %v2327 = vpop.f32.mrb[0].mxu0
      %v2328 = vadd.f32 0.0, %v2327
      %v2329 = vpop.f32.mrb[0].mxu0
      %2330 = vmatprep.mubr.f32.mxu0 0.0
      %2331 = vmatmul.mubr.f32.gmra.mrb[0].mxu0 %v2127
      %v2332 = vpop.f32.mrb[0].mxu0
      %v2333 = vadd.f32 0.0, %v2332
      %v2334 = vpop.f32.mrb[0].mxu0
      %2335 = vmatprep.mubr.f32.mxu0 0.0
      %2336 = vmatmul.mubr.f32.gmra.mrb[0].mxu0 %v2130
      %v2337 = vpop.f32.mrb[0].mxu0
      %v2338 = vadd.f32 0.0, %v2337
      %v2339 = vpop.f32.mrb[0].mxu0
      %2340 = vmatprep.mubr.f32.mxu0 0.0
      %2341 = vmatmul.mubr.f32.gmra.mrb[0].mxu0 %v2133
      %v2342 = vpop.f32.mrb[0].mxu0
      %v2343 = vadd.f32 0.0, %v2342
      %v2344 = vpop.f32.mrb[0].mxu0
      %2345 = vmatprep.mubr.f32.mxu0 0.0
      %2346 = vmatmul.mubr.f32.gmra.mrb[0].mxu0 %v2136
      %v2347 = vpop.f32.mrb[0].mxu0
      %v2348 = vadd.f32 0.0, %v2347
      %v2349 = vpop.f32.mrb[0].mxu0
      %2350 = vmatprep.mubr.f32.mxu0 0.0
      %2351 = vmatmul.mubr.f32.gmra.mrb[0].mxu0 %v2139
      %v2352 = vpop.f32.mrb[0].mxu0
      %v2353 = vadd.f32 0.0, %v2352
      %v2354 = vpop.f32.mrb[0].mxu0
      %2355 = vmatprep.mubr.f32.mxu0 0.0
      %2356 = vmatmul.mubr.f32.gmra.mrb[0].mxu0 %v2142
      %v2357 = vpop.f32.mrb[0].mxu0
      %v2358 = vadd.f32 0.0, %v2357
      %v2359 = vpop.f32.mrb[0].mxu0
      %2360 = vmatprep.mubr.f32.mxu0 0.0
      %2361 = vmatmul.mubr.f32.gmra.mrb[0].mxu0 %v2145
      %v2362 = vpop.f32.mrb[0].mxu0
      %v2363 = vadd.f32 0.0, %v2362
      %v2364 = vpop.f32.mrb[0].mxu0
      %2365 = vmatprep.mubr.f32.mxu0 0.0
      %2366 = vmatmul.mubr.f32.gmra.mrb[0].mxu0 %v2148
      %v2367 = vpop.f32.mrb[0].mxu0
      %v2368 = vadd.f32 0.0, %v2367
      %v2369 = vpop.f32.mrb[0].mxu0
      %2370 = vmatprep.mubr.f32.mxu0 0.0
      %2371 = vmatmul.mubr.f32.gmra.mrb[0].mxu0 %v2151
      %v2372 = vpop.f32.mrb[0].mxu0
      %v2373 = vadd.f32 0.0, %v2372
      %v2374 = vpop.f32.mrb[0].mxu0
      %2375 = vmatprep.mubr.f32.mxu0 0.0
      %2376 = vmatmul.mubr.f32.gmra.mrb[0].mxu0 %v2154
      %v2377 = vpop.f32.mrb[0].mxu0
      %v2378 = vadd.f32 0.0, %v2377
      %v2379 = vpop.f32.mrb[0].mxu0
      %2380 = vmatprep.mubr.f32.mxu0 0.0
      %2381 = vmatmul.mubr.f32.gmra.mrb[0].mxu0 %v2157
      %v2382 = vpop.f32.mrb[0].mxu0
      %v2383 = vadd.f32 0.0, %v2382
      %v2384 = vpop.f32.mrb[0].mxu0
      %2385 = vmatprep.mubr.f32.mxu0 0.0
      %2386 = vmatmul.mubr.f32.gmra.mrb[0].mxu0 %v2160
      %v2387 = vpop.f32.mrb[0].mxu0
      %v2388 = vadd.f32 0.0, %v2387
      %v2389 = vpop.f32.mrb[0].mxu0
      %2390 = vdwg.mxu0
      %vm2391 = vcmask 130048
      %2392 = vst.msk [vmem:[%s197] sm:$0xff] %vm2391, %v2233
      %2393 = vst.msk [vmem:[%s197 + $0x8] sm:$0xff] %vm2391, %v2238
      %2394 = vst.msk [vmem:[%s197 + $0x10] sm:$0xff] %vm2391, %v2243
      %2395 = vst.msk [vmem:[%s197 + $0x18] sm:$0xff] %vm2391, %v2248
      %2396 = vst.msk [vmem:[%s197 + $0x20] sm:$0xff] %vm2391, %v2253
      %2397 = vst.msk [vmem:[%s197 + $0x28] sm:$0xff] %vm2391, %v2258
      %2398 = vst.msk [vmem:[%s197 + $0x30] sm:$0xff] %vm2391, %v2263
      %2399 = vst.msk [vmem:[%s197 + $0x38] sm:$0xff] %vm2391, %v2268
      %2400 = vst.msk [vmem:[%s197 + $0x40] sm:$0xff] %vm2391, %v2273
      %2401 = vst.msk [vmem:[%s197 + $0x48] sm:$0xff] %vm2391, %v2278
      %2402 = vst.msk [vmem:[%s197 + $0x50] sm:$0xff] %vm2391, %v2283
      %2403 = vst.msk [vmem:[%s197 + $0x58] sm:$0xff] %vm2391, %v2288
      %2404 = vst.msk [vmem:[%s197 + $0x60] sm:$0xff] %vm2391, %v2293
      %2405 = vst.msk [vmem:[%s197 + $0x68] sm:$0xff] %vm2391, %v2298
      %2406 = vst.msk [vmem:[%s197 + $0x70] sm:$0xff] %vm2391, %v2303
      %2407 = vst.msk [vmem:[%s197 + $0x78] sm:$0xff] %vm2391, %v2308
      %2408 = vst.msk [vmem:[%s197 + $0x80] sm:$0xff] %vm2391, %v2313
      %2409 = vst.msk [vmem:[%s197 + $0x88] sm:$0xff] %vm2391, %v2318
      %2410 = vst.msk [vmem:[%s197 + $0x90] sm:$0xff] %vm2391, %v2323
      %2411 = vst.msk [vmem:[%s197 + $0x98] sm:$0xff] %vm2391, %v2328
      %2412 = vst.msk [vmem:[%s197 + $0xa0] sm:$0xff] %vm2391, %v2333
      %2413 = vst.msk [vmem:[%s197 + $0xa8] sm:$0xff] %vm2391, %v2338
      %2414 = vst.msk [vmem:[%s197 + $0xb0] sm:$0xff] %vm2391, %v2343
      %2415 = vst.msk [vmem:[%s197 + $0xb8] sm:$0xff] %vm2391, %v2348
      %2416 = vst.msk [vmem:[%s197 + $0xc0] sm:$0xff] %vm2391, %v2353
      %2417 = vst.msk [vmem:[%s197 + $0xc8] sm:$0xff] %vm2391, %v2358
      %2418 = vst.msk [vmem:[%s197 + $0xd0] sm:$0xff] %vm2391, %v2363
      %2419 = vst.msk [vmem:[%s197 + $0xd8] sm:$0xff] %vm2391, %v2368
      %2420 = vst.msk [vmem:[%s197 + $0xe0] sm:$0xff] %vm2391, %v2373
      %2421 = vst.msk [vmem:[%s197 + $0xe8] sm:$0xff] %vm2391, %v2378
      %2422 = vst.msk [vmem:[%s197 + $0xf0] sm:$0xff] %vm2391, %v2383
      %2423 = vst.msk [vmem:[%s197 + $0xf8] sm:$0xff] %vm2391, %v2388
      %p2424 = scmp.lt.s32.totalorder %s15, 1
      %s2425 = scalar_select %p2424, %s15, 1
      %s2426 = smul.addr %s2425, 32
      %s2427 = smul.addr %s2426, 8
      %s2428 = scalar_lea.vmem %s4, %s2427
      // Predicated region
      $region37: #{preact_block_forward.2} parent=35 // pred_check
        %p2429 = pneg %p122
      $region38: #{preact_block_forward.2} parent=35 // pred_check_branch
        %2431 = sbr.rel (%p2429) target = $region40
      $region39: #{preact_block_forward.2} parent=35 // pred_region
        _
      $region40: #{preact_block_forward.2} parent=35 // pred_fallthru
        _
    $region36: #{preact_block_forward.2} parent=5 // pred_fallthru
      _
    %p2432 = scmp.le.s32.totalorder 2, %s10
    // Predicated region
    $region41: #{preact_block_forward.2} parent=5 // pred_check
      %p2433 = pneg %p2432
    $region42: #{preact_block_forward.2} parent=5 // pred_check_branch
      %2435 = sbr.rel (%p2433) target = $region44
    $region43: #{preact_block_forward.2} parent=5 // pred_region
      %s2436 = ssub.s32 %s10, 2
      // Predicated region
      $region45: #{preact_block_forward.2} parent=43 // pred_check
        %p2437 = pneg %p128
      $region46: #{preact_block_forward.2} parent=43 // pred_check_branch
        %2439 = sbr.rel (%p2437) target = $region48
      $region47: #{preact_block_forward.2} parent=43 // pred_region
        %p2440 = scmp.lt.s32.totalorder %s16, 1
        %s2441 = scalar_select %p2440, %s16, 1
        %s2442 = smul.addr %s2441, 32
        %s2443 = smul.addr %s2442, 8
        %s2444 = scalar_lea.vmem %s4, %s2443
      $region48: #{preact_block_forward.2} parent=43 // pred_fallthru
        _
    $region44: #{preact_block_forward.2} parent=5 // pred_fallthru
      _
  $region6: #{preact_block_forward.2} parent=0 // loop_footer
    %s14 = sadd.s32 1, %s10
  $region7: #{preact_block_forward.2} parent=0 // loop_footer_branch
    %9 = sbr.rel target = $region3
  $region8: #{preact_block_forward.2} parent=0 // loop_exit
    _

// kernel: preact_block_forward.3
$region0: #{preact_block_forward.3}
  #allocation0 [shape = 'u32[]', space=smem, size = 0x4, offset = 0x4, fixed_abs, tag = 'smem constant byte address 0x4 - core index']
  #allocation1 [shape = 'u32[144,128]{1,0:T(1,128)}', space=vmem, size = 0x12000, scoped, tag = 'internal scratch']
  #allocation2 [shape = 'f32[1,18,18,8]{3,2,1,0:T(8,128)}', space=vmem, size = 0x36000, scoped, tag = 'scratch operand']
  #allocation3 [shape = 'f32[256,72]{1,0:T(8,128)}', space=vmem, size = 0x20000, scoped, tag = 'scratch operand']
  %s0 = inlined_call_operand.vmem [shape: f32[2,16,16,16], index: 0, kind: input, shape index: {}]
  %s1 = inlined_call_operand.vmem [shape: f32[1,1,1,8], index: 1, kind: input, shape index: {}]
  %s2 = inlined_call_operand.vmem [shape: f32[1,1,1,8], index: 2, kind: input, shape index: {}]
  %s3 = inlined_call_operand.vmem [shape: f32[72,8], index: 3, kind: input, shape index: {}]
  %s4 = inlined_call_operand.vmem [shape: f32[2,16,16,8], index: 4, kind: output, shape index: {}]
  %s5 = sld [smem:[#allocation0]]
  $region49: #{preact_block_forward.3} parent=0
    _
  %s7 = ssub.s32 1, %s5
  %s8 = scalar_select 0, %s7, %s5
  loop: start=0, step=1, limit=4
  $region2: #{preact_block_forward.3} parent=0 // loop_pre_header
    _
  $region3: #{preact_block_forward.3} parent=0 // loop_header
    %s10 = sphi 0, %s14
    %p11 = scmp.ge.s32.totalorder %s10, 4
    %s20 = sphi 0, %s22
    %s23 = sphi 0, %s20
    %s24 = sphi 0, %s23
    %s40 = sphi 0, %s24
    %s44 = sphi 0, %s44
    %s46 = sphi 0, %s44
    %s47 = sphi 0, %s46
    %s61 = sphi 0, %s47
    %s65 = sphi 0, %s65
    %s67 = sphi 0, %s65
    %s68 = sphi 0, %s67
    %s82 = sphi 0, %s68
    %s86 = sphi 0, %s86
    %s88 = sphi 0, %s86
    %s89 = sphi 0, %s88
    %s103 = sphi 0, %s89
    %s109 = sphi 0, %s111
    %s112 = sphi 0, %s109
    %s113 = sphi 0, %s112
    %s129 = sphi 0, %s113
  $region4: #{preact_block_forward.3} parent=0 // loop_header_branch
    %13 = sbr.rel (%p11) target = $region8
  $region5: #{preact_block_forward.3} parent=0 // loop_body
    %s15 = ssub.s32 %s10, 1
    %s16 = ssub.s32 %s10, 2
    %s17 = sadd.s32 %s10, 1
    %s18 = ssub.s32 %s10, %s17
    %p19 = scmp.eq.s32.totalorder %s18, 0
    %s21 = sadd.s32 %s20, 1
    %s22 = scalar_select %p19, %s20, %s21
    %p25 = pneg %p19
    %p26 = scmp.eq.s32.totalorder %s10, 1
    %p27 = por %p25, %p26
    %p28 = scmp.ne.s32.totalorder %s20, %s23
    %p29 = scmp.eq.s32.totalorder %s10, 0
    %p30 = por %p28, %p29
    %p31 = scmp.ne.s32.totalorder %s20, %s23
    %p32 = scmp.eq.s32.totalorder %s15, 1
    %p33 = por %p31, %p32
    %p34 = scmp.ne.s32.totalorder %s23, %s24
    %p35 = scmp.eq.s32.totalorder %s15, 0
    %p36 = por %p34, %p35
    %p37 = scmp.ne.s32.totalorder %s23, %s24
    %p38 = scmp.eq.s32.totalorder %s16, 1
    %p39 = por %p37, %p38
    %p41 = scmp.ne.s32.totalorder %s24, %s40
    %p42 = scmp.eq.s32.totalorder %s16, 0
    %p43 = por %p41, %p42
    %s45 = sadd.s32 %s44, 1
    %p48 = scmp.eq.s32.totalorder %s10, 1
    %p49 = scmp.ne.s32.totalorder %s44, %s46
    %p50 = scmp.eq.s32.totalorder %s10, 0
    %p51 = por %p49, %p50
    %p52 = scmp.ne.s32.totalorder %s44, %s46
    %p53 = scmp.eq.s32.totalorder %s15, 1
    %p54 = por %p52, %p53
    %p55 = scmp.ne.s32.totalorder %s46, %s47
    %p56 = scmp.eq.s32.totalorder %s15, 0
    %p57 = por %p55, %p56
    %p58 = scmp.ne.s32.totalorder %s46, %s47
    %p59 = scmp.eq.s32.totalorder %s16, 1
    %p60 = por %p58, %p59
    %p62 = scmp.ne.s32.totalorder %s47, %s61
    %p63 = scmp.eq.s32.totalorder %s16, 0
    %p64 = por %p62, %p63
    %s66 = sadd.s32 %s65, 1
    %p69 = scmp.eq.s32.totalorder %s10, 1
    %p70 = scmp.ne.s32.totalorder %s65, %s67
    %p71 = scmp.eq.s32.totalorder %s10, 0
    %p72 = por %p70, %p71
    %p73 = scmp.ne.s32.totalorder %s65, %s67
    %p74 = scmp.eq.s32.totalorder %s15, 1
    %p75 = por %p73, %p74
    %p76 = scmp.ne.s32.totalorder %s67, %s68
    %p77 = scmp.eq.s32.totalorder %s15, 0
    %p78 = por %p76, %p77
    %p79 = scmp.ne.s32.totalorder %s67, %s68
    %p80 = scmp.eq.s32.totalorder %s16, 1
    %p81 = por %p79, %p80
    %p83 = scmp.ne.s32.totalorder %s68, %s82
    %p84 = scmp.eq.s32.totalorder %s16, 0
    %p85 = por %p83, %p84
    %s87 = sadd.s32 %s86, 1
    %p90 = scmp.eq.s32.totalorder %s10, 1
    %p91 = scmp.ne.s32.totalorder %s86, %s88
    %p92 = scmp.eq.s32.totalorder %s10, 0
    %p93 = por %p91, %p92
    %p94 = scmp.ne.s32.totalorder %s86, %s88
    %p95 = scmp.eq.s32.totalorder %s15, 1
    %p96 = por %p94, %p95
    %p97 = scmp.ne.s32.totalorder %s88, %s89
    %p98 = scmp.eq.s32.totalorder %s15, 0
    %p99 = por %p97, %p98
    %p100 = scmp.ne.s32.totalorder %s88, %s89
    %p101 = scmp.eq.s32.totalorder %s16, 1
    %p102 = por %p100, %p101
    %p104 = scmp.ne.s32.totalorder %s89, %s103
    %p105 = scmp.eq.s32.totalorder %s16, 0
    %p106 = por %p104, %p105
    %s107 = ssub.s32 %s10, %s17
    %p108 = scmp.eq.s32.totalorder %s107, 0
    %s110 = sadd.s32 %s109, 1
    %s111 = scalar_select %p108, %s109, %s110
    %p114 = pneg %p108
    %p115 = scmp.eq.s32.totalorder %s10, 1
    %p116 = por %p114, %p115
    %p117 = scmp.ne.s32.totalorder %s109, %s112
    %p118 = scmp.eq.s32.totalorder %s10, 0
    %p119 = por %p117, %p118
    %p120 = scmp.ne.s32.totalorder %s109, %s112
    %p121 = scmp.eq.s32.totalorder %s15, 1
    %p122 = por %p120, %p121
    %p123 = scmp.ne.s32.totalorder %s112, %s113
    %p124 = scmp.eq.s32.totalorder %s15, 0
    %p125 = por %p123, %p124
    %p126 = scmp.ne.s32.totalorder %s112, %s113
    %p127 = scmp.eq.s32.totalorder %s16, 1
    %p128 = por %p126, %p127
    %p130 = scmp.ne.s32.totalorder %s113, %s129
    %p131 = scmp.eq.s32.totalorder %s16, 0
    %p132 = por %p130, %p131
    %p133 = scmp.le.s32.totalorder 1, %s10
    %p134 = scmp.lt.s32.totalorder %s10, 3
    %p135 = pnand %p133, %p134
    %p136 = pneg %p135
    // Predicated region
    $region9: #{preact_block_forward.3} parent=5 // pred_check
      _
    $region10: #{preact_block_forward.3} parent=5 // pred_check_branch
      %138 = sbr.rel (%p135) target = $region12
    $region11: #{preact_block_forward.3} parent=5 // pred_region
      %s139 = ssub.s32 %s10, 1
      // Predicated region
      $region13: #{preact_block_forward.3} parent=11 // pred_check
        %p140 = pneg %p57
      $region14: #{preact_block_forward.3} parent=11 // pred_check_branch
        %142 = sbr.rel (%p140) target = $region16
      $region15: #{preact_block_forward.3} parent=11 // pred_region
        _
      $region16: #{preact_block_forward.3} parent=11 // pred_fallthru
        _
      // Predicated region
      $region17: #{preact_block_forward.3} parent=11 // pred_check
        %p143 = pneg %p78
      $region18: #{preact_block_forward.3} parent=11 // pred_check_branch
        %145 = sbr.rel (%p143) target = $region20
      $region19: #{preact_block_forward.3} parent=11 // pred_region
        _
      $region20: #{preact_block_forward.3} parent=11 // pred_fallthru
        _
      // Predicated region
      $region21: #{preact_block_forward.3} parent=11 // pred_check
        %p146 = pneg %p99
      $region22: #{preact_block_forward.3} parent=11 // pred_check_branch
        %148 = sbr.rel (%p146) target = $region24
      $region23: #{preact_block_forward.3} parent=11 // pred_region
        _
      $region24: #{preact_block_forward.3} parent=11 // pred_fallthru
        _
    $region12: #{preact_block_forward.3} parent=5 // pred_fallthru
      _
    %p149 = scmp.lt.s32.totalorder %s10, 2
    // Predicated region
    $region25: #{preact_block_forward.3} parent=5 // pred_check
      %p150 = pneg %p149
    $region26: #{preact_block_forward.3} parent=5 // pred_check_branch
      %152 = sbr.rel (%p150) target = $region28
    $region27: #{preact_block_forward.3} parent=5 // pred_region
      // Predicated region
      $region29: #{preact_block_forward.3} parent=27 // pred_check
        %p153 = pneg %p30
      $region30: #{preact_block_forward.3} parent=27 // pred_check_branch
        %155 = sbr.rel (%p153) target = $region32
      $region31: #{preact_block_forward.3} parent=27 // pred_region
        %p156 = scmp.lt.s32.totalorder %s10, 1
        %s157 = scalar_select %p156, %s10, 1
        %s158 = smul.addr %s157, 32
        %s159 = smul.addr %s158, 8
        %s160 = scalar_lea.vmem %s0, %s159
      $region32: #{preact_block_forward.3} parent=27 // pred_fallthru
        _
    $region28: #{preact_block_forward.3} parent=5 // pred_fallthru
      _
    %p161 = scmp.le.s32.totalorder 1, %s10
    %p162 = scmp.lt.s32.totalorder %s10, 3
    %p163 = pnand %p161, %p162
    %p164 = pneg %p163
    // Predicated region
    $region33: #{preact_block_forward.3} parent=5 // pred_check
      _
    $region34: #{preact_block_forward.3} parent=5 // pred_check_branch
      %166 = sbr.rel (%p163) target = $region36
    $region35: #{preact_block_forward.3} parent=5 // pred_region
      %s167 = ssub.s32 %s10, 1
      %p168 = scmp.lt.s32.totalorder %s15, 1
      %s169 = scalar_select %p168, %s15, 1
      %s170 = smul.addr %s169, 32
      %s171 = smul.addr %s170, 8
      %s172 = scalar_lea.vmem %s0, %s171
      %p173 = pneg %p36
      %p174 = pneg %p33
      %p175 = pneg %p57
      %p176 = pneg %p54
      %p177 = pneg %p78
      %p178 = pneg %p75
      %p179 = pneg %p99
      %p180 = pneg %p96
      %p181 = pneg %p125
      %p182 = pneg %p122
      %p183 = scmp.lt.s32.totalorder %s15, 1
      %s184 = scalar_select %p183, %s15, 1
      %s185 = smul.addr %s184, 32
      %s186 = smul.addr %s185, 8
      %s187 = scalar_lea.vmem %s4, %s186
      %p188 = scmp.lt.s32.totalorder %s15, 1
      %s189 = scalar_select %p188, %s15, 1
      %s190 = smul.addr %s189, 32
      %s191 = smul.addr %s190, 8
      %s192 = scalar_lea.vmem %s0, %s191
      %p193 = scmp.lt.s32.totalorder %s15, 1
      %s194 = scalar_select %p193, %s15, 1
      %s195 = smul.addr %s194, 32
      %s196 = smul.addr %s195, 8
      %s197 = scalar_lea.vmem %s4, %s196
      %vm198 = vcmask 64512
      %199 = vst.msk [vmem:[#allocation2] sm:$0xff] %vm198, 0.0
      %200 = vst.msk [vmem:[#allocation2 + $0x8] sm:$0xff] %vm198, 0.0
      %vm201 = vcmask 58368
      %202 = vst.msk [vmem:[#allocation2 + $0x10] sm:$0x3] %vm201, 0.0
      %s203 = scalar_lea.vmem [#allocation2], 408
      %204 = vst.msk [vmem:[%s203] sm:$0xff] %vm198, 0.0
      %205 = vst.msk [vmem:[%s203 + $0x8] sm:$0xff] %vm198, 0.0
      %206 = vst.msk [vmem:[%s203 + $0x10] sm:$0x3] %vm201, 0.0
      %vm207 = vcmask 57344
      %208 = vst.msk [vmem:[#allocation2] sm:$0x1] %vm207, 0.0
      %209 = vst.msk [vmem:[#allocation2 + $0x18] sm:$0x1] %vm207, 0.0
      %210 = vst.msk [vmem:[#allocation2 + $0x30] sm:$0x1] %vm207, 0.0
      %211 = vst.msk [vmem:[#allocation2 + $0x48] sm:$0x1] %vm207, 0.0
      %212 = vst.msk [vmem:[#allocation2 + $0x60] sm:$0x1] %vm207, 0.0
      %213 = vst.msk [vmem:[#allocation2 + $0x78] sm:$0x1] %vm207, 0.0
      %214 = vst.msk [vmem:[#allocation2 + $0x90] sm:$0x1] %vm207, 0.0
      %215 = vst.msk [vmem:[#allocation2 + $0xa8] sm:$0x1] %vm207, 0.0
      %216 = vst.msk [vmem:[#allocation2 + $0xc0] sm:$0x1] %vm207, 0.0
      %217 = vst.msk [vmem:[#allocation2 + $0xd8] sm:$0x1] %vm207, 0.0
      %218 = vst.msk [vmem:[#allocation2 + $0xf0] sm:$0x1] %vm207, 0.0
      %219 = vst.msk [vmem:[#allocation2 + $0x108] sm:$0x1] %vm207, 0.0
      %220 = vst.msk [vmem:[#allocation2 + $0x120] sm:$0x1] %vm207, 0.0
      %221 = vst.msk [vmem:[#allocation2 + $0x138] sm:$0x1] %vm207, 0.0
      %222 = vst.msk [vmem:[#allocation2 + $0x150] sm:$0x1] %vm207, 0.0
      %223 = vst.msk [vmem:[#allocation2 + $0x168] sm:$0x1] %vm207, 0.0
      %224 = vst.msk [vmem:[#allocation2 + $0x180] sm:$0x1] %vm207, 0.0
      %225 = vst.msk [vmem:[#allocation2 + $0x198] sm:$0x1] %vm207, 0.0
      %226 = vst.msk [vmem:[#allocation2 + $0x11] sm:$0x1] %vm207, 0.0
      %227 = vst.msk [vmem:[#allocation2 + $0x29] sm:$0x1] %vm207, 0.0
      %228 = vst.msk [vmem:[#allocation2 + $0x41] sm:$0x1] %vm207, 0.0
      %229 = vst.msk [vmem:[#allocation2 + $0x59] sm:$0x1] %vm207, 0.0
      %230 = vst.msk [vmem:[#allocation2 + $0x71] sm:$0x1] %vm207, 0.0
      %231 = vst.msk [vmem:[#allocation2 + $0x89] sm:$0x1] %vm207, 0.0
      %232 = vst.msk [vmem:[#allocation2 + $0xa1] sm:$0x1] %vm207, 0.0
      %233 = vst.msk [vmem:[#allocation2 + $0xb9] sm:$0x1] %vm207, 0.0
      %234 = vst.msk [vmem:[#allocation2 + $0xd1] sm:$0x1] %vm207, 0.0
      %235 = vst.msk [vmem:[#allocation2 + $0xe9] sm:$0x1] %vm207, 0.0
      %236 = vst.msk [vmem:[#allocation2 + $0x101] sm:$0x1] %vm207, 0.0
      %237 = vst.msk [vmem:[#allocation2 + $0x119] sm:$0x1] %vm207, 0.0
      %238 = vst.msk [vmem:[#allocation2 + $0x131] sm:$0x1] %vm207, 0.0
      %239 = vst.msk [vmem:[#allocation2 + $0x149] sm:$0x1] %vm207, 0.0
      %240 = vst.msk [vmem:[#allocation2 + $0x161] sm:$0x1] %vm207, 0.0
      %241 = vst.msk [vmem:[#allocation2 + $0x179] sm:$0x1] %vm207, 0.0
      %242 = vst.msk [vmem:[#allocation2 + $0x191] sm:$0x1] %vm207, 0.0
      %243 = vst.msk [vmem:[#allocation2 + $0x1a9] sm:$0x1] %vm207, 0.0
      %v244 = vld [vmem:[%s192] sm:$0xff]
      %v245 = vld [vmem:[%s192 + $0x8] sm:$0xff]
      %v246 = vld [vmem:[%s192 + $0x10] sm:$0xff]
      %v247 = vld [vmem:[%s192 + $0x18] sm:$0xff]
      %v248 = vld [vmem:[%s192 + $0x20] sm:$0xff]
      %v249 = vld [vmem:[%s192 + $0x28] sm:$0xff]
      %v250 = vld [vmem:[%s192 + $0x30] sm:$0xff]
      %v251 = vld [vmem:[%s192 + $0x38] sm:$0xff]
      %v252 = vld [vmem:[%s192 + $0x40] sm:$0xff]
      %v253 = vld [vmem:[%s192 + $0x48] sm:$0xff]
      %v254 = vld [vmem:[%s192 + $0x50] sm:$0xff]
      %v255 = vld [vmem:[%s192 + $0x58] sm:$0xff]
      %v256 = vld [vmem:[%s192 + $0x60] sm:$0xff]
      %v257 = vld [vmem:[%s192 + $0x68] sm:$0xff]
      %v258 = vld [vmem:[%s192 + $0x70] sm:$0xff]
      %v259 = vld [vmem:[%s192 + $0x78] sm:$0xff]
      %v260 = vld [vmem:[%s192 + $0x80] sm:$0xff]
      %v261 = vld [vmem:[%s192 + $0x88] sm:$0xff]
      %v262 = vld [vmem:[%s192 + $0x90] sm:$0xff]
      %v263 = vld [vmem:[%s192 + $0x98] sm:$0xff]
      %v264 = vld [vmem:[%s192 + $0xa0] sm:$0xff]
      %v265 = vld [vmem:[%s192 + $0xa8] sm:$0xff]
      %v266 = vld [vmem:[%s192 + $0xb0] sm:$0xff]
      %v267 = vld [vmem:[%s192 + $0xb8] sm:$0xff]
      %v268 = vld [vmem:[%s192 + $0xc0] sm:$0xff]
      %v269 = vld [vmem:[%s192 + $0xc8] sm:$0xff]
      %v270 = vld [vmem:[%s192 + $0xd0] sm:$0xff]
      %v271 = vld [vmem:[%s192 + $0xd8] sm:$0xff]
      %v272 = vld [vmem:[%s192 + $0xe0] sm:$0xff]
      %v273 = vld [vmem:[%s192 + $0xe8] sm:$0xff]
      %v274 = vld [vmem:[%s192 + $0xf0] sm:$0xff]
      %v275 = vld [vmem:[%s192 + $0xf8] sm:$0xff]
      %v276 = vld [vmem:[%s1] sm:$0x1]
      %v278 = vlaneseq
      %v279 = vshrl.u32 %v278, 7
      %v280 = vsub.s32 0, %v279
      %v281 = vrot.slane %v276, %v280
      %v283 = vmul.f32 %v244, %v281
      %v284 = vmul.f32 %v245, %v281
      %v285 = vmul.f32 %v246, %v281
      %v286 = vmul.f32 %v247, %v281
      %v287 = vmul.f32 %v248, %v281
      %v288 = vmul.f32 %v249, %v281
      %v289 = vmul.f32 %v250, %v281
      %v290 = vmul.f32 %v251, %v281
      %v291 = vmul.f32 %v252, %v281
      %v292 = vmul.f32 %v253, %v281
      %v293 = vmul.f32 %v254, %v281
      %v294 = vmul.f32 %v255, %v281
      %v295 = vmul.f32 %v256, %v281
      %v296 = vmul.f32 %v257, %v281
      %v297 = vmul.f32 %v258, %v281
      %v298 = vmul.f32 %v259, %v281
      %v299 = vmul.f32 %v260, %v281
      %v300 = vmul.f32 %v261, %v281
      %v301 = vmul.f32 %v262, %v281
      %v302 = vmul.f32 %v263, %v281
      %v303 = vmul.f32 %v264, %v281
      %v304 = vmul.f32 %v265, %v281
      %v305 = vmul.f32 %v266, %v281
      %v306 = vmul.f32 %v267, %v281
      %v307 = vmul.f32 %v268, %v281
      %v308 = vmul.f32 %v269, %v281
      %v309 = vmul.f32 %v270, %v281
      %v310 = vmul.f32 %v271, %v281
      %v311 = vmul.f32 %v272, %v281
      %v312 = vmul.f32 %v273, %v281
      %v313 = vmul.f32 %v274, %v281
      %v314 = vmul.f32 %v275, %v281
      %v315 = vld [vmem:[%s2] sm:$0x1]
      %v317 = vlaneseq
      %v318 = vshrl.u32 %v317, 7
      %v319 = vsub.s32 0, %v318
      %v320 = vrot.slane %v315, %v319
      %v322 = vadd.f32 %v283, %v320
      %v323 = vadd.f32 %v284, %v320
      %v324 = vadd.f32 %v285, %v320
      %v325 = vadd.f32 %v286, %v320
      %v326 = vadd.f32 %v287, %v320
      %v327 = vadd.f32 %v288, %v320
      %v328 = vadd.f32 %v289, %v320
      %v329 = vadd.f32 %v290, %v320
      %v330 = vadd.f32 %v291, %v320
      %v331 = vadd.f32 %v292, %v320
      %v332 = vadd.f32 %v293, %v320
      %v333 = vadd.f32 %v294, %v320
      %v334 = vadd.f32 %v295, %v320
      %v335 = vadd.f32 %v296, %v320
      %v336 = vadd.f32 %v297, %v320
      %v337 = vadd.f32 %v298, %v320
      %v338 = vadd.f32 %v299, %v320
      %v339 = vadd.f32 %v300, %v320
      %v340 = vadd.f32 %v301, %v320
      %v341 = vadd.f32 %v302, %v320
      %v342 = vadd.f32 %v303, %v320
      %v343 = vadd.f32 %v304, %v320
      %v344 = vadd.f32 %v305, %v320
      %v345 = vadd.f32 %v306, %v320
      %v346 = vadd.f32 %v307, %v320
      %v347 = vadd.f32 %v308, %v320
      %v348 = vadd.f32 %v309, %v320
      %v349 = vadd.f32 %v310, %v320
      %v350 = vadd.f32 %v311, %v320
      %v351 = vadd.f32 %v312, %v320
      %v352 = vadd.f32 %v313, %v320
      %v353 = vadd.f32 %v314, %v320
      %v354 = vmax.f32 %v322, 0.0
      %v355 = vmax.f32 %v323, 0.0
      %v356 = vmax.f32 %v324, 0.0
      %v357 = vmax.f32 %v325, 0.0
      %v358 = vmax.f32 %v326, 0.0
      %v359 = vmax.f32 %v327, 0.0
      %v360 = vmax.f32 %v328, 0.0
      %v361 = vmax.f32 %v329, 0.0
      %v362 = vmax.f32 %v330, 0.0
      %v363 = vmax.f32 %v331, 0.0
      %v364 = vmax.f32 %v332, 0.0
      %v365 = vmax.f32 %v333, 0.0
      %v366 = vmax.f32 %v334, 0.0
      %v367 = vmax.f32 %v335, 0.0
      %v368 = vmax.f32 %v336, 0.0
      %v369 = vmax.f32 %v337, 0.0
      %v370 = vmax.f32 %v338, 0.0
      %v371 = vmax.f32 %v339, 0.0
      %v372 = vmax.f32 %v340, 0.0
      %v373 = vmax.f32 %v341, 0.0
      %v374 = vmax.f32 %v342, 0.0
      %v375 = vmax.f32 %v343, 0.0
      %v376 = vmax.f32 %v344, 0.0
      %v377 = vmax.f32 %v345, 0.0
      %v378 = vmax.f32 %v346, 0.0
      %v379 = vmax.f32 %v347, 0.0
      %v380 = vmax.f32 %v348, 0.0
      %v381 = vmax.f32 %v349, 0.0
      %v382 = vmax.f32 %v350, 0.0
      %v383 = vmax.f32 %v351, 0.0
      %v384 = vmax.f32 %v352, 0.0
      %v385 = vmax.f32 %v353, 0.0
      %s386 = scalar_lea.vmem [#allocation2], 24
      %387 = vst.msk [vmem:[%s386 + $0x1] sm:$0xff] %vm198, %v354
      %388 = vst.msk [vmem:[%s386 + $0x9] sm:$0xff] %vm198, %v355
      %389 = vst.msk [vmem:[%s386 + $0x19] sm:$0xff] %vm198, %v356
      %390 = vst.msk [vmem:[%s386 + $0x21] sm:$0xff] %vm198, %v357
      %391 = vst.msk [vmem:[%s386 + $0x31] sm:$0xff] %vm198, %v358
      %392 = vst.msk [vmem:[%s386 + $0x39] sm:$0xff] %vm198, %v359
      %393 = vst.msk [vmem:[%s386 + $0x49] sm:$0xff] %vm198, %v360
      %394 = vst.msk [vmem:[%s386 + $0x51] sm:$0xff] %vm198, %v361
      %395 = vst.msk [vmem:[%s386 + $0x61] sm:$0xff] %vm198, %v362
      %396 = vst.msk [vmem:[%s386 + $0x69] sm:$0xff] %vm198, %v363
      %397 = vst.msk [vmem:[%s386 + $0x79] sm:$0xff] %vm198, %v364
      %398 = vst.msk [vmem:[%s386 + $0x81] sm:$0xff] %vm198, %v365
      %399 = vst.msk [vmem:[%s386 + $0x91] sm:$0xff] %vm198, %v366
      %400 = vst.msk [vmem:[%s386 + $0x99] sm:$0xff] %vm198, %v367
      %401 = vst.msk [vmem:[%s386 + $0xa9] sm:$0xff] %vm198, %v368
      %402 = vst.msk [vmem:[%s386 + $0xb1] sm:$0xff] %vm198, %v369
      %403 = vst.msk [vmem:[%s386 + $0xc1] sm:$0xff] %vm198, %v370
      %404 = vst.msk [vmem:[%s386 + $0xc9] sm:$0xff] %vm198, %v371
      %405 = vst.msk [vmem:[%s386 + $0xd9] sm:$0xff] %vm198, %v372
      %406 = vst.msk [vmem:[%s386 + $0xe1] sm:$0xff] %vm198, %v373
      %407 = vst.msk [vmem:[%s386 + $0xf1] sm:$0xff] %vm198, %v374
      %408 = vst.msk [vmem:[%s386 + $0xf9] sm:$0xff] %vm198, %v375
      %409 = vst.msk [vmem:[%s386 + $0x109] sm:$0xff] %vm198, %v376
      %410 = vst.msk [vmem:[%s386 + $0x111] sm:$0xff] %vm198, %v377
      %411 = vst.msk [vmem:[%s386 + $0x121] sm:$0xff] %vm198, %v378
      %412 = vst.msk [vmem:[%s386 + $0x129] sm:$0xff] %vm198, %v379
      %413 = vst.msk [vmem:[%s386 + $0x139] sm:$0xff] %vm198, %v380
      %414 = vst.msk [vmem:[%s386 + $0x141] sm:$0xff] %vm198, %v381
      %415 = vst.msk [vmem:[%s386 + $0x151] sm:$0xff] %vm198, %v382
      %416 = vst.msk [vmem:[%s386 + $0x159] sm:$0xff] %vm198, %v383
      %417 = vst.msk [vmem:[%s386 + $0x169] sm:$0xff] %vm198, %v384
      %418 = vst.msk [vmem:[%s386 + $0x171] sm:$0xff] %vm198, %v385
      %v419 = vld [vmem:[#allocation2] sm:$0xff]
      %v420 = vld [vmem:[#allocation2 + $0x8] sm:$0xff]
      %v421 = vld [vmem:[#allocation2 + $0x18] sm:$0xff]
      %v422 = vld [vmem:[#allocation2 + $0x20] sm:$0xff]
      %v423 = vld [vmem:[#allocation2 + $0x30] sm:$0xff]
      %v424 = vld [vmem:[#allocation2 + $0x38] sm:$0xff]
      %v425 = vld [vmem:[#allocation2 + $0x48] sm:$0xff]
      %v426 = vld [vmem:[#allocation2 + $0x50] sm:$0xff]
      %v427 = vld [vmem:[#allocation2 + $0x60] sm:$0xff]
      %v428 = vld [vmem:[#allocation2 + $0x68] sm:$0xff]
      %v429 = vld [vmem:[#allocation2 + $0x78] sm:$0xff]
      %v430 = vld [vmem:[#allocation2 + $0x80] sm:$0xff]
      %v431 = vld [vmem:[#allocation2 + $0x90] sm:$0xff]
      %v432 = vld [vmem:[#allocation2 + $0x98] sm:$0xff]
      %v433 = vld [vmem:[#allocation2 + $0xa8] sm:$0xff]
      %v434 = vld [vmem:[#allocation2 + $0xb0] sm:$0xff]
      %v435 = vld [vmem:[#allocation2 + $0xc0] sm:$0xff]
      %v436 = vld [vmem:[#allocation2 + $0xc8] sm:$0xff]
      %v437 = vld [vmem:[#allocation2 + $0xd8] sm:$0xff]
      %v438 = vld [vmem:[#allocation2 + $0xe0] sm:$0xff]
      %v439 = vld [vmem:[#allocation2 + $0xf0] sm:$0xff]
      %v440 = vld [vmem:[#allocation2 + $0xf8] sm:$0xff]
      %v441 = vld [vmem:[#allocation2 + $0x108] sm:$0xff]
      %v442 = vld [vmem:[#allocation2 + $0x110] sm:$0xff]
      %v443 = vld [vmem:[#allocation2 + $0x120] sm:$0xff]
      %v444 = vld [vmem:[#allocation2 + $0x128] sm:$0xff]
      %v445 = vld [vmem:[#allocation2 + $0x138] sm:$0xff]
      %v446 = vld [vmem:[#allocation2 + $0x140] sm:$0xff]
      %v447 = vld [vmem:[#allocation2 + $0x150] sm:$0xff]
      %v448 = vld [vmem:[#allocation2 + $0x158] sm:$0xff]
      %v449 = vld [vmem:[#allocation2 + $0x168] sm:$0xff]
      %v450 = vld [vmem:[#allocation2 + $0x170] sm:$0xff]
      %451 = vst.msk [vmem:[#allocation3] sm:$0xff] %vm198, %v419
      %452 = vst.msk [vmem:[#allocation3 + $0x8] sm:$0xff] %vm198, %v420
      %453 = vst.msk [vmem:[#allocation3 + $0x10] sm:$0xff] %vm198, %v421
      %454 = vst.msk [vmem:[#allocation3 + $0x18] sm:$0xff] %vm198, %v422
      %455 = vst.msk [vmem:[#allocation3 + $0x20] sm:$0xff] %vm198, %v423
      %456 = vst.msk [vmem:[#allocation3 + $0x28] sm:$0xff] %vm198, %v424
      %457 = vst.msk [vmem:[#allocation3 + $0x30] sm:$0xff] %vm198, %v425
      %458 = vst.msk [vmem:[#allocation3 + $0x38] sm:$0xff] %vm198, %v426
      %459 = vst.msk [vmem:[#allocation3 + $0x40] sm:$0xff] %vm198, %v427
      %460 = vst.msk [vmem:[#allocation3 + $0x48] sm:$0xff] %vm198, %v428
      %461 = vst.msk [vmem:[#allocation3 + $0x50] sm:$0xff] %vm198, %v429
      %462 = vst.msk [vmem:[#allocation3 + $0x58] sm:$0xff] %vm198, %v430
      %463 = vst.msk [vmem:[#allocation3 + $0x60] sm:$0xff] %vm198, %v431
      %464 = vst.msk [vmem:[#allocation3 + $0x68] sm:$0xff] %vm198, %v432
      %465 = vst.msk [vmem:[#allocation3 + $0x70] sm:$0xff] %vm198, %v433
      %466 = vst.msk [vmem:[#allocation3 + $0x78] sm:$0xff] %vm198, %v434
      %467 = vst.msk [vmem:[#allocation3 + $0x80] sm:$0xff] %vm198, %v435
      %468 = vst.msk [vmem:[#allocation3 + $0x88] sm:$0xff] %vm198, %v436
      %469 = vst.msk [vmem:[#allocation3 + $0x90] sm:$0xff] %vm198, %v437
      %470 = vst.msk [vmem:[#allocation3 + $0x98] sm:$0xff] %vm198, %v438
      %471 = vst.msk [vmem:[#allocation3 + $0xa0] sm:$0xff] %vm198, %v439
      %472 = vst.msk [vmem:[#allocation3 + $0xa8] sm:$0xff] %vm198, %v440
      %473 = vst.msk [vmem:[#allocation3 + $0xb0] sm:$0xff] %vm198, %v441
      %474 = vst.msk [vmem:[#allocation3 + $0xb8] sm:$0xff] %vm198, %v442
      %475 = vst.msk [vmem:[#allocation3 + $0xc0] sm:$0xff] %vm198, %v443
      %476 = vst.msk [vmem:[#allocation3 + $0xc8] sm:$0xff] %vm198, %v444
      %477 = vst.msk [vmem:[#allocation3 + $0xd0] sm:$0xff] %vm198, %v445
      %478 = vst.msk [vmem:[#allocation3 + $0xd8] sm:$0xff] %vm198, %v446
      %479 = vst.msk [vmem:[#allocation3 + $0xe0] sm:$0xff] %vm198, %v447
      %480 = vst.msk [vmem:[#allocation3 + $0xe8] sm:$0xff] %vm198, %v448
      %481 = vst.msk [vmem:[#allocation3 + $0xf0] sm:$0xff] %vm198, %v449
      %482 = vst.msk [vmem:[#allocation3 + $0xf8] sm:$0xff] %vm198, %v450
      %v483 = vld [vmem:[#allocation2 + $0x1] sm:$0xff]
      %v484 = vld [vmem:[#allocation2 + $0x9] sm:$0xff]
      %v485 = vld [vmem:[#allocation2 + $0x19] sm:$0xff]
      %v486 = vld [vmem:[#allocation2 + $0x21] sm:$0xff]
      %v487 = vld [vmem:[#allocation2 + $0x31] sm:$0xff]
      %v488 = vld [vmem:[#allocation2 + $0x39] sm:$0xff]
      %v489 = vld [vmem:[#allocation2 + $0x49] sm:$0xff]
      %v490 = vld [vmem:[#allocation2 + $0x51] sm:$0xff]
      %v491 = vld [vmem:[#allocation2 + $0x61] sm:$0xff]
      %v492 = vld [vmem:[#allocation2 + $0x69] sm:$0xff]
      %v493 = vld [vmem:[#allocation2 + $0x79] sm:$0xff]
      %v494 = vld [vmem:[#allocation2 + $0x81] sm:$0xff]
      %v495 = vld [vmem:[#allocation2 + $0x91] sm:$0xff]
      %v496 = vld [vmem:[#allocation2 + $0x99] sm:$0xff]
      %v497 = vld [vmem:[#allocation2 + $0xa9] sm:$0xff]
      %v498 = vld [vmem:[#allocation2 + $0xb1] sm:$0xff]
      %v499 = vld [vmem:[#allocation2 + $0xc1] sm:$0xff]
      %v500 = vld [vmem:[#allocation2 + $0xc9] sm:$0xff]
      %v501 = vld [vmem:[#allocation2 + $0xd9] sm:$0xff]
      %v502 = vld [vmem:[#allocation2 + $0xe1] sm:$0xff]
      %v503 = vld [vmem:[#allocation2 + $0xf1] sm:$0xff]
      %v504 = vld [vmem:[#allocation2 + $0xf9] sm:$0xff]
      %v505 = vld [vmem:[#allocation2 + $0x109] sm:$0xff]
      %v506 = vld [vmem:[#allocation2 + $0x111] sm:$0xff]
      %v507 = vld [vmem:[#allocation2 + $0x121] sm:$0xff]
      %v508 = vld [vmem:[#allocation2 + $0x129] sm:$0xff]
      %v509 = vld [vmem:[#allocation2 + $0x139] sm:$0xff]
      %v510 = vld [vmem:[#allocation2 + $0x141] sm:$0xff]
      %v511 = vld [vmem:[#allocation2 + $0x151] sm:$0xff]
      %v512 = vld [vmem:[#allocation2 + $0x159] sm:$0xff]
      %v513 = vld [vmem:[#allocation2 + $0x169] sm:$0xff]
      %v514 = vld [vmem:[#allocation2 + $0x171] sm:$0xff]
      %547 = vrot.lane.b32.xlu0 %v483, 8
      %v548 = vpop.permute.xlu0 %547
      %549 = vrot.lane.b32.xlu0 %v484, 8
      %v550 = vpop.permute.xlu0 %549
      %551 = vrot.lane.b32.xlu0 %v485, 8
      %v552 = vpop.permute.xlu0 %551
      %553 = vrot.lane.b32.xlu0 %v486, 8
      %v554 = vpop.permute.xlu0 %553
      %555 = vrot.lane.b32.xlu0 %v487, 8
      %v556 = vpop.permute.xlu0 %555
      %557 = vrot.lane.b32.xlu0 %v488, 8
      %v558 = vpop.permute.xlu0 %557
      %559 = vrot.lane.b32.xlu0 %v489, 8
      %v560 = vpop.permute.xlu0 %559
      %561 = vrot.lane.b32.xlu0 %v490, 8
      %v562 = vpop.permute.xlu0 %561
      %563 = vrot.lane.b32.xlu0 %v491, 8
      %v564 = vpop.permute.xlu0 %563
      %565 = vrot.lane.b32.xlu0 %v492, 8
      %v566 = vpop.permute.xlu0 %565
      %567 = vrot.lane.b32.xlu0 %v493, 8
      %v568 = vpop.permute.xlu0 %567
      %569 = vrot.lane.b32.xlu0 %v494, 8
      %v570 = vpop.permute.xlu0 %569
      %571 = vrot.lane.b32.xlu0 %v495, 8
      %v572 = vpop.permute.xlu0 %571
      %573 = vrot.lane.b32.xlu0 %v496, 8
      %v574 = vpop.permute.xlu0 %573
      %575 = vrot.lane.b32.xlu0 %v497, 8
      %v576 = vpop.permute.xlu0 %575
      %577 = vrot.lane.b32.xlu0 %v498, 8
      %v578 = vpop.permute.xlu0 %577
      %579 = vrot.lane.b32.xlu0 %v499, 8
      %v580 = vpop.permute.xlu0 %579
      %581 = vrot.lane.b32.xlu0 %v500, 8
      %v582 = vpop.permute.xlu0 %581
      %583 = vrot.lane.b32.xlu0 %v501, 8
      %v584 = vpop.permute.xlu0 %583
      %585 = vrot.lane.b32.xlu0 %v502, 8
      %v586 = vpop.permute.xlu0 %585
      %587 = vrot.lane.b32.xlu0 %v503, 8
      %v588 = vpop.permute.xlu0 %587
      %589 = vrot.lane.b32.xlu0 %v504, 8
      %v590 = vpop.permute.xlu0 %589
      %591 = vrot.lane.b32.xlu0 %v505, 8
      %v592 = vpop.permute.xlu0 %591
      %593 = vrot.lane.b32.xlu0 %v506, 8
      %v594 = vpop.permute.xlu0 %593
      %595 = vrot.lane.b32.xlu0 %v507, 8
      %v596 = vpop.permute.xlu0 %595
      %597 = vrot.lane.b32.xlu0 %v508, 8
      %v598 = vpop.permute.xlu0 %597
      %599 = vrot.lane.b32.xlu0 %v509, 8
      %v600 = vpop.permute.xlu0 %599
      %601 = vrot.lane.b32.xlu0 %v510, 8
      %v602 = vpop.permute.xlu0 %601
      %603 = vrot.lane.b32.xlu0 %v511, 8
      %v604 = vpop.permute.xlu0 %603
      %605 = vrot.lane.b32.xlu0 %v512, 8
      %v606 = vpop.permute.xlu0 %605
      %607 = vrot.lane.b32.xlu0 %v513, 8
      %v608 = vpop.permute.xlu0 %607
      %609 = vrot.lane.b32.xlu0 %v514, 8
      %v610 = vpop.permute.xlu0 %609
      %vm643 = vcmask 130112
      %644 = vst.msk [vmem:[#allocation3] sm:$0xff] %vm643, %v548
      %645 = vst.msk [vmem:[#allocation3 + $0x8] sm:$0xff] %vm643, %v550
      %646 = vst.msk [vmem:[#allocation3 + $0x10] sm:$0xff] %vm643, %v552
      %647 = vst.msk [vmem:[#allocation3 + $0x18] sm:$0xff] %vm643, %v554
      %648 = vst.msk [vmem:[#allocation3 + $0x20] sm:$0xff] %vm643, %v556
      %649 = vst.msk [vmem:[#allocation3 + $0x28] sm:$0xff] %vm643, %v558
      %650 = vst.msk [vmem:[#allocation3 + $0x30] sm:$0xff] %vm643, %v560
      %651 = vst.msk [vmem:[#allocation3 + $0x38] sm:$0xff] %vm643, %v562
      %652 = vst.msk [vmem:[#allocation3 + $0x40] sm:$0xff] %vm643, %v564
      %653 = vst.msk [vmem:[#allocation3 + $0x48] sm:$0xff] %vm643, %v566
      %654 = vst.msk [vmem:[#allocation3 + $0x50] sm:$0xff] %vm643, %v568
      %655 = vst.msk [vmem:[#allocation3 + $0x58] sm:$0xff] %vm643, %v570
      %656 = vst.msk [vmem:[#allocation3 + $0x60] sm:$0xff] %vm643, %v572
      %657 = vst.msk [vmem:[#allocation3 + $0x68] sm:$0xff] %vm643, %v574
      %658 = vst.msk [vmem:[#allocation3 + $0x70] sm:$0xff] %vm643, %v576
      %659 = vst.msk [vmem:[#allocation3 + $0x78] sm:$0xff] %vm643, %v578
      %660 = vst.msk [vmem:[#allocation3 + $0x80] sm:$0xff] %vm643, %v580
      %661 = vst.msk [vmem:[#allocation3 + $0x88] sm:$0xff] %vm643, %v582
      %662 = vst.msk [vmem:[#allocation3 + $0x90] sm:$0xff] %vm643, %v584
      %663 = vst.msk [vmem:[#allocation3 + $0x98] sm:$0xff] %vm643, %v586
      %664 = vst.msk [vmem:[#allocation3 + $0xa0] sm:$0xff] %vm643, %v588
      %665 = vst.msk [vmem:[#allocation3 + $0xa8] sm:$0xff] %vm643, %v590
      %666 = vst.msk [vmem:[#allocation3 + $0xb0] sm:$0xff] %vm643, %v592
      %667 = vst.msk [vmem:[#allocation3 + $0xb8] sm:$0xff] %vm643, %v594
      %668 = vst.msk [vmem:[#allocation3 + $0xc0] sm:$0xff] %vm643, %v596
      %669 = vst.msk [vmem:[#allocation3 + $0xc8] sm:$0xff] %vm643, %v598
      %670 = vst.msk [vmem:[#allocation3 + $0xd0] sm:$0xff] %vm643, %v600
      %671 = vst.msk [vmem:[#allocation3 + $0xd8] sm:$0xff] %vm643, %v602
      %672 = vst.msk [vmem:[#allocation3 + $0xe0] sm:$0xff] %vm643, %v604
      %673 = vst.msk [vmem:[#allocation3 + $0xe8] sm:$0xff] %vm643, %v606
      %674 = vst.msk [vmem:[#allocation3 + $0xf0] sm:$0xff] %vm643, %v608
      %675 = vst.msk [vmem:[#allocation3 + $0xf8] sm:$0xff] %vm643, %v610
      %v676 = vld [vmem:[#allocation2 + $0x2] sm:$0xff]
      %v677 = vld [vmem:[#allocation2 + $0xa] sm:$0xff]
      %v678 = vld [vmem:[#allocation2 + $0x1a] sm:$0xff]
      %v679 = vld [vmem:[#allocation2 + $0x22] sm:$0xff]
      %v680 = vld [vmem:[#allocation2 + $0x32] sm:$0xff]
      %v681 = vld [vmem:[#allocation2 + $0x3a] sm:$0xff]
      %v682 = vld [vmem:[#allocation2 + $0x4a] sm:$0xff]
      %v683 = vld [vmem:[#allocation2 + $0x52] sm:$0xff]
      %v684 = vld [vmem:[#allocation2 + $0x62] sm:$0xff]
      %v685 = vld [vmem:[#allocation2 + $0x6a] sm:$0xff]
      %v686 = vld [vmem:[#allocation2 + $0x7a] sm:$0xff]
      %v687 = vld [vmem:[#allocation2 + $0x82] sm:$0xff]
      %v688 = vld [vmem:[#allocation2 + $0x92] sm:$0xff]
      %v689 = vld [vmem:[#allocation2 + $0x9a] sm:$0xff]
      %v690 = vld [vmem:[#allocation2 + $0xaa] sm:$0xff]
      %v691 = vld [vmem:[#allocation2 + $0xb2] sm:$0xff]
      %v692 = vld [vmem:[#allocation2 + $0xc2] sm:$0xff]
      %v693 = vld [vmem:[#allocation2 + $0xca] sm:$0xff]
      %v694 = vld [vmem:[#allocation2 + $0xda] sm:$0xff]
      %v695 = vld [vmem:[#allocation2 + $0xe2] sm:$0xff]
      %v696 = vld [vmem:[#allocation2 + $0xf2] sm:$0xff]
      %v697 = vld [vmem:[#allocation2 + $0xfa] sm:$0xff]
      %v698 = vld [vmem:[#allocation2 + $0x10a] sm:$0xff]
      %v699 = vld [vmem:[#allocation2 + $0x112] sm:$0xff]
      %v700 = vld [vmem:[#allocation2 + $0x122] sm:$0xff]
      %v701 = vld [vmem:[#allocation2 + $0x12a] sm:$0xff]
      %v702 = vld [vmem:[#allocation2 + $0x13a] sm:$0xff]
      %v703 = vld [vmem:[#allocation2 + $0x142] sm:$0xff]
      %v704 = vld [vmem:[#allocation2 + $0x152] sm:$0xff]
      %v705 = vld [vmem:[#allocation2 + $0x15a] sm:$0xff]
      %v706 = vld [vmem:[#allocation2 + $0x16a] sm:$0xff]
      %v707 = vld [vmem:[#allocation2 + $0x172] sm:$0xff]
      %740 = vrot.lane.b32.xlu0 %v676, 16
      %v741 = vpop.permute.xlu0 %740
      %742 = vrot.lane.b32.xlu0 %v677, 16
      %v743 = vpop.permute.xlu0 %742
      %744 = vrot.lane.b32.xlu0 %v678, 16
      %v745 = vpop.permute.xlu0 %744
      %746 = vrot.lane.b32.xlu0 %v679, 16
      %v747 = vpop.permute.xlu0 %746
      %748 = vrot.lane.b32.xlu0 %v680, 16
      %v749 = vpop.permute.xlu0 %748
      %750 = vrot.lane.b32.xlu0 %v681, 16
      %v751 = vpop.permute.xlu0 %750
      %752 = vrot.lane.b32.xlu0 %v682, 16
      %v753 = vpop.permute.xlu0 %752
      %754 = vrot.lane.b32.xlu0 %v683, 16
      %v755 = vpop.permute.xlu0 %754
      %756 = vrot.lane.b32.xlu0 %v684, 16
      %v757 = vpop.permute.xlu0 %756
      %758 = vrot.lane.b32.xlu0 %v685, 16
      %v759 = vpop.permute.xlu0 %758
      %760 = vrot.lane.b32.xlu0 %v686, 16
      %v761 = vpop.permute.xlu0 %760
      %762 = vrot.lane.b32.xlu0 %v687, 16
      %v763 = vpop.permute.xlu0 %762
      %764 = vrot.lane.b32.xlu0 %v688, 16
      %v765 = vpop.permute.xlu0 %764
      %766 = vrot.lane.b32.xlu0 %v689, 16
      %v767 = vpop.permute.xlu0 %766
      %768 = vrot.lane.b32.xlu0 %v690, 16
      %v769 = vpop.permute.xlu0 %768
      %770 = vrot.lane.b32.xlu0 %v691, 16
      %v771 = vpop.permute.xlu0 %770
      %772 = vrot.lane.b32.xlu0 %v692, 16
      %v773 = vpop.permute.xlu0 %772
      %774 = vrot.lane.b32.xlu0 %v693, 16
      %v775 = vpop.permute.xlu0 %774
      %776 = vrot.lane.b32.xlu0 %v694, 16
      %v777 = vpop.permute.xlu0 %776
      %778 = vrot.lane.b32.xlu0 %v695, 16
      %v779 = vpop.permute.xlu0 %778
      %780 = vrot.lane.b32.xlu0 %v696, 16
      %v781 = vpop.permute.xlu0 %780
      %782 = vrot.lane.b32.xlu0 %v697, 16
      %v783 = vpop.permute.xlu0 %782
      %784 = vrot.lane.b32.xlu0 %v698, 16
      %v785 = vpop.permute.xlu0 %784
      %786 = vrot.lane.b32.xlu0 %v699, 16
      %v787 = vpop.permute.xlu0 %786
      %788 = vrot.lane.b32.xlu0 %v700, 16
      %v789 = vpop.permute.xlu0 %788
      %790 = vrot.lane.b32.xlu0 %v701, 16
      %v791 = vpop.permute.xlu0 %790
      %792 = vrot.lane.b32.xlu0 %v702, 16
      %v793 = vpop.permute.xlu0 %792
      %794 = vrot.lane.b32.xlu0 %v703, 16
      %v795 = vpop.permute.xlu0 %794
      %796 = vrot.lane.b32.xlu0 %v704, 16
      %v797 = vpop.permute.xlu0 %796
      %798 = vrot.lane.b32.xlu0 %v705, 16
      %v799 = vpop.permute.xlu0 %798
      %800 = vrot.lane.b32.xlu0 %v706, 16
      %v801 = vpop.permute.xlu0 %800
      %802 = vrot.lane.b32.xlu0 %v707, 16
      %v803 = vpop.permute.xlu0 %802
      %vm836 = vcmask 195712
      %837 = vst.msk [vmem:[#allocation3] sm:$0xff] %vm836, %v741
      %838 = vst.msk [vmem:[#allocation3 + $0x8] sm:$0xff] %vm836, %v743
      %839 = vst.msk [vmem:[#allocation3 + $0x10] sm:$0xff] %vm836, %v745
      %840 = vst.msk [vmem:[#allocation3 + $0x18] sm:$0xff] %vm836, %v747
      %841 = vst.msk [vmem:[#allocation3 + $0x20] sm:$0xff] %vm836, %v749
      %842 = vst.msk [vmem:[#allocation3 + $0x28] sm:$0xff] %vm836, %v751
      %843 = vst.msk [vmem:[#allocation3 + $0x30] sm:$0xff] %vm836, %v753
      %844 = vst.msk [vmem:[#allocation3 + $0x38] sm:$0xff] %vm836, %v755
      %845 = vst.msk [vmem:[#allocation3 + $0x40] sm:$0xff] %vm836, %v757
      %846 = vst.msk [vmem:[#allocation3 + $0x48] sm:$0xff] %vm836, %v759
      %847 = vst.msk [vmem:[#allocation3 + $0x50] sm:$0xff] %vm836, %v761
      %848 = vst.msk [vmem:[#allocation3 + $0x58] sm:$0xff] %vm836, %v763
      %849 = vst.msk [vmem:[#allocation3 + $0x60] sm:$0xff] %vm836, %v765
      %850 = vst.msk [vmem:[#allocation3 + $0x68] sm:$0xff] %vm836, %v767
      %851 = vst.msk [vmem:[#allocation3 + $0x70] sm:$0xff] %vm836, %v769
      %852 = vst.msk [vmem:[#allocation3 + $0x78] sm:$0xff] %vm836, %v771
      %853 = vst.msk [vmem:[#allocation3 + $0x80] sm:$0xff] %vm836, %v773
      %854 = vst.msk [vmem:[#allocation3 + $0x88] sm:$0xff] %vm836, %v775
      %855 = vst.msk [vmem:[#allocation3 + $0x90] sm:$0xff] %vm836, %v777
      %856 = vst.msk [vmem:[#allocation3 + $0x98] sm:$0xff] %vm836, %v779
      %857 = vst.msk [vmem:[#allocation3 + $0xa0] sm:$0xff] %vm836, %v781
      %858 = vst.msk [vmem:[#allocation3 + $0xa8] sm:$0xff] %vm836, %v783
      %859 = vst.msk [vmem:[#allocation3 + $0xb0] sm:$0xff] %vm836, %v785
      %860 = vst.msk [vmem:[#allocation3 + $0xb8] sm:$0xff] %vm836, %v787
      %861 = vst.msk [vmem:[#allocation3 + $0xc0] sm:$0xff] %vm836, %v789
      %862 = vst.msk [vmem:[#allocation3 + $0xc8] sm:$0xff] %vm836, %v791
      %863 = vst.msk [vmem:[#allocation3 + $0xd0] sm:$0xff] %vm836, %v793
      %864 = vst.msk [vmem:[#allocation3 + $0xd8] sm:$0xff] %vm836, %v795
      %865 = vst.msk [vmem:[#allocation3 + $0xe0] sm:$0xff] %vm836, %v797
      %866 = vst.msk [vmem:[#allocation3 + $0xe8] sm:$0xff] %vm836, %v799
      %867 = vst.msk [vmem:[#allocation3 + $0xf0] sm:$0xff] %vm836, %v801
      %868 = vst.msk [vmem:[#allocation3 + $0xf8] sm:$0xff] %vm836, %v803
      %v869 = vld [vmem:[%s386] sm:$0xff]
      %v870 = vld [vmem:[%s386 + $0x8] sm:$0xff]
      %v871 = vld [vmem:[%s386 + $0x18] sm:$0xff]
      %v872 = vld [vmem:[%s386 + $0x20] sm:$0xff]
      %v873 = vld [vmem:[%s386 + $0x30] sm:$0xff]
      %v874 = vld [vmem:[%s386 + $0x38] sm:$0xff]
      %v875 = vld [vmem:[%s386 + $0x48] sm:$0xff]
      %v876 = vld [vmem:[%s386 + $0x50] sm:$0xff]
      %v877 = vld [vmem:[%s386 + $0x60] sm:$0xff]
      %v878 = vld [vmem:[%s386 + $0x68] sm:$0xff]
      %v879 = vld [vmem:[%s386 + $0x78] sm:$0xff]
      %v880 = vld [vmem:[%s386 + $0x80] sm:$0xff]
      %v881 = vld [vmem:[%s386 + $0x90] sm:$0xff]
      %v882 = vld [vmem:[%s386 + $0x98] sm:$0xff]
      %v883 = vld [vmem:[%s386 + $0xa8] sm:$0xff]
      %v884 = vld [vmem:[%s386 + $0xb0] sm:$0xff]
      %v885 = vld [vmem:[%s386 + $0xc0] sm:$0xff]
      %v886 = vld [vmem:[%s386 + $0xc8] sm:$0xff]
      %v887 = vld [vmem:[%s386 + $0xd8] sm:$0xff]
      %v888 = vld [vmem:[%s386 + $0xe0] sm:$0xff]
      %v889 = vld [vmem:[%s386 + $0xf0] sm:$0xff]
      %v890 = vld [vmem:[%s386 + $0xf8] sm:$0xff]
      %v891 = vld [vmem:[%s386 + $0x108] sm:$0xff]
      %v892 = vld [vmem:[%s386 + $0x110] sm:$0xff]
      %v893 = vld [vmem:[%s386 + $0x120] sm:$0xff]
      %v894 = vld [vmem:[%s386 + $0x128] sm:$0xff]
      %v895 = vld [vmem:[%s386 + $0x138] sm:$0xff]
      %v896 = vld [vmem:[%s386 + $0x140] sm:$0xff]
      %v897 = vld [vmem:[%s386 + $0x150] sm:$0xff]
      %v898 = vld [vmem:[%s386 + $0x158] sm:$0xff]
      %v899 = vld [vmem:[%s386 + $0x168] sm:$0xff]
      %v900 = vld [vmem:[%s386 + $0x170] sm:$0xff]
      %933 = vrot.lane.b32.xlu0 %v869, 24
      %v934 = vpop.permute.xlu0 %933
      %935 = vrot.lane.b32.xlu0 %v870, 24
      %v936 = vpop.permute.xlu0 %935
      %937 = vrot.lane.b32.xlu0 %v871, 24
      %v938 = vpop.permute.xlu0 %937
      %939 = vrot.lane.b32.xlu0 %v872, 24
      %v940 = vpop.permute.xlu0 %939
      %941 = vrot.lane.b32.xlu0 %v873, 24
      %v942 = vpop.permute.xlu0 %941
      %943 = vrot.lane.b32.xlu0 %v874, 24
      %v944 = vpop.permute.xlu0 %943
      %945 = vrot.lane.b32.xlu0 %v875, 24
      %v946 = vpop.permute.xlu0 %945
      %947 = vrot.lane.b32.xlu0 %v876, 24
      %v948 = vpop.permute.xlu0 %947
      %949 = vrot.lane.b32.xlu0 %v877, 24
      %v950 = vpop.permute.xlu0 %949
      %951 = vrot.lane.b32.xlu0 %v878, 24
      %v952 = vpop.permute.xlu0 %951
      %953 = vrot.lane.b32.xlu0 %v879, 24
      %v954 = vpop.permute.xlu0 %953
      %955 = vrot.lane.b32.xlu0 %v880, 24
      %v956 = vpop.permute.xlu0 %955
      %957 = vrot.lane.b32.xlu0 %v881, 24
      %v958 = vpop.permute.xlu0 %957
      %959 = vrot.lane.b32.xlu0 %v882, 24
      %v960 = vpop.permute.xlu0 %959
      %961 = vrot.lane.b32.xlu0 %v883, 24
      %v962 = vpop.permute.xlu0 %961
      %963 = vrot.lane.b32.xlu0 %v884, 24
      %v964 = vpop.permute.xlu0 %963
      %965 = vrot.lane.b32.xlu0 %v885, 24
      %v966 = vpop.permute.xlu0 %965
      %967 = vrot.lane.b32.xlu0 %v886, 24
      %v968 = vpop.permute.xlu0 %967
      %969 = vrot.lane.b32.xlu0 %v887, 24
      %v970 = vpop.permute.xlu0 %969
      %971 = vrot.lane.b32.xlu0 %v888, 24
      %v972 = vpop.permute.xlu0 %971
      %973 = vrot.lane.b32.xlu0 %v889, 24
      %v974 = vpop.permute.xlu0 %973
      %975 = vrot.lane.b32.xlu0 %v890, 24
      %v976 = vpop.permute.xlu0 %975
      %977 = vrot.lane.b32.xlu0 %v891, 24
      %v978 = vpop.permute.xlu0 %977
      %979 = vrot.lane.b32.xlu0 %v892, 24
      %v980 = vpop.permute.xlu0 %979
      %981 = vrot.lane.b32.xlu0 %v893, 24
      %v982 = vpop.permute.xlu0 %981
      %983 = vrot.lane.b32.xlu0 %v894, 24
      %v984 = vpop.permute.xlu0 %983
      %985 = vrot.lane.b32.xlu0 %v895, 24
      %v986 = vpop.permute.xlu0 %985
      %987 = vrot.lane.b32.xlu0 %v896, 24
      %v988 = vpop.permute.xlu0 %987
      %989 = vrot.lane.b32.xlu0 %v897, 24
      %v990 = vpop.permute.xlu0 %989
      %991 = vrot.lane.b32.xlu0 %v898, 24
      %v992 = vpop.permute.xlu0 %991
      %993 = vrot.lane.b32.xlu0 %v899, 24
      %v994 = vpop.permute.xlu0 %993
      %995 = vrot.lane.b32.xlu0 %v900, 24
      %v996 = vpop.permute.xlu0 %995
      %vm1029 = vcmask 261312
      %1030 = vst.msk [vmem:[#allocation3] sm:$0xff] %vm1029, %v934
      %1031 = vst.msk [vmem:[#allocation3 + $0x8] sm:$0xff] %vm1029, %v936
      %1032 = vst.msk [vmem:[#allocation3 + $0x10] sm:$0xff] %vm1029, %v938
      %1033 = vst.msk [vmem:[#allocation3 + $0x18] sm:$0xff] %vm1029, %v940
      %1034 = vst.msk [vmem:[#allocation3 + $0x20] sm:$0xff] %vm1029, %v942
      %1035 = vst.msk [vmem:[#allocation3 + $0x28] sm:$0xff] %vm1029, %v944
      %1036 = vst.msk [vmem:[#allocation3 + $0x30] sm:$0xff] %vm1029, %v946
      %1037 = vst.msk [vmem:[#allocation3 + $0x38] sm:$0xff] %vm1029, %v948
      %1038 = vst.msk [vmem:[#allocation3 + $0x40] sm:$0xff] %vm1029, %v950
      %1039 = vst.msk [vmem:[#allocation3 + $0x48] sm:$0xff] %vm1029, %v952
      %1040 = vst.msk [vmem:[#allocation3 + $0x50] sm:$0xff] %vm1029, %v954
      %1041 = vst.msk [vmem:[#allocation3 + $0x58] sm:$0xff] %vm1029, %v956
      %1042 = vst.msk [vmem:[#allocation3 + $0x60] sm:$0xff] %vm1029, %v958
      %1043 = vst.msk [vmem:[#allocation3 + $0x68] sm:$0xff] %vm1029, %v960
      %1044 = vst.msk [vmem:[#allocation3 + $0x70] sm:$0xff] %vm1029, %v962
      %1045 = vst.msk [vmem:[#allocation3 + $0x78] sm:$0xff] %vm1029, %v964
      %1046 = vst.msk [vmem:[#allocation3 + $0x80] sm:$0xff] %vm1029, %v966
      %1047 = vst.msk [vmem:[#allocation3 + $0x88] sm:$0xff] %vm1029, %v968
      %1048 = vst.msk [vmem:[#allocation3 + $0x90] sm:$0xff] %vm1029, %v970
      %1049 = vst.msk [vmem:[#allocation3 + $0x98] sm:$0xff] %vm1029, %v972
      %1050 = vst.msk [vmem:[#allocation3 + $0xa0] sm:$0xff] %vm1029, %v974
      %1051 = vst.msk [vmem:[#allocation3 + $0xa8] sm:$0xff] %vm1029, %v976
      %1052 = vst.msk [vmem:[#allocation3 + $0xb0] sm:$0xff] %vm1029, %v978
      %1053 = vst.msk [vmem:[#allocation3 + $0xb8] sm:$0xff] %vm1029, %v980
      %1054 = vst.msk [vmem:[#allocation3 + $0xc0] sm:$0xff] %vm1029, %v982
      %1055 = vst.msk [vmem:[#allocation3 + $0xc8] sm:$0xff] %vm1029, %v984
      %1056 = vst.msk [vmem:[#allocation3 + $0xd0] sm:$0xff] %vm1029, %v986
      %1057 = vst.msk [vmem:[#allocation3 + $0xd8] sm:$0xff] %vm1029, %v988
      %1058 = vst.msk [vmem:[#allocation3 + $0xe0] sm:$0xff] %vm1029, %v990
      %1059 = vst.msk [vmem:[#allocation3 + $0xe8] sm:$0xff] %vm1029, %v992
      %1060 = vst.msk [vmem:[#allocation3 + $0xf0] sm:$0xff] %vm1029, %v994
      %1061 = vst.msk [vmem:[#allocation3 + $0xf8] sm:$0xff] %vm1029, %v996
      %v1062 = vld [vmem:[%s386 + $0x1] sm:$0xff]
      %v1063 = vld [vmem:[%s386 + $0x9] sm:$0xff]
      %v1064 = vld [vmem:[%s386 + $0x19] sm:$0xff]
      %v1065 = vld [vmem:[%s386 + $0x21] sm:$0xff]
      %v1066 = vld [vmem:[%s386 + $0x31] sm:$0xff]
      %v1067 = vld [vmem:[%s386 + $0x39] sm:$0xff]
      %v1068 = vld [vmem:[%s386 + $0x49] sm:$0xff]
      %v1069 = vld [vmem:[%s386 + $0x51] sm:$0xff]
      %v1070 = vld [vmem:[%s386 + $0x61] sm:$0xff]
      %v1071 = vld [vmem:[%s386 + $0x69] sm:$0xff]
      %v1072 = vld [vmem:[%s386 + $0x79] sm:$0xff]
      %v1073 = vld [vmem:[%s386 + $0x81] sm:$0xff]
      %v1074 = vld [vmem:[%s386 + $0x91] sm:$0xff]
      %v1075 = vld [vmem:[%s386 + $0x99] sm:$0xff]
      %v1076 = vld [vmem:[%s386 + $0xa9] sm:$0xff]
      %v1077 = vld [vmem:[%s386 + $0xb1] sm:$0xff]
      %v1078 = vld [vmem:[%s386 + $0xc1] sm:$0xff]
      %v1079 = vld [vmem:[%s386 + $0xc9] sm:$0xff]
      %v1080 = vld [vmem:[%s386 + $0xd9] sm:$0xff]
      %v1081 = vld [vmem:[%s386 + $0xe1] sm:$0xff]
      %v1082 = vld [vmem:[%s386 + $0xf1] sm:$0xff]
      %v1083 = vld [vmem:[%s386 + $0xf9] sm:$0xff]
      %v1084 = vld [vmem:[%s386 + $0x109] sm:$0xff]
      %v1085 = vld [vmem:[%s386 + $0x111] sm:$0xff]
      %v1086 = vld [vmem:[%s386 + $0x121] sm:$0xff]
      %v1087 = vld [vmem:[%s386 + $0x129] sm:$0xff]
      %v1088 = vld [vmem:[%s386 + $0x139] sm:$0xff]
      %v1089 = vld [vmem:[%s386 + $0x141] sm:$0xff]
      %v1090 = vld [vmem:[%s386 + $0x151] sm:$0xff]
      %v1091 = vld [vmem:[%s386 + $0x159] sm:$0xff]
      %v1092 = vld [vmem:[%s386 + $0x169] sm:$0xff]
      %v1093 = vld [vmem:[%s386 + $0x171] sm:$0xff]
      %1126 = vrot.lane.b32.xlu0 %v1062, 32
      %v1127 = vpop.permute.xlu0 %1126
      %1128 = vrot.lane.b32.xlu0 %v1063, 32
      %v1129 = vpop.permute.xlu0 %1128
      %1130 = vrot.lane.b32.xlu0 %v1064, 32
      %v1131 = vpop.permute.xlu0 %1130
      %1132 = vrot.lane.b32.xlu0 %v1065, 32
      %v1133 = vpop.permute.xlu0 %1132
      %1134 = vrot.lane.b32.xlu0 %v1066, 32
      %v1135 = vpop.permute.xlu0 %1134
      %1136 = vrot.lane.b32.xlu0 %v1067, 32
      %v1137 = vpop.permute.xlu0 %1136
      %1138 = vrot.lane.b32.xlu0 %v1068, 32
      %v1139 = vpop.permute.xlu0 %1138
      %1140 = vrot.lane.b32.xlu0 %v1069, 32
      %v1141 = vpop.permute.xlu0 %1140
      %1142 = vrot.lane.b32.xlu0 %v1070, 32
      %v1143 = vpop.permute.xlu0 %1142
      %1144 = vrot.lane.b32.xlu0 %v1071, 32
      %v1145 = vpop.permute.xlu0 %1144
      %1146 = vrot.lane.b32.xlu0 %v1072, 32
      %v1147 = vpop.permute.xlu0 %1146
      %1148 = vrot.lane.b32.xlu0 %v1073, 32
      %v1149 = vpop.permute.xlu0 %1148
      %1150 = vrot.lane.b32.xlu0 %v1074, 32
      %v1151 = vpop.permute.xlu0 %1150
      %1152 = vrot.lane.b32.xlu0 %v1075, 32
      %v1153 = vpop.permute.xlu0 %1152
      %1154 = vrot.lane.b32.xlu0 %v1076, 32
      %v1155 = vpop.permute.xlu0 %1154
      %1156 = vrot.lane.b32.xlu0 %v1077, 32
      %v1157 = vpop.permute.xlu0 %1156
      %1158 = vrot.lane.b32.xlu0 %v1078, 32
      %v1159 = vpop.permute.xlu0 %1158
      %1160 = vrot.lane.b32.xlu0 %v1079, 32
      %v1161 = vpop.permute.xlu0 %1160
      %1162 = vrot.lane.b32.xlu0 %v1080, 32
      %v1163 = vpop.permute.xlu0 %1162
      %1164 = vrot.lane.b32.xlu0 %v1081, 32
      %v1165 = vpop.permute.xlu0 %1164
      %1166 = vrot.lane.b32.xlu0 %v1082, 32
      %v1167 = vpop.permute.xlu0 %1166
      %1168 = vrot.lane.b32.xlu0 %v1083, 32
      %v1169 = vpop.permute.xlu0 %1168
      %1170 = vrot.lane.b32.xlu0 %v1084, 32
      %v1171 = vpop.permute.xlu0 %1170
      %1172 = vrot.lane.b32.xlu0 %v1085, 32
      %v1173 = vpop.permute.xlu0 %1172
      %1174 = vrot.lane.b32.xlu0 %v1086, 32
      %v1175 = vpop.permute.xlu0 %1174
      %1176 = vrot.lane.b32.xlu0 %v1087, 32
      %v1177 = vpop.permute.xlu0 %1176
      %1178 = vrot.lane.b32.xlu0 %v1088, 32
      %v1179 = vpop.permute.xlu0 %1178
      %1180 = vrot.lane.b32.xlu0 %v1089, 32
      %v1181 = vpop.permute.xlu0 %1180
      %1182 = vrot.lane.b32.xlu0 %v1090, 32
      %v1183 = vpop.permute.xlu0 %1182
      %1184 = vrot.lane.b32.xlu0 %v1091, 32
      %v1185 = vpop.permute.xlu0 %1184
      %1186 = vrot.lane.b32.xlu0 %v1092, 32
      %v1187 = vpop.permute.xlu0 %1186
      %1188 = vrot.lane.b32.xlu0 %v1093, 32
      %v1189 = vpop.permute.xlu0 %1188
      %vm1222 = vcmask 326912
      %1223 = vst.msk [vmem:[#allocation3] sm:$0xff] %vm1222, %v1127
      %1224 = vst.msk [vmem:[#allocation3 + $0x8] sm:$0xff] %vm1222, %v1129
      %1225 = vst.msk [vmem:[#allocation3 + $0x10] sm:$0xff] %vm1222, %v1131
      %1226 = vst.msk [vmem:[#allocation3 + $0x18] sm:$0xff] %vm1222, %v1133
      %1227 = vst.msk [vmem:[#allocation3 + $0x20] sm:$0xff] %vm1222, %v1135
      %1228 = vst.msk [vmem:[#allocation3 + $0x28] sm:$0xff] %vm1222, %v1137
      %1229 = vst.msk [vmem:[#allocation3 + $0x30] sm:$0xff] %vm1222, %v1139
      %1230 = vst.msk [vmem:[#allocation3 + $0x38] sm:$0xff] %vm1222, %v1141
      %1231 = vst.msk [vmem:[#allocation3 + $0x40] sm:$0xff] %vm1222, %v1143
      %1232 = vst.msk [vmem:[#allocation3 + $0x48] sm:$0xff] %vm1222, %v1145
      %1233 = vst.msk [vmem:[#allocation3 + $0x50] sm:$0xff] %vm1222, %v1147
      %1234 = vst.msk [vmem:[#allocation3 + $0x58] sm:$0xff] %vm1222, %v1149
      %1235 = vst.msk [vmem:[#allocation3 + $0x60] sm:$0xff] %vm1222, %v1151
      %1236 = vst.msk [vmem:[#allocation3 + $0x68] sm:$0xff] %vm1222, %v1153
      %1237 = vst.msk [vmem:[#allocation3 + $0x70] sm:$0xff] %vm1222, %v1155
      %1238 = vst.msk [vmem:[#allocation3 + $0x78] sm:$0xff] %vm1222, %v1157
      %1239 = vst.msk [vmem:[#allocation3 + $0x80] sm:$0xff] %vm1222, %v1159
      %1240 = vst.msk [vmem:[#allocation3 + $0x88] sm:$0xff] %vm1222, %v1161
      %1241 = vst.msk [vmem:[#allocation3 + $0x90] sm:$0xff] %vm1222, %v1163
      %1242 = vst.msk [vmem:[#allocation3 + $0x98] sm:$0xff] %vm1222, %v1165
      %1243 = vst.msk [vmem:[#allocation3 + $0xa0] sm:$0xff] %vm1222, %v1167
      %1244 = vst.msk [vmem:[#allocation3 + $0xa8] sm:$0xff] %vm1222, %v1169
      %1245 = vst.msk [vmem:[#allocation3 + $0xb0] sm:$0xff] %vm1222, %v1171
      %1246 = vst.msk [vmem:[#allocation3 + $0xb8] sm:$0xff] %vm1222, %v1173
      %1247 = vst.msk [vmem:[#allocation3 + $0xc0] sm:$0xff] %vm1222, %v1175
      %1248 = vst.msk [vmem:[#allocation3 + $0xc8] sm:$0xff] %vm1222, %v1177
      %1249 = vst.msk [vmem:[#allocation3 + $0xd0] sm:$0xff] %vm1222, %v1179
      %1250 = vst.msk [vmem:[#allocation3 + $0xd8] sm:$0xff] %vm1222, %v1181
      %1251 = vst.msk [vmem:[#allocation3 + $0xe0] sm:$0xff] %vm1222, %v1183
      %1252 = vst.msk [vmem:[#allocation3 + $0xe8] sm:$0xff] %vm1222, %v1185
      %1253 = vst.msk [vmem:[#allocation3 + $0xf0] sm:$0xff] %vm1222, %v1187
      %1254 = vst.msk [vmem:[#allocation3 + $0xf8] sm:$0xff] %vm1222, %v1189
      %v1255 = vld [vmem:[%s386 + $0x2] sm:$0xff]
      %v1256 = vld [vmem:[%s386 + $0xa] sm:$0xff]
      %v1257 = vld [vmem:[%s386 + $0x1a] sm:$0xff]
      %v1258 = vld [vmem:[%s386 + $0x22] sm:$0xff]
      %v1259 = vld [vmem:[%s386 + $0x32] sm:$0xff]
      %v1260 = vld [vmem:[%s386 + $0x3a] sm:$0xff]
      %v1261 = vld [vmem:[%s386 + $0x4a] sm:$0xff]
      %v1262 = vld [vmem:[%s386 + $0x52] sm:$0xff]
      %v1263 = vld [vmem:[%s386 + $0x62] sm:$0xff]
      %v1264 = vld [vmem:[%s386 + $0x6a] sm:$0xff]
      %v1265 = vld [vmem:[%s386 + $0x7a] sm:$0xff]
      %v1266 = vld [vmem:[%s386 + $0x82] sm:$0xff]
      %v1267 = vld [vmem:[%s386 + $0x92] sm:$0xff]
      %v1268 = vld [vmem:[%s386 + $0x9a] sm:$0xff]
      %v1269 = vld [vmem:[%s386 + $0xaa] sm:$0xff]
      %v1270 = vld [vmem:[%s386 + $0xb2] sm:$0xff]
      %v1271 = vld [vmem:[%s386 + $0xc2] sm:$0xff]
      %v1272 = vld [vmem:[%s386 + $0xca] sm:$0xff]
      %v1273 = vld [vmem:[%s386 + $0xda] sm:$0xff]
      %v1274 = vld [vmem:[%s386 + $0xe2] sm:$0xff]
      %v1275 = vld [vmem:[%s386 + $0xf2] sm:$0xff]
      %v1276 = vld [vmem:[%s386 + $0xfa] sm:$0xff]
      %v1277 = vld [vmem:[%s386 + $0x10a] sm:$0xff]
      %v1278 = vld [vmem:[%s386 + $0x112] sm:$0xff]
      %v1279 = vld [vmem:[%s386 + $0x122] sm:$0xff]
      %v1280 = vld [vmem:[%s386 + $0x12a] sm:$0xff]
      %v1281 = vld [vmem:[%s386 + $0x13a] sm:$0xff]
      %v1282 = vld [vmem:[%s386 + $0x142] sm:$0xff]
      %v1283 = vld [vmem:[%s386 + $0x152] sm:$0xff]
      %v1284 = vld [vmem:[%s386 + $0x15a] sm:$0xff]
      %v1285 = vld [vmem:[%s386 + $0x16a] sm:$0xff]
      %v1286 = vld [vmem:[%s386 + $0x172] sm:$0xff]
      %1319 = vrot.lane.b32.xlu0 %v1255, 40
      %v1320 = vpop.permute.xlu0 %1319
      %1321 = vrot.lane.b32.xlu0 %v1256, 40
      %v1322 = vpop.permute.xlu0 %1321
      %1323 = vrot.lane.b32.xlu0 %v1257, 40
      %v1324 = vpop.permute.xlu0 %1323
      %1325 = vrot.lane.b32.xlu0 %v1258, 40
      %v1326 = vpop.permute.xlu0 %1325
      %1327 = vrot.lane.b32.xlu0 %v1259, 40
      %v1328 = vpop.permute.xlu0 %1327
      %1329 = vrot.lane.b32.xlu0 %v1260, 40
      %v1330 = vpop.permute.xlu0 %1329
      %1331 = vrot.lane.b32.xlu0 %v1261, 40
      %v1332 = vpop.permute.xlu0 %1331
      %1333 = vrot.lane.b32.xlu0 %v1262, 40
      %v1334 = vpop.permute.xlu0 %1333
      %1335 = vrot.lane.b32.xlu0 %v1263, 40
      %v1336 = vpop.permute.xlu0 %1335
      %1337 = vrot.lane.b32.xlu0 %v1264, 40
      %v1338 = vpop.permute.xlu0 %1337
      %1339 = vrot.lane.b32.xlu0 %v1265, 40
      %v1340 = vpop.permute.xlu0 %1339
      %1341 = vrot.lane.b32.xlu0 %v1266, 40
      %v1342 = vpop.permute.xlu0 %1341
      %1343 = vrot.lane.b32.xlu0 %v1267, 40
      %v1344 = vpop.permute.xlu0 %1343
      %1345 = vrot.lane.b32.xlu0 %v1268, 40
      %v1346 = vpop.permute.xlu0 %1345
      %1347 = vrot.lane.b32.xlu0 %v1269, 40
      %v1348 = vpop.permute.xlu0 %1347
      %1349 = vrot.lane.b32.xlu0 %v1270, 40
      %v1350 = vpop.permute.xlu0 %1349
      %1351 = vrot.lane.b32.xlu0 %v1271, 40
      %v1352 = vpop.permute.xlu0 %1351
      %1353 = vrot.lane.b32.xlu0 %v1272, 40
      %v1354 = vpop.permute.xlu0 %1353
      %1355 = vrot.lane.b32.xlu0 %v1273, 40
      %v1356 = vpop.permute.xlu0 %1355
      %1357 = vrot.lane.b32.xlu0 %v1274, 40
      %v1358 = vpop.permute.xlu0 %1357
      %1359 = vrot.lane.b32.xlu0 %v1275, 40
      %v1360 = vpop.permute.xlu0 %1359
      %1361 = vrot.lane.b32.xlu0 %v1276, 40
      %v1362 = vpop.permute.xlu0 %1361
      %1363 = vrot.lane.b32.xlu0 %v1277, 40
      %v1364 = vpop.permute.xlu0 %1363
      %1365 = vrot.lane.b32.xlu0 %v1278, 40
      %v1366 = vpop.permute.xlu0 %1365
      %1367 = vrot.lane.b32.xlu0 %v1279, 40
      %v1368 = vpop.permute.xlu0 %1367
      %1369 = vrot.lane.b32.xlu0 %v1280, 40
      %v1370 = vpop.permute.xlu0 %1369
      %1371 = vrot.lane.b32.xlu0 %v1281, 40
      %v1372 = vpop.permute.xlu0 %1371
      %1373 = vrot.lane.b32.xlu0 %v1282, 40
      %v1374 = vpop.permute.xlu0 %1373
      %1375 = vrot.lane.b32.xlu0 %v1283, 40
      %v1376 = vpop.permute.xlu0 %1375
      %1377 = vrot.lane.b32.xlu0 %v1284, 40
      %v1378 = vpop.permute.xlu0 %1377
      %1379 = vrot.lane.b32.xlu0 %v1285, 40
      %v1380 = vpop.permute.xlu0 %1379
      %1381 = vrot.lane.b32.xlu0 %v1286, 40
      %v1382 = vpop.permute.xlu0 %1381
      %vm1415 = vcmask 392512
      %1416 = vst.msk [vmem:[#allocation3] sm:$0xff] %vm1415, %v1320
      %1417 = vst.msk [vmem:[#allocation3 + $0x8] sm:$0xff] %vm1415, %v1322
      %1418 = vst.msk [vmem:[#allocation3 + $0x10] sm:$0xff] %vm1415, %v1324
      %1419 = vst.msk [vmem:[#allocation3 + $0x18] sm:$0xff] %vm1415, %v1326
      %1420 = vst.msk [vmem:[#allocation3 + $0x20] sm:$0xff] %vm1415, %v1328
      %1421 = vst.msk [vmem:[#allocation3 + $0x28] sm:$0xff] %vm1415, %v1330
      %1422 = vst.msk [vmem:[#allocation3 + $0x30] sm:$0xff] %vm1415, %v1332
      %1423 = vst.msk [vmem:[#allocation3 + $0x38] sm:$0xff] %vm1415, %v1334
      %1424 = vst.msk [vmem:[#allocation3 + $0x40] sm:$0xff] %vm1415, %v1336
      %1425 = vst.msk [vmem:[#allocation3 + $0x48] sm:$0xff] %vm1415, %v1338
      %1426 = vst.msk [vmem:[#allocation3 + $0x50] sm:$0xff] %vm1415, %v1340
      %1427 = vst.msk [vmem:[#allocation3 + $0x58] sm:$0xff] %vm1415, %v1342
      %1428 = vst.msk [vmem:[#allocation3 + $0x60] sm:$0xff] %vm1415, %v1344
      %1429 = vst.msk [vmem:[#allocation3 + $0x68] sm:$0xff] %vm1415, %v1346
      %1430 = vst.msk [vmem:[#allocation3 + $0x70] sm:$0xff] %vm1415, %v1348
      %1431 = vst.msk [vmem:[#allocation3 + $0x78] sm:$0xff] %vm1415, %v1350
      %1432 = vst.msk [vmem:[#allocation3 + $0x80] sm:$0xff] %vm1415, %v1352
      %1433 = vst.msk [vmem:[#allocation3 + $0x88] sm:$0xff] %vm1415, %v1354
      %1434 = vst.msk [vmem:[#allocation3 + $0x90] sm:$0xff] %vm1415, %v1356
      %1435 = vst.msk [vmem:[#allocation3 + $0x98] sm:$0xff] %vm1415, %v1358
      %1436 = vst.msk [vmem:[#allocation3 + $0xa0] sm:$0xff] %vm1415, %v1360
      %1437 = vst.msk [vmem:[#allocation3 + $0xa8] sm:$0xff] %vm1415, %v1362
      %1438 = vst.msk [vmem:[#allocation3 + $0xb0] sm:$0xff] %vm1415, %v1364
      %1439 = vst.msk [vmem:[#allocation3 + $0xb8] sm:$0xff] %vm1415, %v1366
      %1440 = vst.msk [vmem:[#allocation3 + $0xc0] sm:$0xff] %vm1415, %v1368
      %1441 = vst.msk [vmem:[#allocation3 + $0xc8] sm:$0xff] %vm1415, %v1370
      %1442 = vst.msk [vmem:[#allocation3 + $0xd0] sm:$0xff] %vm1415, %v1372
      %1443 = vst.msk [vmem:[#allocation3 + $0xd8] sm:$0xff] %vm1415, %v1374
      %1444 = vst.msk [vmem:[#allocation3 + $0xe0] sm:$0xff] %vm1415, %v1376
      %1445 = vst.msk [vmem:[#allocation3 + $0xe8] sm:$0xff] %vm1415, %v1378
      %1446 = vst.msk [vmem:[#allocation3 + $0xf0] sm:$0xff] %vm1415, %v1380
      %1447 = vst.msk [vmem:[#allocation3 + $0xf8] sm:$0xff] %vm1415, %v1382
      %s1448 = scalar_lea.vmem [#allocation2], 48
      %v1449 = vld [vmem:[%s1448] sm:$0xff]
      %v1450 = vld [vmem:[%s1448 + $0x8] sm:$0xff]
      %v1451 = vld [vmem:[%s1448 + $0x18] sm:$0xff]
      %v1452 = vld [vmem:[%s1448 + $0x20] sm:$0xff]
      %v1453 = vld [vmem:[%s1448 + $0x30] sm:$0xff]
      %v1454 = vld [vmem:[%s1448 + $0x38] sm:$0xff]
      %v1455 = vld [vmem:[%s1448 + $0x48] sm:$0xff]
      %v1456 = vld [vmem:[%s1448 + $0x50] sm:$0xff]
      %v1457 = vld [vmem:[%s1448 + $0x60] sm:$0xff]
      %v1458 = vld [vmem:[%s1448 + $0x68] sm:$0xff]
      %v1459 = vld [vmem:[%s1448 + $0x78] sm:$0xff]
      %v1460 = vld [vmem:[%s1448 + $0x80] sm:$0xff]
      %v1461 = vld [vmem:[%s1448 + $0x90] sm:$0xff]
      %v1462 = vld [vmem:[%s1448 + $0x98] sm:$0xff]
      %v1463 = vld [vmem:[%s1448 + $0xa8] sm:$0xff]
      %v1464 = vld [vmem:[%s1448 + $0xb0] sm:$0xff]
      %v1465 = vld [vmem:[%s1448 + $0xc0] sm:$0xff]
      %v1466 = vld [vmem:[%s1448 + $0xc8] sm:$0xff]
      %v1467 = vld [vmem:[%s1448 + $0xd8] sm:$0xff]
      %v1468 = vld [vmem:[%s1448 + $0xe0] sm:$0xff]
      %v1469 = vld [vmem:[%s1448 + $0xf0] sm:$0xff]
      %v1470 = vld [vmem:[%s1448 + $0xf8] sm:$0xff]
      %v1471 = vld [vmem:[%s1448 + $0x108] sm:$0xff]
      %v1472 = vld [vmem:[%s1448 + $0x110] sm:$0xff]
      %v1473 = vld [vmem:[%s1448 + $0x120] sm:$0xff]
      %v1474 = vld [vmem:[%s1448 + $0x128] sm:$0xff]
      %v1475 = vld [vmem:[%s1448 + $0x138] sm:$0xff]
      %v1476 = vld [vmem:[%s1448 + $0x140] sm:$0xff]
      %v1477 = vld [vmem:[%s1448 + $0x150] sm:$0xff]
      %v1478 = vld [vmem:[%s1448 + $0x158] sm:$0xff]
      %v1479 = vld [vmem:[%s1448 + $0x168] sm:$0xff]
      %v1480 = vld [vmem:[%s1448 + $0x170] sm:$0xff]
      %1513 = vrot.lane.b32.xlu0 %v1449, 48
      %v1514 = vpop.permute.xlu0 %1513
      %1515 = vrot.lane.b32.xlu0 %v1450, 48
      %v1516 = vpop.permute.xlu0 %1515
      %1517 = vrot.lane.b32.xlu0 %v1451, 48
      %v1518 = vpop.permute.xlu0 %1517
      %1519 = vrot.lane.b32.xlu0 %v1452, 48
      %v1520 = vpop.permute.xlu0 %1519
      %1521 = vrot.lane.b32.xlu0 %v1453, 48
      %v1522 = vpop.permute.xlu0 %1521
      %1523 = vrot.lane.b32.xlu0 %v1454, 48
      %v1524 = vpop.permute.xlu0 %1523
      %1525 = vrot.lane.b32.xlu0 %v1455, 48
      %v1526 = vpop.permute.xlu0 %1525
      %1527 = vrot.lane.b32.xlu0 %v1456, 48
      %v1528 = vpop.permute.xlu0 %1527
      %1529 = vrot.lane.b32.xlu0 %v1457, 48
      %v1530 = vpop.permute.xlu0 %1529
      %1531 = vrot.lane.b32.xlu0 %v1458, 48
      %v1532 = vpop.permute.xlu0 %1531
      %1533 = vrot.lane.b32.xlu0 %v1459, 48
      %v1534 = vpop.permute.xlu0 %1533
      %1535 = vrot.lane.b32.xlu0 %v1460, 48
      %v1536 = vpop.permute.xlu0 %1535
      %1537 = vrot.lane.b32.xlu0 %v1461, 48
      %v1538 = vpop.permute.xlu0 %1537
      %1539 = vrot.lane.b32.xlu0 %v1462, 48
      %v1540 = vpop.permute.xlu0 %1539
      %1541 = vrot.lane.b32.xlu0 %v1463, 48
      %v1542 = vpop.permute.xlu0 %1541
      %1543 = vrot.lane.b32.xlu0 %v1464, 48
      %v1544 = vpop.permute.xlu0 %1543
      %1545 = vrot.lane.b32.xlu0 %v1465, 48
      %v1546 = vpop.permute.xlu0 %1545
      %1547 = vrot.lane.b32.xlu0 %v1466, 48
      %v1548 = vpop.permute.xlu0 %1547
      %1549 = vrot.lane.b32.xlu0 %v1467, 48
      %v1550 = vpop.permute.xlu0 %1549
      %1551 = vrot.lane.b32.xlu0 %v1468, 48
      %v1552 = vpop.permute.xlu0 %1551
      %1553 = vrot.lane.b32.xlu0 %v1469, 48
      %v1554 = vpop.permute.xlu0 %1553
      %1555 = vrot.lane.b32.xlu0 %v1470, 48
      %v1556 = vpop.permute.xlu0 %1555
      %1557 = vrot.lane.b32.xlu0 %v1471, 48
      %v1558 = vpop.permute.xlu0 %1557
      %1559 = vrot.lane.b32.xlu0 %v1472, 48
      %v1560 = vpop.permute.xlu0 %1559
      %1561 = vrot.lane.b32.xlu0 %v1473, 48
      %v1562 = vpop.permute.xlu0 %1561
      %1563 = vrot.lane.b32.xlu0 %v1474, 48
      %v1564 = vpop.permute.xlu0 %1563
      %1565 = vrot.lane.b32.xlu0 %v1475, 48
      %v1566 = vpop.permute.xlu0 %1565
      %1567 = vrot.lane.b32.xlu0 %v1476, 48
      %v1568 = vpop.permute.xlu0 %1567
      %1569 = vrot.lane.b32.xlu0 %v1477, 48
      %v1570 = vpop.permute.xlu0 %1569
      %1571 = vrot.lane.b32.xlu0 %v1478, 48
      %v1572 = vpop.permute.xlu0 %1571
      %1573 = vrot.lane.b32.xlu0 %v1479, 48
      %v1574 = vpop.permute.xlu0 %1573
      %1575 = vrot.lane.b32.xlu0 %v1480, 48
      %v1576 = vpop.permute.xlu0 %1575
      %vm1609 = vcmask 458112
      %1610 = vst.msk [vmem:[#allocation3] sm:$0xff] %vm1609, %v1514
      %1611 = vst.msk [vmem:[#allocation3 + $0x8] sm:$0xff] %vm1609, %v1516
      %1612 = vst.msk [vmem:[#allocation3 + $0x10] sm:$0xff] %vm1609, %v1518
      %1613 = vst.msk [vmem:[#allocation3 + $0x18] sm:$0xff] %vm1609, %v1520
      %1614 = vst.msk [vmem:[#allocation3 + $0x20] sm:$0xff] %vm1609, %v1522
      %1615 = vst.msk [vmem:[#allocation3 + $0x28] sm:$0xff] %vm1609, %v1524
      %1616 = vst.msk [vmem:[#allocation3 + $0x30] sm:$0xff] %vm1609, %v1526
      %1617 = vst.msk [vmem:[#allocation3 + $0x38] sm:$0xff] %vm1609, %v1528
      %1618 = vst.msk [vmem:[#allocation3 + $0x40] sm:$0xff] %vm1609, %v1530
      %1619 = vst.msk [vmem:[#allocation3 + $0x48] sm:$0xff] %vm1609, %v1532
      %1620 = vst.msk [vmem:[#allocation3 + $0x50] sm:$0xff] %vm1609, %v1534
      %1621 = vst.msk [vmem:[#allocation3 + $0x58] sm:$0xff] %vm1609, %v1536
      %1622 = vst.msk [vmem:[#allocation3 + $0x60] sm:$0xff] %vm1609, %v1538
      %1623 = vst.msk [vmem:[#allocation3 + $0x68] sm:$0xff] %vm1609, %v1540
      %1624 = vst.msk [vmem:[#allocation3 + $0x70] sm:$0xff] %vm1609, %v1542
      %1625 = vst.msk [vmem:[#allocation3 + $0x78] sm:$0xff] %vm1609, %v1544
      %1626 = vst.msk [vmem:[#allocation3 + $0x80] sm:$0xff] %vm1609, %v1546
      %1627 = vst.msk [vmem:[#allocation3 + $0x88] sm:$0xff] %vm1609, %v1548
      %1628 = vst.msk [vmem:[#allocation3 + $0x90] sm:$0xff] %vm1609, %v1550
      %1629 = vst.msk [vmem:[#allocation3 + $0x98] sm:$0xff] %vm1609, %v1552
      %1630 = vst.msk [vmem:[#allocation3 + $0xa0] sm:$0xff] %vm1609, %v1554
      %1631 = vst.msk [vmem:[#allocation3 + $0xa8] sm:$0xff] %vm1609, %v1556
      %1632 = vst.msk [vmem:[#allocation3 + $0xb0] sm:$0xff] %vm1609, %v1558
      %1633 = vst.msk [vmem:[#allocation3 + $0xb8] sm:$0xff] %vm1609, %v1560
      %1634 = vst.msk [vmem:[#allocation3 + $0xc0] sm:$0xff] %vm1609, %v1562
      %1635 = vst.msk [vmem:[#allocation3 + $0xc8] sm:$0xff] %vm1609, %v1564
      %1636 = vst.msk [vmem:[#allocation3 + $0xd0] sm:$0xff] %vm1609, %v1566
      %1637 = vst.msk [vmem:[#allocation3 + $0xd8] sm:$0xff] %vm1609, %v1568
      %1638 = vst.msk [vmem:[#allocation3 + $0xe0] sm:$0xff] %vm1609, %v1570
      %1639 = vst.msk [vmem:[#allocation3 + $0xe8] sm:$0xff] %vm1609, %v1572
      %1640 = vst.msk [vmem:[#allocation3 + $0xf0] sm:$0xff] %vm1609, %v1574
      %1641 = vst.msk [vmem:[#allocation3 + $0xf8] sm:$0xff] %vm1609, %v1576
      %v1642 = vld [vmem:[%s1448 + $0x1] sm:$0xff]
      %v1643 = vld [vmem:[%s1448 + $0x9] sm:$0xff]
      %v1644 = vld [vmem:[%s1448 + $0x19] sm:$0xff]
      %v1645 = vld [vmem:[%s1448 + $0x21] sm:$0xff]
      %v1646 = vld [vmem:[%s1448 + $0x31] sm:$0xff]
      %v1647 = vld [vmem:[%s1448 + $0x39] sm:$0xff]
      %v1648 = vld [vmem:[%s1448 + $0x49] sm:$0xff]
      %v1649 = vld [vmem:[%s1448 + $0x51] sm:$0xff]
      %v1650 = vld [vmem:[%s1448 + $0x61] sm:$0xff]
      %v1651 = vld [vmem:[%s1448 + $0x69] sm:$0xff]
      %v1652 = vld [vmem:[%s1448 + $0x79] sm:$0xff]
      %v1653 = vld [vmem:[%s1448 + $0x81] sm:$0xff]
      %v1654 = vld [vmem:[%s1448 + $0x91] sm:$0xff]
      %v1655 = vld [vmem:[%s1448 + $0x99] sm:$0xff]
      %v1656 = vld [vmem:[%s1448 + $0xa9] sm:$0xff]
      %v1657 = vld [vmem:[%s1448 + $0xb1] sm:$0xff]
      %v1658 = vld [vmem:[%s1448 + $0xc1] sm:$0xff]
      %v1659 = vld [vmem:[%s1448 + $0xc9] sm:$0xff]
      %v1660 = vld [vmem:[%s1448 + $0xd9] sm:$0xff]
      %v1661 = vld [vmem:[%s1448 + $0xe1] sm:$0xff]
      %v1662 = vld [vmem:[%s1448 + $0xf1] sm:$0xff]
      %v1663 = vld [vmem:[%s1448 + $0xf9] sm:$0xff]
      %v1664 = vld [vmem:[%s1448 + $0x109] sm:$0xff]
      %v1665 = vld [vmem:[%s1448 + $0x111] sm:$0xff]
      %v1666 = vld [vmem:[%s1448 + $0x121] sm:$0xff]
      %v1667 = vld [vmem:[%s1448 + $0x129] sm:$0xff]
      %v1668 = vld [vmem:[%s1448 + $0x139] sm:$0xff]
      %v1669 = vld [vmem:[%s1448 + $0x141] sm:$0xff]
      %v1670 = vld [vmem:[%s1448 + $0x151] sm:$0xff]
      %v1671 = vld [vmem:[%s1448 + $0x159] sm:$0xff]
      %v1672 = vld [vmem:[%s1448 + $0x169] sm:$0xff]
      %v1673 = vld [vmem:[%s1448 + $0x171] sm:$0xff]
      %1706 = vrot.lane.b32.xlu0 %v1642, 56
      %v1707 = vpop.permute.xlu0 %1706
      %1708 = vrot.lane.b32.xlu0 %v1643, 56
      %v1709 = vpop.permute.xlu0 %1708
      %1710 = vrot.lane.b32.xlu0 %v1644, 56
      %v1711 = vpop.permute.xlu0 %1710
      %1712 = vrot.lane.b32.xlu0 %v1645, 56
      %v1713 = vpop.permute.xlu0 %1712
      %1714 = vrot.lane.b32.xlu0 %v1646, 56
      %v1715 = vpop.permute.xlu0 %1714
      %1716 = vrot.lane.b32.xlu0 %v1647, 56
      %v1717 = vpop.permute.xlu0 %1716
      %1718 = vrot.lane.b32.xlu0 %v1648, 56
      %v1719 = vpop.permute.xlu0 %1718
      %1720 = vrot.lane.b32.xlu0 %v1649, 56
      %v1721 = vpop.permute.xlu0 %1720
      %1722 = vrot.lane.b32.xlu0 %v1650, 56
      %v1723 = vpop.permute.xlu0 %1722
      %1724 = vrot.lane.b32.xlu0 %v1651, 56
      %v1725 = vpop.permute.xlu0 %1724
      %1726 = vrot.lane.b32.xlu0 %v1652, 56
      %v1727 = vpop.permute.xlu0 %1726
      %1728 = vrot.lane.b32.xlu0 %v1653, 56
      %v1729 = vpop.permute.xlu0 %1728
      %1730 = vrot.lane.b32.xlu0 %v1654, 56
      %v1731 = vpop.permute.xlu0 %1730
      %1732 = vrot.lane.b32.xlu0 %v1655, 56
      %v1733 = vpop.permute.xlu0 %1732
      %1734 = vrot.lane.b32.xlu0 %v1656, 56
      %v1735 = vpop.permute.xlu0 %1734
      %1736 = vrot.lane.b32.xlu0 %v1657, 56
      %v1737 = vpop.permute.xlu0 %1736
      %1738 = vrot.lane.b32.xlu0 %v1658, 56
      %v1739 = vpop.permute.xlu0 %1738
      %1740 = vrot.lane.b32.xlu0 %v1659, 56
      %v1741 = vpop.permute.xlu0 %1740
      %1742 = vrot.lane.b32.xlu0 %v1660, 56
      %v1743 = vpop.permute.xlu0 %1742
      %1744 = vrot.lane.b32.xlu0 %v1661, 56
      %v1745 = vpop.permute.xlu0 %1744
      %1746 = vrot.lane.b32.xlu0 %v1662, 56
      %v1747 = vpop.permute.xlu0 %1746
      %1748 = vrot.lane.b32.xlu0 %v1663, 56
      %v1749 = vpop.permute.xlu0 %1748
      %1750 = vrot.lane.b32.xlu0 %v1664, 56
      %v1751 = vpop.permute.xlu0 %1750
      %1752 = vrot.lane.b32.xlu0 %v1665, 56
      %v1753 = vpop.permute.xlu0 %1752
      %1754 = vrot.lane.b32.xlu0 %v1666, 56
      %v1755 = vpop.permute.xlu0 %1754
      %1756 = vrot.lane.b32.xlu0 %v1667, 56
      %v1757 = vpop.permute.xlu0 %1756
      %1758 = vrot.lane.b32.xlu0 %v1668, 56
      %v1759 = vpop.permute.xlu0 %1758
      %1760 = vrot.lane.b32.xlu0 %v1669, 56
      %v1761 = vpop.permute.xlu0 %1760
      %1762 = vrot.lane.b32.xlu0 %v1670, 56
      %v1763 = vpop.permute.xlu0 %1762
      %1764 = vrot.lane.b32.xlu0 %v1671, 56
      %v1765 = vpop.permute.xlu0 %1764
      %1766 = vrot.lane.b32.xlu0 %v1672, 56
      %v1767 = vpop.permute.xlu0 %1766
      %1768 = vrot.lane.b32.xlu0 %v1673, 56
      %v1769 = vpop.permute.xlu0 %1768
      %vm1802 = vcmask 523712
      %1803 = vst.msk [vmem:[#allocation3] sm:$0xff] %vm1802, %v1707
      %1804 = vst.msk [vmem:[#allocation3 + $0x8] sm:$0xff] %vm1802, %v1709
      %1805 = vst.msk [vmem:[#allocation3 + $0x10] sm:$0xff] %vm1802, %v1711
      %1806 = vst.msk [vmem:[#allocation3 + $0x18] sm:$0xff] %vm1802, %v1713
      %1807 = vst.msk [vmem:[#allocation3 + $0x20] sm:$0xff] %vm1802, %v1715
      %1808 = vst.msk [vmem:[#allocation3 + $0x28] sm:$0xff] %vm1802, %v1717
      %1809 = vst.msk [vmem:[#allocation3 + $0x30] sm:$0xff] %vm1802, %v1719
      %1810 = vst.msk [vmem:[#allocation3 + $0x38] sm:$0xff] %vm1802, %v1721
      %1811 = vst.msk [vmem:[#allocation3 + $0x40] sm:$0xff] %vm1802, %v1723
      %1812 = vst.msk [vmem:[#allocation3 + $0x48] sm:$0xff] %vm1802, %v1725
      %1813 = vst.msk [vmem:[#allocation3 + $0x50] sm:$0xff] %vm1802, %v1727
      %1814 = vst.msk [vmem:[#allocation3 + $0x58] sm:$0xff] %vm1802, %v1729
      %1815 = vst.msk [vmem:[#allocation3 + $0x60] sm:$0xff] %vm1802, %v1731
      %1816 = vst.msk [vmem:[#allocation3 + $0x68] sm:$0xff] %vm1802, %v1733
      %1817 = vst.msk [vmem:[#allocation3 + $0x70] sm:$0xff] %vm1802, %v1735
      %1818 = vst.msk [vmem:[#allocation3 + $0x78] sm:$0xff] %vm1802, %v1737
      %1819 = vst.msk [vmem:[#allocation3 + $0x80] sm:$0xff] %vm1802, %v1739
      %1820 = vst.msk [vmem:[#allocation3 + $0x88] sm:$0xff] %vm1802, %v1741
      %1821 = vst.msk [vmem:[#allocation3 + $0x90] sm:$0xff] %vm1802, %v1743
      %1822 = vst.msk [vmem:[#allocation3 + $0x98] sm:$0xff] %vm1802, %v1745
      %1823 = vst.msk [vmem:[#allocation3 + $0xa0] sm:$0xff] %vm1802, %v1747
      %1824 = vst.msk [vmem:[#allocation3 + $0xa8] sm:$0xff] %vm1802, %v1749
      %1825 = vst.msk [vmem:[#allocation3 + $0xb0] sm:$0xff] %vm1802, %v1751
      %1826 = vst.msk [vmem:[#allocation3 + $0xb8] sm:$0xff] %vm1802, %v1753
      %1827 = vst.msk [vmem:[#allocation3 + $0xc0] sm:$0xff] %vm1802, %v1755
      %1828 = vst.msk [vmem:[#allocation3 + $0xc8] sm:$0xff] %vm1802, %v1757
      %1829 = vst.msk [vmem:[#allocation3 + $0xd0] sm:$0xff] %vm1802, %v1759
      %1830 = vst.msk [vmem:[#allocation3 + $0xd8] sm:$0xff] %vm1802, %v1761
      %1831 = vst.msk [vmem:[#allocation3 + $0xe0] sm:$0xff] %vm1802, %v1763
      %1832 = vst.msk [vmem:[#allocation3 + $0xe8] sm:$0xff] %vm1802, %v1765
      %1833 = vst.msk [vmem:[#allocation3 + $0xf0] sm:$0xff] %vm1802, %v1767
      %1834 = vst.msk [vmem:[#allocation3 + $0xf8] sm:$0xff] %vm1802, %v1769
      %v1835 = vld [vmem:[%s1448 + $0x2] sm:$0xff]
      %v1836 = vld [vmem:[%s1448 + $0xa] sm:$0xff]
      %v1837 = vld [vmem:[%s1448 + $0x1a] sm:$0xff]
      %v1838 = vld [vmem:[%s1448 + $0x22] sm:$0xff]
      %v1839 = vld [vmem:[%s1448 + $0x32] sm:$0xff]
      %v1840 = vld [vmem:[%s1448 + $0x3a] sm:$0xff]
      %v1841 = vld [vmem:[%s1448 + $0x4a] sm:$0xff]
      %v1842 = vld [vmem:[%s1448 + $0x52] sm:$0xff]
      %v1843 = vld [vmem:[%s1448 + $0x62] sm:$0xff]
      %v1844 = vld [vmem:[%s1448 + $0x6a] sm:$0xff]
      %v1845 = vld [vmem:[%s1448 + $0x7a] sm:$0xff]
      %v1846 = vld [vmem:[%s1448 + $0x82] sm:$0xff]
      %v1847 = vld [vmem:[%s1448 + $0x92] sm:$0xff]
      %v1848 = vld [vmem:[%s1448 + $0x9a] sm:$0xff]
      %v1849 = vld [vmem:[%s1448 + $0xaa] sm:$0xff]
      %v1850 = vld [vmem:[%s1448 + $0xb2] sm:$0xff]
      %v1851 = vld [vmem:[%s1448 + $0xc2] sm:$0xff]
      %v1852 = vld [vmem:[%s1448 + $0xca] sm:$0xff]
      %v1853 = vld [vmem:[%s1448 + $0xda] sm:$0xff]
      %v1854 = vld [vmem:[%s1448 + $0xe2] sm:$0xff]
      %v1855 = vld [vmem:[%s1448 + $0xf2] sm:$0xff]
      %v1856 = vld [vmem:[%s1448 + $0xfa] sm:$0xff]
      %v1857 = vld [vmem:[%s1448 + $0x10a] sm:$0xff]
      %v1858 = vld [vmem:[%s1448 + $0x112] sm:$0xff]
      %v1859 = vld [vmem:[%s1448 + $0x122] sm:$0xff]
      %v1860 = vld [vmem:[%s1448 + $0x12a] sm:$0xff]
      %v1861 = vld [vmem:[%s1448 + $0x13a] sm:$0xff]
      %v1862 = vld [vmem:[%s1448 + $0x142] sm:$0xff]
      %v1863 = vld [vmem:[%s1448 + $0x152] sm:$0xff]
      %v1864 = vld [vmem:[%s1448 + $0x15a] sm:$0xff]
      %v1865 = vld [vmem:[%s1448 + $0x16a] sm:$0xff]
      %v1866 = vld [vmem:[%s1448 + $0x172] sm:$0xff]
      %1899 = vrot.lane.b32.xlu0 %v1835, 64
      %v1900 = vpop.permute.xlu0 %1899
      %1901 = vrot.lane.b32.xlu0 %v1836, 64
      %v1902 = vpop.permute.xlu0 %1901
      %1903 = vrot.lane.b32.xlu0 %v1837, 64
      %v1904 = vpop.permute.xlu0 %1903
      %1905 = vrot.lane.b32.xlu0 %v1838, 64
      %v1906 = vpop.permute.xlu0 %1905
      %1907 = vrot.lane.b32.xlu0 %v1839, 64
      %v1908 = vpop.permute.xlu0 %1907
      %1909 = vrot.lane.b32.xlu0 %v1840, 64
      %v1910 = vpop.permute.xlu0 %1909
      %1911 = vrot.lane.b32.xlu0 %v1841, 64
      %v1912 = vpop.permute.xlu0 %1911
      %1913 = vrot.lane.b32.xlu0 %v1842, 64
      %v1914 = vpop.permute.xlu0 %1913
      %1915 = vrot.lane.b32.xlu0 %v1843, 64
      %v1916 = vpop.permute.xlu0 %1915
      %1917 = vrot.lane.b32.xlu0 %v1844, 64
      %v1918 = vpop.permute.xlu0 %1917
      %1919 = vrot.lane.b32.xlu0 %v1845, 64
      %v1920 = vpop.permute.xlu0 %1919
      %1921 = vrot.lane.b32.xlu0 %v1846, 64
      %v1922 = vpop.permute.xlu0 %1921
      %1923 = vrot.lane.b32.xlu0 %v1847, 64
      %v1924 = vpop.permute.xlu0 %1923
      %1925 = vrot.lane.b32.xlu0 %v1848, 64
      %v1926 = vpop.permute.xlu0 %1925
      %1927 = vrot.lane.b32.xlu0 %v1849, 64
      %v1928 = vpop.permute.xlu0 %1927
      %1929 = vrot.lane.b32.xlu0 %v1850, 64
      %v1930 = vpop.permute.xlu0 %1929
      %1931 = vrot.lane.b32.xlu0 %v1851, 64
      %v1932 = vpop.permute.xlu0 %1931
      %1933 = vrot.lane.b32.xlu0 %v1852, 64
      %v1934 = vpop.permute.xlu0 %1933
      %1935 = vrot.lane.b32.xlu0 %v1853, 64
      %v1936 = vpop.permute.xlu0 %1935
      %1937 = vrot.lane.b32.xlu0 %v1854, 64
      %v1938 = vpop.permute.xlu0 %1937
      %1939 = vrot.lane.b32.xlu0 %v1855, 64
      %v1940 = vpop.permute.xlu0 %1939
      %1941 = vrot.lane.b32.xlu0 %v1856, 64
      %v1942 = vpop.permute.xlu0 %1941
      %1943 = vrot.lane.b32.xlu0 %v1857, 64
      %v1944 = vpop.permute.xlu0 %1943
      %1945 = vrot.lane.b32.xlu0 %v1858, 64
      %v1946 = vpop.permute.xlu0 %1945
      %1947 = vrot.lane.b32.xlu0 %v1859, 64
      %v1948 = vpop.permute.xlu0 %1947
      %1949 = vrot.lane.b32.xlu0 %v1860, 64
      %v1950 = vpop.permute.xlu0 %1949
      %1951 = vrot.lane.b32.xlu0 %v1861, 64
      %v1952 = vpop.permute.xlu0 %1951
      %1953 = vrot.lane.b32.xlu0 %v1862, 64
      %v1954 = vpop.permute.xlu0 %1953
      %1955 = vrot.lane.b32.xlu0 %v1863, 64
      %v1956 = vpop.permute.xlu0 %1955
      %1957 = vrot.lane.b32.xlu0 %v1864, 64
      %v1958 = vpop.permute.xlu0 %1957
      %1959 = vrot.lane.b32.xlu0 %v1865, 64
      %v1960 = vpop.permute.xlu0 %1959
      %1961 = vrot.lane.b32.xlu0 %v1866, 64
      %v1962 = vpop.permute.xlu0 %1961
      %vm1995 = vcmask 589312
      %1996 = vst.msk [vmem:[#allocation3] sm:$0xff] %vm1995, %v1900
      %1997 = vst.msk [vmem:[#allocation3 + $0x8] sm:$0xff] %vm1995, %v1902
      %1998 = vst.msk [vmem:[#allocation3 + $0x10] sm:$0xff] %vm1995, %v1904
      %1999 = vst.msk [vmem:[#allocation3 + $0x18] sm:$0xff] %vm1995, %v1906
      %2000 = vst.msk [vmem:[#allocation3 + $0x20] sm:$0xff] %vm1995, %v1908
      %2001 = vst.msk [vmem:[#allocation3 + $0x28] sm:$0xff] %vm1995, %v1910
      %2002 = vst.msk [vmem:[#allocation3 + $0x30] sm:$0xff] %vm1995, %v1912
      %2003 = vst.msk [vmem:[#allocation3 + $0x38] sm:$0xff] %vm1995, %v1914
      %2004 = vst.msk [vmem:[#allocation3 + $0x40] sm:$0xff] %vm1995, %v1916
      %2005 = vst.msk [vmem:[#allocation3 + $0x48] sm:$0xff] %vm1995, %v1918
      %2006 = vst.msk [vmem:[#allocation3 + $0x50] sm:$0xff] %vm1995, %v1920
      %2007 = vst.msk [vmem:[#allocation3 + $0x58] sm:$0xff] %vm1995, %v1922
      %2008 = vst.msk [vmem:[#allocation3 + $0x60] sm:$0xff] %vm1995, %v1924
      %2009 = vst.msk [vmem:[#allocation3 + $0x68] sm:$0xff] %vm1995, %v1926
      %2010 = vst.msk [vmem:[#allocation3 + $0x70] sm:$0xff] %vm1995, %v1928
      %2011 = vst.msk [vmem:[#allocation3 + $0x78] sm:$0xff] %vm1995, %v1930
      %2012 = vst.msk [vmem:[#allocation3 + $0x80] sm:$0xff] %vm1995, %v1932
      %2013 = vst.msk [vmem:[#allocation3 + $0x88] sm:$0xff] %vm1995, %v1934
      %2014 = vst.msk [vmem:[#allocation3 + $0x90] sm:$0xff] %vm1995, %v1936
      %2015 = vst.msk [vmem:[#allocation3 + $0x98] sm:$0xff] %vm1995, %v1938
      %2016 = vst.msk [vmem:[#allocation3 + $0xa0] sm:$0xff] %vm1995, %v1940
      %2017 = vst.msk [vmem:[#allocation3 + $0xa8] sm:$0xff] %vm1995, %v1942
      %2018 = vst.msk [vmem:[#allocation3 + $0xb0] sm:$0xff] %vm1995, %v1944
      %2019 = vst.msk [vmem:[#allocation3 + $0xb8] sm:$0xff] %vm1995, %v1946
      %2020 = vst.msk [vmem:[#allocation3 + $0xc0] sm:$0xff] %vm1995, %v1948
      %2021 = vst.msk [vmem:[#allocation3 + $0xc8] sm:$0xff] %vm1995, %v1950
      %2022 = vst.msk [vmem:[#allocation3 + $0xd0] sm:$0xff] %vm1995, %v1952
      %2023 = vst.msk [vmem:[#allocation3 + $0xd8] sm:$0xff] %vm1995, %v1954
      %2024 = vst.msk [vmem:[#allocation3 + $0xe0] sm:$0xff] %vm1995, %v1956
      %2025 = vst.msk [vmem:[#allocation3 + $0xe8] sm:$0xff] %vm1995, %v1958
      %2026 = vst.msk [vmem:[#allocation3 + $0xf0] sm:$0xff] %vm1995, %v1960
      %2027 = vst.msk [vmem:[#allocation3 + $0xf8] sm:$0xff] %vm1995, %v1962
      %v2028 = vld [vmem:[#allocation3] sm:$0xff]
      %v2029 = vld [vmem:[#allocation3 + $0x8] sm:$0xff]
      %v2030 = vld [vmem:[#allocation3 + $0x10] sm:$0xff]
      %v2031 = vld [vmem:[#allocation3 + $0x18] sm:$0xff]
      %v2032 = vld [vmem:[#allocation3 + $0x20] sm:$0xff]
      %v2033 = vld [vmem:[#allocation3 + $0x28] sm:$0xff]
      %v2034 = vld [vmem:[#allocation3 + $0x30] sm:$0xff]
      %v2035 = vld [vmem:[#allocation3 + $0x38] sm:$0xff]
      %v2036 = vld [vmem:[#allocation3 + $0x40] sm:$0xff]
      %v2037 = vld [vmem:[#allocation3 + $0x48] sm:$0xff]
      %v2038 = vld [vmem:[#allocation3 + $0x50] sm:$0xff]
      %v2039 = vld [vmem:[#allocation3 + $0x58] sm:$0xff]
      %v2040 = vld [vmem:[#allocation3 + $0x60] sm:$0xff]
      %v2041 = vld [vmem:[#allocation3 + $0x68] sm:$0xff]
      %v2042 = vld [vmem:[#allocation3 + $0x70] sm:$0xff]
      %v2043 = vld [vmem:[#allocation3 + $0x78] sm:$0xff]
      %v2044 = vld [vmem:[#allocation3 + $0x80] sm:$0xff]
      %v2045 = vld [vmem:[#allocation3 + $0x88] sm:$0xff]
      %v2046 = vld [vmem:[#allocation3 + $0x90] sm:$0xff]
      %v2047 = vld [vmem:[#allocation3 + $0x98] sm:$0xff]
      %v2048 = vld [vmem:[#allocation3 + $0xa0] sm:$0xff]
      %v2049 = vld [vmem:[#allocation3 + $0xa8] sm:$0xff]
      %v2050 = vld [vmem:[#allocation3 + $0xb0] sm:$0xff]
      %v2051 = vld [vmem:[#allocation3 + $0xb8] sm:$0xff]
      %v2052 = vld [vmem:[#allocation3 + $0xc0] sm:$0xff]
      %v2053 = vld [vmem:[#allocation3 + $0xc8] sm:$0xff]
      %v2054 = vld [vmem:[#allocation3 + $0xd0] sm:$0xff]
      %v2055 = vld [vmem:[#allocation3 + $0xd8] sm:$0xff]
      %v2056 = vld [vmem:[#allocation3 + $0xe0] sm:$0xff]
      %v2057 = vld [vmem:[#allocation3 + $0xe8] sm:$0xff]
      %v2058 = vld [vmem:[#allocation3 + $0xf0] sm:$0xff]
      %v2059 = vld [vmem:[#allocation3 + $0xf8] sm:$0xff]
      %v2060 = vld [vmem:[%s3] sm:$0xff]
      %v2061 = vld [vmem:[%s3 + $0x8] sm:$0xff]
      %v2062 = vld [vmem:[%s3 + $0x10] sm:$0xff]
      %v2063 = vld [vmem:[%s3 + $0x18] sm:$0xff]
      %v2064 = vld [vmem:[%s3 + $0x20] sm:$0xff]
      %v2065 = vld [vmem:[%s3 + $0x28] sm:$0xff]
      %v2066 = vld [vmem:[%s3 + $0x30] sm:$0xff]
      %v2067 = vld [vmem:[%s3 + $0x38] sm:$0xff]
      %v2068 = vld [vmem:[%s3 + $0x40] sm:$0xff]
      %v2069 = vld [vmem:[%s192] sm:$0xff]
      %v2070 = vld [vmem:[%s192 + $0x8] sm:$0xff]
      %v2071 = vld [vmem:[%s192 + $0x10] sm:$0xff]
      %v2072 = vld [vmem:[%s192 + $0x18] sm:$0xff]
      %v2073 = vld [vmem:[%s192 + $0x20] sm:$0xff]
      %v2074 = vld [vmem:[%s192 + $0x28] sm:$0xff]
      %v2075 = vld [vmem:[%s192 + $0x30] sm:$0xff]
      %v2076 = vld [vmem:[%s192 + $0x38] sm:$0xff]
      %v2077 = vld [vmem:[%s192 + $0x40] sm:$0xff]
      %v2078 = vld [vmem:[%s192 + $0x48] sm:$0xff]
      %v2079 = vld [vmem:[%s192 + $0x50] sm:$0xff]
      %v2080 = vld [vmem:[%s192 + $0x58] sm:$0xff]
      %v2081 = vld [vmem:[%s192 + $0x60] sm:$0xff]
      %v2082 = vld [vmem:[%s192 + $0x68] sm:$0xff]
      %v2083 = vld [vmem:[%s192 + $0x70] sm:$0xff]
      %v2084 = vld [vmem:[%s192 + $0x78] sm:$0xff]
      %v2085 = vld [vmem:[%s192 + $0x80] sm:$0xff]
      %v2086 = vld [vmem:[%s192 + $0x88] sm:$0xff]
      %v2087 = vld [vmem:[%s192 + $0x90] sm:$0xff]
      %v2088 = vld [vmem:[%s192 + $0x98] sm:$0xff]
      %v2089 = vld [vmem:[%s192 + $0xa0] sm:$0xff]
      %v2090 = vld [vmem:[%s192 + $0xa8] sm:$0xff]
      %v2091 = vld [vmem:[%s192 + $0xb0] sm:$0xff]
      %v2092 = vld [vmem:[%s192 + $0xb8] sm:$0xff]
      %v2093 = vld [vmem:[%s192 + $0xc0] sm:$0xff]
      %v2094 = vld [vmem:[%s192 + $0xc8] sm:$0xff]
      %v2095 = vld [vmem:[%s192 + $0xd0] sm:$0xff]
      %v2096 = vld [vmem:[%s192 + $0xd8] sm:$0xff]
      %v2097 = vld [vmem:[%s192 + $0xe0] sm:$0xff]
      %v2098 = vld [vmem:[%s192 + $0xe8] sm:$0xff]
      %v2099 = vld [vmem:[%s192 + $0xf0] sm:$0xff]
      %v2100 = vld [vmem:[%s192 + $0xf8] sm:$0xff]
      %2133 = vrot.lane.b32.xlu0 %v2069, 120
      %v2134 = vpop.permute.xlu0 %2133
      %2135 = vrot.lane.b32.xlu0 %v2070, 120
      %v2136 = vpop.permute.xlu0 %2135
      %2137 = vrot.lane.b32.xlu0 %v2071, 120
      %v2138 = vpop.permute.xlu0 %2137
      %2139 = vrot.lane.b32.xlu0 %v2072, 120
      %v2140 = vpop.permute.xlu0 %2139
      %2141 = vrot.lane.b32.xlu0 %v2073, 120
      %v2142 = vpop.permute.xlu0 %2141
      %2143 = vrot.lane.b32.xlu0 %v2074, 120
      %v2144 = vpop.permute.xlu0 %2143
      %2145 = vrot.lane.b32.xlu0 %v2075, 120
      %v2146 = vpop.permute.xlu0 %2145
      %2147 = vrot.lane.b32.xlu0 %v2076, 120
      %v2148 = vpop.permute.xlu0 %2147
      %2149 = vrot.lane.b32.xlu0 %v2077, 120
      %v2150 = vpop.permute.xlu0 %2149
      %2151 = vrot.lane.b32.xlu0 %v2078, 120
      %v2152 = vpop.permute.xlu0 %2151
      %2153 = vrot.lane.b32.xlu0 %v2079, 120
      %v2154 = vpop.permute.xlu0 %2153
      %2155 = vrot.lane.b32.xlu0 %v2080, 120
      %v2156 = vpop.permute.xlu0 %2155
      %2157 = vrot.lane.b32.xlu0 %v2081, 120
      %v2158 = vpop.permute.xlu0 %2157
      %2159 = vrot.lane.b32.xlu0 %v2082, 120
      %v2160 = vpop.permute.xlu0 %2159
      %2161 = vrot.lane.b32.xlu0 %v2083, 120
      %v2162 = vpop.permute.xlu0 %2161
      %2163 = vrot.lane.b32.xlu0 %v2084, 120
      %v2164 = vpop.permute.xlu0 %2163
      %2165 = vrot.lane.b32.xlu0 %v2085, 120
      %v2166 = vpop.permute.xlu0 %2165
      %2167 = vrot.lane.b32.xlu0 %v2086, 120
      %v2168 = vpop.permute.xlu0 %2167
      %2169 = vrot.lane.b32.xlu0 %v2087, 120
      %v2170 = vpop.permute.xlu0 %2169
      %2171 = vrot.lane.b32.xlu0 %v2088, 120
      %v2172 = vpop.permute.xlu0 %2171
      %2173 = vrot.lane.b32.xlu0 %v2089, 120
      %v2174 = vpop.permute.xlu0 %2173
      %2175 = vrot.lane.b32.xlu0 %v2090, 120
      %v2176 = vpop.permute.xlu0 %2175
      %2177 = vrot.lane.b32.xlu0 %v2091, 120
      %v2178 = vpop.permute.xlu0 %2177
      %2179 = vrot.lane.b32.xlu0 %v2092, 120
      %v2180 = vpop.permute.xlu0 %2179
      %2181 = vrot.lane.b32.xlu0 %v2093, 120
      %v2182 = vpop.permute.xlu0 %2181
      %2183 = vrot.lane.b32.xlu0 %v2094, 120
      %v2184 = vpop.permute.xlu0 %2183
      %2185 = vrot.lane.b32.xlu0 %v2095, 120
      %v2186 = vpop.permute.xlu0 %2185
      %2187 = vrot.lane.b32.xlu0 %v2096, 120
      %v2188 = vpop.permute.xlu0 %2187
      %2189 = vrot.lane.b32.xlu0 %v2097, 120
      %v2190 = vpop.permute.xlu0 %2189
      %2191 = vrot.lane.b32.xlu0 %v2098, 120
      %v2192 = vpop.permute.xlu0 %2191
      %2193 = vrot.lane.b32.xlu0 %v2099, 120
      %v2194 = vpop.permute.xlu0 %2193
      %2195 = vrot.lane.b32.xlu0 %v2100, 120
      %v2196 = vpop.permute.xlu0 %2195
      %vm2229 = vcmask 588800
      %v2231 = vsel %vm2229, %v2028, 0
      %v2234 = vsel %vm2229, %v2029, 0
      %v2237 = vsel %vm2229, %v2030, 0
      %v2240 = vsel %vm2229, %v2031, 0
      %v2243 = vsel %vm2229, %v2032, 0
      %v2246 = vsel %vm2229, %v2033, 0
      %v2249 = vsel %vm2229, %v2034, 0
      %v2252 = vsel %vm2229, %v2035, 0
      %v2255 = vsel %vm2229, %v2036, 0
      %v2258 = vsel %vm2229, %v2037, 0
      %v2261 = vsel %vm2229, %v2038, 0
      %v2264 = vsel %vm2229, %v2039, 0
      %v2267 = vsel %vm2229, %v2040, 0
      %v2270 = vsel %vm2229, %v2041, 0
      %v2273 = vsel %vm2229, %v2042, 0
      %v2276 = vsel %vm2229, %v2043, 0
      %v2279 = vsel %vm2229, %v2044, 0
      %v2282 = vsel %vm2229, %v2045, 0
      %v2285 = vsel %vm2229, %v2046, 0
      %v2288 = vsel %vm2229, %v2047, 0
      %v2291 = vsel %vm2229, %v2048, 0
      %v2294 = vsel %vm2229, %v2049, 0
      %v2297 = vsel %vm2229, %v2050, 0
      %v2300 = vsel %vm2229, %v2051, 0
      %v2303 = vsel %vm2229, %v2052, 0
      %v2306 = vsel %vm2229, %v2053, 0
      %v2309 = vsel %vm2229, %v2054, 0
      %v2312 = vsel %vm2229, %v2055, 0
      %v2315 = vsel %vm2229, %v2056, 0
      %v2318 = vsel %vm2229, %v2057, 0
      %v2321 = vsel %vm2229, %v2058, 0
      %v2324 = vsel %vm2229, %v2059, 0
      %2326 = vmatprep.subr.mxu0 0.0
      %2327 = vmatpush1.msra.mxu0 %v2060
      %2328 = vmatprep.subr.mxu0 0.0
      %2329 = vmatpush1.msra.mxu0 %v2061
      %2330 = vmatprep.subr.mxu0 0.0
      %2331 = vmatpush1.msra.mxu0 %v2062
      %2332 = vmatprep.subr.mxu0 0.0
      %2333 = vmatpush1.msra.mxu0 %v2063
      %2334 = vmatprep.subr.mxu0 0.0
      %2335 = vmatpush1.msra.mxu0 %v2064
      %2336 = vmatprep.subr.mxu0 0.0
      %2337 = vmatpush1.msra.mxu0 %v2065
      %2338 = vmatprep.subr.mxu0 0.0
      %2339 = vmatpush1.msra.mxu0 %v2066
      %2340 = vmatprep.subr.mxu0 0.0
      %2341 = vmatpush1.msra.mxu0 %v2067
      %2342 = vmatprep.subr.mxu0 0.0
      %2343 = vmatpush1.msra.mxu0 %v2068
      %2344 = vmatprep.subr.mxu0 0.0
      %2345 = vmatpush1.msra.mxu0 0.0
      %2346 = vmatprep.subr.mxu0 0.0
      %2347 = vmatpush1.msra.mxu0 0.0
      %2348 = vmatprep.subr.mxu0 0.0
      %2349 = vmatpush1.msra.mxu0 0.0
      %2350 = vmatprep.subr.mxu0 0.0
      %2351 = vmatpush1.msra.mxu0 0.0
      %2352 = vmatprep.subr.mxu0 0.0
      %2353 = vmatpush1.msra.mxu0 0.0
      %2354 = vmatprep.subr.mxu0 0.0
      %2355 = vmatpush1.msra.mxu0 0.0
      %2356 = vmatprep.subr.mxu0 0.0
      %2357 = vmatpush1.msra.mxu0 0.0
      %2358 = vmatprep.subr.mxu0 0.0
      %2359 = vmatpush1.msra.mxu0 0.0
      %2360 = vmatprep.subr.mxu0 0.0
      %2361 = vmatpush1.msra.mxu0 0.0
      %2362 = vmatprep.subr.mxu0 0.0
      %2363 = vmatpush1.msra.mxu0 0.0
      %2364 = vmatprep.subr.mxu0 0.0
      %2365 = vmatpush1.msra.mxu0 0.0
      %2366 = vmatprep.subr.mxu0 0.0
      %2367 = vmatpush1.msra.mxu0 0.0
      %2368 = vmatprep.subr.mxu0 0.0
      %2369 = vmatpush1.msra.mxu0 0.0
      %2370 = vmatprep.subr.mxu0 0.0
      %2371 = vmatpush1.msra.mxu0 0.0
      %2372 = vmatprep.subr.mxu0 0.0
      %2373 = vmatpush1.msra.mxu0 0.0
      %2374 = vmatprep.subr.mxu0 0.0
      %2375 = vmatpush1.msra.mxu0 0.0
      %2376 = vmatprep.subr.mxu0 0.0
      %2377 = vmatpush1.msra.mxu0 0.0
      %2378 = vmatprep.subr.mxu0 0.0
      %2379 = vmatpush1.msra.mxu0 0.0
      %2380 = vmatprep.subr.mxu0 0.0
      %2381 = vmatpush1.msra.mxu0 0.0
      %2382 = vmatprep.subr.mxu0 0.0
      %2383 = vmatpush1.msra.mxu0 0.0
      %2384 = vmatprep.subr.mxu0 0.0
      %2385 = vmatpush1.msra.mxu0 0.0
      %2386 = vmatprep.subr.mxu0 0.0
      %2387 = vmatpush1.msra.mxu0 0.0
      %2388 = vmatprep.subr.mxu0 0.0
      %2389 = vmatpush1.msra.mxu0 0.0
      %2390 = vmatprep.mubr.f32.mxu0 0.0
      %2391 = vmatmul.mubr.f32.gmra.mrb[0].mxu0 %v2231
      %v2392 = vpop.f32.mrb[0].mxu0
      %v2393 = vadd.f32 %v2134, %v2392
      %v2394 = vpop.f32.mrb[0].mxu0
      %2395 = vmatprep.mubr.f32.mxu0 0.0
      %2396 = vmatmul.mubr.f32.gmra.mrb[0].mxu0 %v2234
      %v2397 = vpop.f32.mrb[0].mxu0
      %v2398 = vadd.f32 %v2136, %v2397
      %v2399 = vpop.f32.mrb[0].mxu0
      %2400 = vmatprep.mubr.f32.mxu0 0.0
      %2401 = vmatmul.mubr.f32.gmra.mrb[0].mxu0 %v2237
      %v2402 = vpop.f32.mrb[0].mxu0
      %v2403 = vadd.f32 %v2138, %v2402
      %v2404 = vpop.f32.mrb[0].mxu0
      %2405 = vmatprep.mubr.f32.mxu0 0.0
      %2406 = vmatmul.mubr.f32.gmra.mrb[0].mxu0 %v2240
      %v2407 = vpop.f32.mrb[0].mxu0
      %v2408 = vadd.f32 %v2140, %v2407
      %v2409 = vpop.f32.mrb[0].mxu0
      %2410 = vmatprep.mubr.f32.mxu0 0.0
      %2411 = vmatmul.mubr.f32.gmra.mrb[0].mxu0 %v2243
      %v2412 = vpop.f32.mrb[0].mxu0
      %v2413 = vadd.f32 %v2142, %v2412
      %v2414 = vpop.f32.mrb[0].mxu0
      %2415 = vmatprep.mubr.f32.mxu0 0.0
      %2416 = vmatmul.mubr.f32.gmra.mrb[0].mxu0 %v2246
      %v2417 = vpop.f32.mrb[0].mxu0
      %v2418 = vadd.f32 %v2144, %v2417
      %v2419 = vpop.f32.mrb[0].mxu0
      %2420 = vmatprep.mubr.f32.mxu0 0.0
      %2421 = vmatmul.mubr.f32.gmra.mrb[0].mxu0 %v2249
      %v2422 = vpop.f32.mrb[0].mxu0
      %v2423 = vadd.f32 %v2146, %v2422
      %v2424 = vpop.f32.mrb[0].mxu0
      %2425 = vmatprep.mubr.f32.mxu0 0.0
      %2426 = vmatmul.mubr.f32.gmra.mrb[0].mxu0 %v2252
      %v2427 = vpop.f32.mrb[0].mxu0
      %v2428 = vadd.f32 %v2148, %v2427
      %v2429 = vpop.f32.mrb[0].mxu0
      %2430 = vmatprep.mubr.f32.mxu0 0.0
      %2431 = vmatmul.mubr.f32.gmra.mrb[0].mxu0 %v2255
      %v2432 = vpop.f32.mrb[0].mxu0
      %v2433 = vadd.f32 %v2150, %v2432
      %v2434 = vpop.f32.mrb[0].mxu0
      %2435 = vmatprep.mubr.f32.mxu0 0.0
      %2436 = vmatmul.mubr.f32.gmra.mrb[0].mxu0 %v2258
      %v2437 = vpop.f32.mrb[0].mxu0
      %v2438 = vadd.f32 %v2152, %v2437
      %v2439 = vpop.f32.mrb[0].mxu0
      %2440 = vmatprep.mubr.f32.mxu0 0.0
      %2441 = vmatmul.mubr.f32.gmra.mrb[0].mxu0 %v2261
      %v2442 = vpop.f32.mrb[0].mxu0
      %v2443 = vadd.f32 %v2154, %v2442
      %v2444 = vpop.f32.mrb[0].mxu0
      %2445 = vmatprep.mubr.f32.mxu0 0.0
      %2446 = vmatmul.mubr.f32.gmra.mrb[0].mxu0 %v2264
      %v2447 = vpop.f32.mrb[0].mxu0
      %v2448 = vadd.f32 %v2156, %v2447
      %v2449 = vpop.f32.mrb[0].mxu0
      %2450 = vmatprep.mubr.f32.mxu0 0.0
      %2451 = vmatmul.mubr.f32.gmra.mrb[0].mxu0 %v2267
      %v2452 = vpop.f32.mrb[0].mxu0
      %v2453 = vadd.f32 %v2158, %v2452
      %v2454 = vpop.f32.mrb[0].mxu0
      %2455 = vmatprep.mubr.f32.mxu0 0.0
      %2456 = vmatmul.mubr.f32.gmra.mrb[0].mxu0 %v2270
      %v2457 = vpop.f32.mrb[0].mxu0
      %v2458 = vadd.f32 %v2160, %v2457
      %v2459 = vpop.f32.mrb[0].mxu0
      %2460 = vmatprep.mubr.f32.mxu0 0.0
      %2461 = vmatmul.mubr.f32.gmra.mrb[0].mxu0 %v2273
      %v2462 = vpop.f32.mrb[0].mxu0
      %v2463 = vadd.f32 %v2162, %v2462
      %v2464 = vpop.f32.mrb[0].mxu0
      %2465 = vmatprep.mubr.f32.mxu0 0.0
      %2466 = vmatmul.mubr.f32.gmra.mrb[0].mxu0 %v2276
      %v2467 = vpop.f32.mrb[0].mxu0
      %v2468 = vadd.f32 %v2164, %v2467
      %v2469 = vpop.f32.mrb[0].mxu0
      %2470 = vmatprep.mubr.f32.mxu0 0.0
      %2471 = vmatmul.mubr.f32.gmra.mrb[0].mxu0 %v2279
      %v2472 = vpop.f32.mrb[0].mxu0
      %v2473 = vadd.f32 %v2166, %v2472
      %v2474 = vpop.f32.mrb[0].mxu0
      %2475 = vmatprep.mubr.f32.mxu0 0.0
      %2476 = vmatmul.mubr.f32.gmra.mrb[0].mxu0 %v2282
      %v2477 = vpop.f32.mrb[0].mxu0
      %v2478 = vadd.f32 %v2168, %v2477
      %v2479 = vpop.f32.mrb[0].mxu0
      %2480 = vmatprep.mubr.f32.mxu0 0.0
      %2481 = vmatmul.mubr.f32.gmra.mrb[0].mxu0 %v2285
      %v2482 = vpop.f32.mrb[0].mxu0
      %v2483 = vadd.f32 %v2170, %v2482
      %v2484 = vpop.f32.mrb[0].mxu0
      %2485 = vmatprep.mubr.f32.mxu0 0.0
      %2486 = vmatmul.mubr.f32.gmra.mrb[0].mxu0 %v2288
      %v2487 = vpop.f32.mrb[0].mxu0
      %v2488 = vadd.f32 %v2172, %v2487
      %v2489 = vpop.f32.mrb[0].mxu0
      %2490 = vmatprep.mubr.f32.mxu0 0.0
      %2491 = vmatmul.mubr.f32.gmra.mrb[0].mxu0 %v2291
      %v2492 = vpop.f32.mrb[0].mxu0
      %v2493 = vadd.f32 %v2174, %v2492
      %v2494 = vpop.f32.mrb[0].mxu0
      %2495 = vmatprep.mubr.f32.mxu0 0.0
      %2496 = vmatmul.mubr.f32.gmra.mrb[0].mxu0 %v2294
      %v2497 = vpop.f32.mrb[0].mxu0
      %v2498 = vadd.f32 %v2176, %v2497
      %v2499 = vpop.f32.mrb[0].mxu0
      %2500 = vmatprep.mubr.f32.mxu0 0.0
      %2501 = vmatmul.mubr.f32.gmra.mrb[0].mxu0 %v2297
      %v2502 = vpop.f32.mrb[0].mxu0
      %v2503 = vadd.f32 %v2178, %v2502
      %v2504 = vpop.f32.mrb[0].mxu0
      %2505 = vmatprep.mubr.f32.mxu0 0.0
      %2506 = vmatmul.mubr.f32.gmra.mrb[0].mxu0 %v2300
      %v2507 = vpop.f32.mrb[0].mxu0
      %v2508 = vadd.f32 %v2180, %v2507
      %v2509 = vpop.f32.mrb[0].mxu0
      %2510 = vmatprep.mubr.f32.mxu0 0.0
      %2511 = vmatmul.mubr.f32.gmra.mrb[0].mxu0 %v2303
      %v2512 = vpop.f32.mrb[0].mxu0
      %v2513 = vadd.f32 %v2182, %v2512
      %v2514 = vpop.f32.mrb[0].mxu0
      %2515 = vmatprep.mubr.f32.mxu0 0.0
      %2516 = vmatmul.mubr.f32.gmra.mrb[0].mxu0 %v2306
      %v2517 = vpop.f32.mrb[0].mxu0
      %v2518 = vadd.f32 %v2184, %v2517
      %v2519 = vpop.f32.mrb[0].mxu0
      %2520 = vmatprep.mubr.f32.mxu0 0.0
      %2521 = vmatmul.mubr.f32.gmra.mrb[0].mxu0 %v2309
      %v2522 = vpop.f32.mrb[0].mxu0
      %v2523 = vadd.f32 %v2186, %v2522
      %v2524 = vpop.f32.mrb[0].mxu0
      %2525 = vmatprep.mubr.f32.mxu0 0.0
      %2526 = vmatmul.mubr.f32.gmra.mrb[0].mxu0 %v2312
      %v2527 = vpop.f32.mrb[0].mxu0
      %v2528 = vadd.f32 %v2188, %v2527
      %v2529 = vpop.f32.mrb[0].mxu0
      %2530 = vmatprep.mubr.f32.mxu0 0.0
      %2531 = vmatmul.mubr.f32.gmra.mrb[0].mxu0 %v2315
      %v2532 = vpop.f32.mrb[0].mxu0
      %v2533 = vadd.f32 %v2190, %v2532
      %v2534 = vpop.f32.mrb[0].mxu0
      %2535 = vmatprep.mubr.f32.mxu0 0.0
      %2536 = vmatmul.mubr.f32.gmra.mrb[0].mxu0 %v2318
      %v2537 = vpop.f32.mrb[0].mxu0
      %v2538 = vadd.f32 %v2192, %v2537
      %v2539 = vpop.f32.mrb[0].mxu0
      %2540 = vmatprep.mubr.f32.mxu0 0.0
      %2541 = vmatmul.mubr.f32.gmra.mrb[0].mxu0 %v2321
      %v2542 = vpop.f32.mrb[0].mxu0
      %v2543 = vadd.f32 %v2194, %v2542
      %v2544 = vpop.f32.mrb[0].mxu0
      %2545 = vmatprep.mubr.f32.mxu0 0.0
      %2546 = vmatmul.mubr.f32.gmra.mrb[0].mxu0 %v2324
      %v2547 = vpop.f32.mrb[0].mxu0
      %v2548 = vadd.f32 %v2196, %v2547
      %v2549 = vpop.f32.mrb[0].mxu0
      %2550 = vdwg.mxu0
      %2551 = vst.msk [vmem:[%s197] sm:$0xff] %vm198, %v2393
      %2552 = vst.msk [vmem:[%s197 + $0x8] sm:$0xff] %vm198, %v2398
      %2553 = vst.msk [vmem:[%s197 + $0x10] sm:$0xff] %vm198, %v2403
      %2554 = vst.msk [vmem:[%s197 + $0x18] sm:$0xff] %vm198, %v2408
      %2555 = vst.msk [vmem:[%s197 + $0x20] sm:$0xff] %vm198, %v2413
      %2556 = vst.msk [vmem:[%s197 + $0x28] sm:$0xff] %vm198, %v2418
      %2557 = vst.msk [vmem:[%s197 + $0x30] sm:$0xff] %vm198, %v2423
      %2558 = vst.msk [vmem:[%s197 + $0x38] sm:$0xff] %vm198, %v2428
      %2559 = vst.msk [vmem:[%s197 + $0x40] sm:$0xff] %vm198, %v2433
      %2560 = vst.msk [vmem:[%s197 + $0x48] sm:$0xff] %vm198, %v2438
      %2561 = vst.msk [vmem:[%s197 + $0x50] sm:$0xff] %vm198, %v2443
      %2562 = vst.msk [vmem:[%s197 + $0x58] sm:$0xff] %vm198, %v2448
      %2563 = vst.msk [vmem:[%s197 + $0x60] sm:$0xff] %vm198, %v2453
      %2564 = vst.msk [vmem:[%s197 + $0x68] sm:$0xff] %vm198, %v2458
      %2565 = vst.msk [vmem:[%s197 + $0x70] sm:$0xff] %vm198, %v2463
      %2566 = vst.msk [vmem:[%s197 + $0x78] sm:$0xff] %vm198, %v2468
      %2567 = vst.msk [vmem:[%s197 + $0x80] sm:$0xff] %vm198, %v2473
      %2568 = vst.msk [vmem:[%s197 + $0x88] sm:$0xff] %vm198, %v2478
      %2569 = vst.msk [vmem:[%s197 + $0x90] sm:$0xff] %vm198, %v2483
      %2570 = vst.msk [vmem:[%s197 + $0x98] sm:$0xff] %vm198, %v2488
      %2571 = vst.msk [vmem:[%s197 + $0xa0] sm:$0xff] %vm198, %v2493
      %2572 = vst.msk [vmem:[%s197 + $0xa8] sm:$0xff] %vm198, %v2498
      %2573 = vst.msk [vmem:[%s197 + $0xb0] sm:$0xff] %vm198, %v2503
      %2574 = vst.msk [vmem:[%s197 + $0xb8] sm:$0xff] %vm198, %v2508
      %2575 = vst.msk [vmem:[%s197 + $0xc0] sm:$0xff] %vm198, %v2513
      %2576 = vst.msk [vmem:[%s197 + $0xc8] sm:$0xff] %vm198, %v2518
      %2577 = vst.msk [vmem:[%s197 + $0xd0] sm:$0xff] %vm198, %v2523
      %2578 = vst.msk [vmem:[%s197 + $0xd8] sm:$0xff] %vm198, %v2528
      %2579 = vst.msk [vmem:[%s197 + $0xe0] sm:$0xff] %vm198, %v2533
      %2580 = vst.msk [vmem:[%s197 + $0xe8] sm:$0xff] %vm198, %v2538
      %2581 = vst.msk [vmem:[%s197 + $0xf0] sm:$0xff] %vm198, %v2543
      %2582 = vst.msk [vmem:[%s197 + $0xf8] sm:$0xff] %vm198, %v2548
      %p2583 = scmp.lt.s32.totalorder %s15, 1
      %s2584 = scalar_select %p2583, %s15, 1
      %s2585 = smul.addr %s2584, 32
      %s2586 = smul.addr %s2585, 8
      %s2587 = scalar_lea.vmem %s4, %s2586
      // Predicated region
      $region37: #{preact_block_forward.3} parent=35 // pred_check
        %p2588 = pneg %p122
      $region38: #{preact_block_forward.3} parent=35 // pred_check_branch
        %2590 = sbr.rel (%p2588) target = $region40
      $region39: #{preact_block_forward.3} parent=35 // pred_region
        _
      $region40: #{preact_block_forward.3} parent=35 // pred_fallthru
        _
    $region36: #{preact_block_forward.3} parent=5 // pred_fallthru
      _
    %p2591 = scmp.le.s32.totalorder 2, %s10
    // Predicated region
    $region41: #{preact_block_forward.3} parent=5 // pred_check
      %p2592 = pneg %p2591
    $region42: #{preact_block_forward.3} parent=5 // pred_check_branch
      %2594 = sbr.rel (%p2592) target = $region44
    $region43: #{preact_block_forward.3} parent=5 // pred_region
      %s2595 = ssub.s32 %s10, 2
      // Predicated region
      $region45: #{preact_block_forward.3} parent=43 // pred_check
        %p2596 = pneg %p128
      $region46: #{preact_block_forward.3} parent=43 // pred_check_branch
        %2598 = sbr.rel (%p2596) target = $region48
      $region47: #{preact_block_forward.3} parent=43 // pred_region
        %p2599 = scmp.lt.s32.totalorder %s16, 1
        %s2600 = scalar_select %p2599, %s16, 1
        %s2601 = smul.addr %s2600, 32
        %s2602 = smul.addr %s2601, 8
        %s2603 = scalar_lea.vmem %s4, %s2602
      $region48: #{preact_block_forward.3} parent=43 // pred_fallthru
        _
    $region44: #{preact_block_forward.3} parent=5 // pred_fallthru
      _
  $region6: #{preact_block_forward.3} parent=0 // loop_footer
    %s14 = sadd.s32 1, %s10
  $region7: #{preact_block_forward.3} parent=0 // loop_footer_branch
    %9 = sbr.rel target = $region3
  $region8: #{preact_block_forward.3} parent=0 // loop_exit
    _

</llo_original>
